<compile_context>
chip_gen: v5e
topology: v5e:2x2
jax: 0.10.0
libtpu: 0.0.40
codegen_flags: <defaults>
</compile_context>

<pallas_src>
import functools

import jax
import jax.numpy as jnp
from jax import lax
from jax.experimental import pallas as pl
from jax.experimental.pallas import tpu as pltpu


def _sepconvgru_kernel(h_ref, x_ref, mh_ref, mv_ref,
                       wzr1_ref, bzr1_ref, wq1_ref, bq1_ref,
                       wzr2_ref, bzr2_ref, wq2_ref, bq2_ref,
                       o_ref, *, W):
    # h_ref : (1, Chid, N)     x_ref : (1, Cin, N)      N = H*W (lanes)
    # mh/mv : (5, 1, N)        per-tap border masks (horizontal / vertical)
    # wzr*  : (2*Chid, 5*Ctot) fused z|r conv weights, K = tap-major, Ctot = Chid+Cin
    # wq*   : (Chid, 5*Ctot)   q conv weights
    # b*    : (*, 1)           biases, broadcast over lanes
    # o_ref : (1, Chid, N)
    Chid = o_ref.shape[1]
    N = o_ref.shape[2]

    h = h_ref[0]                 # (Chid, N)
    x = x_ref[0]                 # (Cin,  N)

    def taps(a, mask_ref, step):
        # 5 conv taps d = -2..2 as lane rotations of the flattened image;
        # the mask zeroes contributions that crossed an image border
        # (emulates PyTorch zero padding). Concatenate along K for one fat dot.
        parts = []
        for t, d in enumerate(range(-2, 3)):
            s = (-d * step) % N                       # static, non-negative
            a_s = a if s == 0 else pltpu.roll(a, shift=s, axis=1)
            parts.append(a_s * mask_ref[t])           # (C, N) * (1, N)
        return jnp.concatenate(parts, axis=0)         # (5*C, N)

    def gru_half(h, x, mask_ref, step, wzr_ref, bzr_ref, wq_ref, bq_ref):
        hx = jnp.concatenate([h, x], axis=0)          # (Ctot, N)
        zr = jnp.dot(wzr_ref[...], taps(hx, mask_ref, step),
                     preferred_element_type=jnp.float32) + bzr_ref[...]
        zr = 1.0 / (1.0 + jnp.exp(-zr))               # sigmoid (EUP exp + divide)
        z, r = zr[:Chid], zr[Chid:]
        rhx = jnp.concatenate([r * h, x], axis=0)
        q = jnp.tanh(jnp.dot(wq_ref[...], taps(rhx, mask_ref, step),
                             preferred_element_type=jnp.float32) + bq_ref[...])
        return (1.0 - z) * h + z * q

    h = gru_half(h, x, mh_ref, 1, wzr1_ref, bzr1_ref, wq1_ref, bq1_ref)   # (1,5) horizontal
    h = gru_half(h, x, mv_ref, W, wzr2_ref, bzr2_ref, wq2_ref, bq2_ref)   # (5,1) vertical
    o_ref[0] = h.astype(o_ref.dtype)


def sep_conv_gru_pallas(h, x, params):
    """h: (B, Chid, H, W), x: (B, Cin, H, W) float32.
    params: (wz1, bz1, wr1, br1, wq1, bq1, wz2, bz2, wr2, br2, wq2, bq2)
    with PyTorch OIHW conv weights: horizontal (Chid, Ctot, 1, 5),
    vertical (Chid, Ctot, 5, 1). Returns updated h, (B, Chid, H, W)."""
    B, Chid, H, W = h.shape
    Cin = x.shape[1]
    Ctot = Chid + Cin
    N = H * W

    # kernel layout assumptions (hold for RAFT-style channel counts)
    assert Chid % 8 == 0 and Cin % 8 == 0 and N % 128 == 0, (Chid, Cin, N)

    (wz1, bz1, wr1, br1, wq1, bq1, wz2, bz2, wr2, br2, wq2, bq2) = params

    def flat_h(w):  # (Cout, Cin, 1, 5) -> (Cout, 5*Cin), K ordered [tap, cin]
        co, ci = w.shape[0], w.shape[1]
        return jnp.transpose(w[:, :, 0, :], (0, 2, 1)).reshape(co, 5 * ci)

    def flat_v(w):  # (Cout, Cin, 5, 1) -> (Cout, 5*Cin), K ordered [tap, cin]
        co, ci = w.shape[0], w.shape[1]
        return jnp.transpose(w[:, :, :, 0], (0, 2, 1)).reshape(co, 5 * ci)

    # fuse z|r gates into one matmul per direction
    wzr1 = jnp.concatenate([flat_h(wz1), flat_h(wr1)], axis=0)       # (2*Chid, 5*Ctot)
    bzr1 = jnp.concatenate([bz1, br1]).reshape(2 * Chid, 1)
    wq1f = flat_h(wq1)
    bq1f = bq1.reshape(Chid, 1)
    wzr2 = jnp.concatenate([flat_v(wz2), flat_v(wr2)], axis=0)
    bzr2 = jnp.concatenate([bz2, br2]).reshape(2 * Chid, 1)
    wq2f = flat_v(wq2)
    bq2f = bq2.reshape(Chid, 1)

    # per-tap border masks (emulate zero padding) over the flattened image
    col = jnp.arange(N, dtype=jnp.int32) % W
    row = jnp.arange(N, dtype=jnp.int32) // W
    mh = jnp.stack([((col + d >= 0) & (col + d < W)) for d in range(-2, 3)]
                   ).astype(jnp.float32).reshape(5, 1, N)
    mv = jnp.stack([((row + d >= 0) & (row + d < H)) for d in range(-2, 3)]
                   ).astype(jnp.float32).reshape(5, 1, N)

    # NCHW -> (B, C, H*W): contiguous reshape, no transpose / pad pass
    h2 = h.reshape(B, Chid, N)
    x2 = x.reshape(B, Cin, N)

    kernel = functools.partial(_sepconvgru_kernel, W=W)

    full = lambda b: (0, 0)
    out = pl.pallas_call(
        kernel,
        out_shape=jax.ShapeDtypeStruct((B, Chid, N), jnp.float32),
        grid_spec=pltpu.PrefetchScalarGridSpec(
            num_scalar_prefetch=0,
            grid=(B,),
            in_specs=[
                pl.BlockSpec((1, Chid, N), lambda b: (b, 0, 0)),      # h
                pl.BlockSpec((1, Cin, N), lambda b: (b, 0, 0)),       # x
                pl.BlockSpec((5, 1, N), lambda b: (0, 0, 0)),         # horiz masks
                pl.BlockSpec((5, 1, N), lambda b: (0, 0, 0)),         # vert masks
                pl.BlockSpec((2 * Chid, 5 * Ctot), full),             # wzr1
                pl.BlockSpec((2 * Chid, 1), full),                    # bzr1
                pl.BlockSpec((Chid, 5 * Ctot), full),                 # wq1
                pl.BlockSpec((Chid, 1), full),                        # bq1
                pl.BlockSpec((2 * Chid, 5 * Ctot), full),             # wzr2
                pl.BlockSpec((2 * Chid, 1), full),                    # bzr2
                pl.BlockSpec((Chid, 5 * Ctot), full),                 # wq2
                pl.BlockSpec((Chid, 1), full),                        # bq2
            ],
            out_specs=pl.BlockSpec((1, Chid, N), lambda b: (b, 0, 0)),
        ),
        compiler_params=pltpu.CompilerParams(
            dimension_semantics=("parallel",)),
    )(h2, x2, mh, mv, wzr1, bzr1, wq1f, bq1f, wzr2, bzr2, wq2f, bq2f)

    return out.reshape(B, Chid, H, W)


def _reference(h, x, params):
    """Pure-JAX reference mirroring the PyTorch SepConvGru forward (NCHW/OIHW)."""
    (wz1, bz1, wr1, br1, wq1, bq1, wz2, bz2, wr2, br2, wq2, bq2) = params

    def conv(v, w, b, pad):
        y = lax.conv_general_dilated(v, w, (1, 1), pad,
                                     dimension_numbers=("NCHW", "OIHW", "NCHW"))
        return y + b[None, :, None, None]

    pad_h = ((0, 0), (2, 2))
    pad_v = ((2, 2), (0, 0))

    hx = jnp.concatenate([h, x], axis=1)
    z = jax.nn.sigmoid(conv(hx, wz1, bz1, pad_h))
    r = jax.nn.sigmoid(conv(hx, wr1, br1, pad_h))
    q = jnp.tanh(conv(jnp.concatenate([r * h, x], axis=1), wq1, bq1, pad_h))
    h = (1.0 - z) * h + z * q

    hx = jnp.concatenate([h, x], axis=1)
    z = jax.nn.sigmoid(conv(hx, wz2, bz2, pad_v))
    r = jax.nn.sigmoid(conv(hx, wr2, br2, pad_v))
    q = jnp.tanh(conv(jnp.concatenate([r * h, x], axis=1), wq2, bq2, pad_v))
    h = (1.0 - z) * h + z * q
    return h


if __name__ == "__main__":
    # Small, deterministic synthetic config consistent with SepConvGru semantics
    # (hidden_dim=32, input_dim=32 -> concat channels Ctot=64).
    B, H, W = 2, 16, 16
    hidden_dim, input_dim = 32, 32
    Ctot = hidden_dim + input_dim

    key = jax.random.PRNGKey(0)
    keys = jax.random.split(key, 14)

    h0 = jax.random.normal(keys[0], (B, hidden_dim, H, W), dtype=jnp.float32)
    x = jax.random.normal(keys[1], (B, input_dim, H, W), dtype=jnp.float32)

    def mk_w(k, shape):
        fan_in = shape[1] * shape[2] * shape[3]
        return jax.random.normal(k, shape, dtype=jnp.float32) / jnp.sqrt(float(fan_in))

    def mk_b(k, n):
        return jax.random.normal(k, (n,), dtype=jnp.float32) * 0.01

    shp_h = (hidden_dim, Ctot, 1, 5)
    shp_v = (hidden_dim, Ctot, 5, 1)
    params = (
        mk_w(keys[2], shp_h), mk_b(keys[3], hidden_dim),    # convz1
        mk_w(keys[4], shp_h), mk_b(keys[5], hidden_dim),    # convr1
        mk_w(keys[6], shp_h), mk_b(keys[7], hidden_dim),    # convq1
        mk_w(keys[8], shp_v), mk_b(keys[9], hidden_dim),    # convz2
        mk_w(keys[10], shp_v), mk_b(keys[11], hidden_dim),  # convr2
        mk_w(keys[12], shp_v), mk_b(keys[13], hidden_dim),  # convq2
    )

    h_new = jax.block_until_ready(sep_conv_gru_pallas(h0, x, params))
    h_ref = jax.block_until_ready(_reference(h0, x, params))

    assert h_new.shape == (B, hidden_dim, H, W), h_new.shape
    max_err = float(jnp.abs(h_new - h_ref).max())
    assert jnp.allclose(h_new, h_ref, atol=2e-3, rtol=2e-3), max_err

    print("KERNEL_OK")
</pallas_src>

<mosaic_0001>
module attributes {stable_mosaic.version = 11 : i64} {
  func.func @_sepconvgru_kernel(%arg0: i32, %arg1: memref<1x32x256xf32, #tpu.memory_space<vmem>>, %arg2: memref<1x32x256xf32, #tpu.memory_space<vmem>>, %arg3: memref<5x1x256xf32, #tpu.memory_space<vmem>>, %arg4: memref<5x1x256xf32, #tpu.memory_space<vmem>>, %arg5: memref<64x320xf32, #tpu.memory_space<vmem>>, %arg6: memref<64x1xf32, #tpu.memory_space<vmem>>, %arg7: memref<32x320xf32, #tpu.memory_space<vmem>>, %arg8: memref<32x1xf32, #tpu.memory_space<vmem>>, %arg9: memref<64x320xf32, #tpu.memory_space<vmem>>, %arg10: memref<64x1xf32, #tpu.memory_space<vmem>>, %arg11: memref<32x320xf32, #tpu.memory_space<vmem>>, %arg12: memref<32x1xf32, #tpu.memory_space<vmem>>, %arg13: memref<1x32x256xf32, #tpu.memory_space<vmem>>) attributes {dimension_semantics = [#tpu.dimension_semantics<parallel>], iteration_bounds = array<i64: 2>, scalar_prefetch = 0 : i64, scratch_operands = 0 : i64, tpu.core_type = #tpu.core_type<tc>, window_params = [{transform_indices = @transform_0, window_bounds = array<i64: 1, 32, 256>}, {transform_indices = @transform_1, window_bounds = array<i64: 1, 32, 256>}, {pipeline_mode = #tpu.pipeline_mode<synchronous>, transform_indices = @transform_2, window_bounds = array<i64: 5, 1, 256>}, {pipeline_mode = #tpu.pipeline_mode<synchronous>, transform_indices = @transform_3, window_bounds = array<i64: 5, 1, 256>}, {pipeline_mode = #tpu.pipeline_mode<synchronous>, transform_indices = @transform_4, window_bounds = array<i64: 64, 320>}, {pipeline_mode = #tpu.pipeline_mode<synchronous>, transform_indices = @transform_5, window_bounds = array<i64: 64, 1>}, {pipeline_mode = #tpu.pipeline_mode<synchronous>, transform_indices = @transform_6, window_bounds = array<i64: 32, 320>}, {pipeline_mode = #tpu.pipeline_mode<synchronous>, transform_indices = @transform_7, window_bounds = array<i64: 32, 1>}, {pipeline_mode = #tpu.pipeline_mode<synchronous>, transform_indices = @transform_8, window_bounds = array<i64: 64, 320>}, {pipeline_mode = #tpu.pipeline_mode<synchronous>, transform_indices = @transform_9, window_bounds = array<i64: 64, 1>}, {pipeline_mode = #tpu.pipeline_mode<synchronous>, transform_indices = @transform_10, window_bounds = array<i64: 32, 320>}, {pipeline_mode = #tpu.pipeline_mode<synchronous>, transform_indices = @transform_11, window_bounds = array<i64: 32, 1>}, {transform_indices = @transform_12, window_bounds = array<i64: 1, 32, 256>}]} {
    %c0 = arith.constant 0 : index
    %c0_0 = arith.constant 0 : index
    %c0_1 = arith.constant 0 : index
    %0 = vector.load %arg1[%c0, %c0_0, %c0_1] : memref<1x32x256xf32, #tpu.memory_space<vmem>>, vector<1x32x256xf32>
    %1 = vector.shape_cast %0 : vector<1x32x256xf32> to vector<32x256xf32>
    %c0_2 = arith.constant 0 : index
    %c0_3 = arith.constant 0 : index
    %c0_4 = arith.constant 0 : index
    %2 = vector.load %arg2[%c0_2, %c0_3, %c0_4] : memref<1x32x256xf32, #tpu.memory_space<vmem>>, vector<1x32x256xf32>
    %3 = vector.shape_cast %2 : vector<1x32x256xf32> to vector<32x256xf32>
    %4 = tpu.concatenate %1, %3 in 0 : vector<32x256xf32>, vector<32x256xf32> -> vector<64x256xf32>
    %c0_5 = arith.constant 0 : index
    %c0_6 = arith.constant 0 : index
    %5 = vector.load %arg5[%c0_5, %c0_6] : memref<64x320xf32, #tpu.memory_space<vmem>>, vector<64x320xf32>
    %c2_i32 = arith.constant 2 : i32
    %6 = tpu.dynamic_rotate %4 by %c2_i32 dim 1 : vector<64x256xf32>, i32 -> vector<64x256xf32>
    %c0_7 = arith.constant 0 : index
    %c0_8 = arith.constant 0 : index
    %c0_9 = arith.constant 0 : index
    %7 = vector.load %arg3[%c0_7, %c0_8, %c0_9] : memref<5x1x256xf32, #tpu.memory_space<vmem>>, vector<1x1x256xf32>
    %8 = vector.shape_cast %7 : vector<1x1x256xf32> to vector<1x256xf32>
    %9 = vector.broadcast %8 : vector<1x256xf32> to vector<64x256xf32>
    %10 = arith.mulf %6, %9 : vector<64x256xf32>
    %c1_i32 = arith.constant 1 : i32
    %11 = tpu.dynamic_rotate %4 by %c1_i32 dim 1 : vector<64x256xf32>, i32 -> vector<64x256xf32>
    %c1 = arith.constant 1 : index
    %c0_10 = arith.constant 0 : index
    %c0_11 = arith.constant 0 : index
    %12 = vector.load %arg3[%c1, %c0_10, %c0_11] : memref<5x1x256xf32, #tpu.memory_space<vmem>>, vector<1x1x256xf32>
    %13 = vector.shape_cast %12 : vector<1x1x256xf32> to vector<1x256xf32>
    %14 = vector.broadcast %13 : vector<1x256xf32> to vector<64x256xf32>
    %15 = arith.mulf %11, %14 : vector<64x256xf32>
    %c2 = arith.constant 2 : index
    %c0_12 = arith.constant 0 : index
    %c0_13 = arith.constant 0 : index
    %16 = vector.load %arg3[%c2, %c0_12, %c0_13] : memref<5x1x256xf32, #tpu.memory_space<vmem>>, vector<1x1x256xf32>
    %17 = vector.shape_cast %16 : vector<1x1x256xf32> to vector<1x256xf32>
    %18 = vector.broadcast %17 : vector<1x256xf32> to vector<64x256xf32>
    %19 = arith.mulf %4, %18 : vector<64x256xf32>
    %c255_i32 = arith.constant 255 : i32
    %20 = tpu.dynamic_rotate %4 by %c255_i32 dim 1 : vector<64x256xf32>, i32 -> vector<64x256xf32>
    %c3 = arith.constant 3 : index
    %c0_14 = arith.constant 0 : index
    %c0_15 = arith.constant 0 : index
    %21 = vector.load %arg3[%c3, %c0_14, %c0_15] : memref<5x1x256xf32, #tpu.memory_space<vmem>>, vector<1x1x256xf32>
    %22 = vector.shape_cast %21 : vector<1x1x256xf32> to vector<1x256xf32>
    %23 = vector.broadcast %22 : vector<1x256xf32> to vector<64x256xf32>
    %24 = arith.mulf %20, %23 : vector<64x256xf32>
    %c254_i32 = arith.constant 254 : i32
    %25 = tpu.dynamic_rotate %4 by %c254_i32 dim 1 : vector<64x256xf32>, i32 -> vector<64x256xf32>
    %c4 = arith.constant 4 : index
    %c0_16 = arith.constant 0 : index
    %c0_17 = arith.constant 0 : index
    %26 = vector.load %arg3[%c4, %c0_16, %c0_17] : memref<5x1x256xf32, #tpu.memory_space<vmem>>, vector<1x1x256xf32>
    %27 = vector.shape_cast %26 : vector<1x1x256xf32> to vector<1x256xf32>
    %28 = vector.broadcast %27 : vector<1x256xf32> to vector<64x256xf32>
    %29 = arith.mulf %25, %28 : vector<64x256xf32>
    %30 = tpu.concatenate %10, %15, %19, %24, %29 in 0 : vector<64x256xf32>, vector<64x256xf32>, vector<64x256xf32>, vector<64x256xf32>, vector<64x256xf32> -> vector<320x256xf32>
    %cst = arith.constant dense<0.000000e+00> : vector<64x256xf32>
    %31 = tpu.matmul %5, %30, %cst {dimension_numbers = #tpu.dot_dimension_numbers<[1], [0], [0], [1], [0, 0, 1, 1], [], []>} : vector<64x320xf32>, vector<320x256xf32>, vector<64x256xf32> -> vector<64x256xf32>
    %c0_18 = arith.constant 0 : index
    %c0_19 = arith.constant 0 : index
    %32 = vector.load %arg6[%c0_18, %c0_19] : memref<64x1xf32, #tpu.memory_space<vmem>>, vector<64x1xf32>
    %33 = vector.broadcast %32 : vector<64x1xf32> to vector<64x256xf32>
    %34 = arith.addf %31, %33 : vector<64x256xf32>
    %cst_20 = arith.constant 0.000000e+00 : f32
    %35 = vector.broadcast %cst_20 : f32 to vector<64x256xf32>
    %36 = arith.subf %35, %34 : vector<64x256xf32>
    %37 = math.exp %36 : vector<64x256xf32>
    %cst_21 = arith.constant 1.000000e+00 : f32
    %38 = vector.broadcast %cst_21 : f32 to vector<64x256xf32>
    %39 = arith.addf %38, %37 : vector<64x256xf32>
    %cst_22 = arith.constant 1.000000e+00 : f32
    %40 = vector.broadcast %cst_22 : f32 to vector<64x256xf32>
    %41 = arith.divf %40, %39 : vector<64x256xf32>
    %42 = vector.extract_strided_slice %41 {offsets = [0, 0], sizes = [32, 256], strides = [1, 1]} : vector<64x256xf32> to vector<32x256xf32>
    %43 = vector.extract_strided_slice %41 {offsets = [32, 0], sizes = [32, 256], strides = [1, 1]} : vector<64x256xf32> to vector<32x256xf32>
    %44 = arith.mulf %43, %1 : vector<32x256xf32>
    %45 = tpu.concatenate %44, %3 in 0 : vector<32x256xf32>, vector<32x256xf32> -> vector<64x256xf32>
    %c0_23 = arith.constant 0 : index
    %c0_24 = arith.constant 0 : index
    %46 = vector.load %arg7[%c0_23, %c0_24] : memref<32x320xf32, #tpu.memory_space<vmem>>, vector<32x320xf32>
    %c2_i32_25 = arith.constant 2 : i32
    %47 = tpu.dynamic_rotate %45 by %c2_i32_25 dim 1 : vector<64x256xf32>, i32 -> vector<64x256xf32>
    %c0_26 = arith.constant 0 : index
    %c0_27 = arith.constant 0 : index
    %c0_28 = arith.constant 0 : index
    %48 = vector.load %arg3[%c0_26, %c0_27, %c0_28] : memref<5x1x256xf32, #tpu.memory_space<vmem>>, vector<1x1x256xf32>
    %49 = vector.shape_cast %48 : vector<1x1x256xf32> to vector<1x256xf32>
    %50 = vector.broadcast %49 : vector<1x256xf32> to vector<64x256xf32>
    %51 = arith.mulf %47, %50 : vector<64x256xf32>
    %c1_i32_29 = arith.constant 1 : i32
    %52 = tpu.dynamic_rotate %45 by %c1_i32_29 dim 1 : vector<64x256xf32>, i32 -> vector<64x256xf32>
    %c1_30 = arith.constant 1 : index
    %c0_31 = arith.constant 0 : index
    %c0_32 = arith.constant 0 : index
    %53 = vector.load %arg3[%c1_30, %c0_31, %c0_32] : memref<5x1x256xf32, #tpu.memory_space<vmem>>, vector<1x1x256xf32>
    %54 = vector.shape_cast %53 : vector<1x1x256xf32> to vector<1x256xf32>
    %55 = vector.broadcast %54 : vector<1x256xf32> to vector<64x256xf32>
    %56 = arith.mulf %52, %55 : vector<64x256xf32>
    %c2_33 = arith.constant 2 : index
    %c0_34 = arith.constant 0 : index
    %c0_35 = arith.constant 0 : index
    %57 = vector.load %arg3[%c2_33, %c0_34, %c0_35] : memref<5x1x256xf32, #tpu.memory_space<vmem>>, vector<1x1x256xf32>
    %58 = vector.shape_cast %57 : vector<1x1x256xf32> to vector<1x256xf32>
    %59 = vector.broadcast %58 : vector<1x256xf32> to vector<64x256xf32>
    %60 = arith.mulf %45, %59 : vector<64x256xf32>
    %c255_i32_36 = arith.constant 255 : i32
    %61 = tpu.dynamic_rotate %45 by %c255_i32_36 dim 1 : vector<64x256xf32>, i32 -> vector<64x256xf32>
    %c3_37 = arith.constant 3 : index
    %c0_38 = arith.constant 0 : index
    %c0_39 = arith.constant 0 : index
    %62 = vector.load %arg3[%c3_37, %c0_38, %c0_39] : memref<5x1x256xf32, #tpu.memory_space<vmem>>, vector<1x1x256xf32>
    %63 = vector.shape_cast %62 : vector<1x1x256xf32> to vector<1x256xf32>
    %64 = vector.broadcast %63 : vector<1x256xf32> to vector<64x256xf32>
    %65 = arith.mulf %61, %64 : vector<64x256xf32>
    %c254_i32_40 = arith.constant 254 : i32
    %66 = tpu.dynamic_rotate %45 by %c254_i32_40 dim 1 : vector<64x256xf32>, i32 -> vector<64x256xf32>
    %c4_41 = arith.constant 4 : index
    %c0_42 = arith.constant 0 : index
    %c0_43 = arith.constant 0 : index
    %67 = vector.load %arg3[%c4_41, %c0_42, %c0_43] : memref<5x1x256xf32, #tpu.memory_space<vmem>>, vector<1x1x256xf32>
    %68 = vector.shape_cast %67 : vector<1x1x256xf32> to vector<1x256xf32>
    %69 = vector.broadcast %68 : vector<1x256xf32> to vector<64x256xf32>
    %70 = arith.mulf %66, %69 : vector<64x256xf32>
    %71 = tpu.concatenate %51, %56, %60, %65, %70 in 0 : vector<64x256xf32>, vector<64x256xf32>, vector<64x256xf32>, vector<64x256xf32>, vector<64x256xf32> -> vector<320x256xf32>
    %cst_44 = arith.constant dense<0.000000e+00> : vector<32x256xf32>
    %72 = tpu.matmul %46, %71, %cst_44 {dimension_numbers = #tpu.dot_dimension_numbers<[1], [0], [0], [1], [0, 0, 1, 1], [], []>} : vector<32x320xf32>, vector<320x256xf32>, vector<32x256xf32> -> vector<32x256xf32>
    %c0_45 = arith.constant 0 : index
    %c0_46 = arith.constant 0 : index
    %73 = vector.load %arg8[%c0_45, %c0_46] : memref<32x1xf32, #tpu.memory_space<vmem>>, vector<32x1xf32>
    %74 = vector.broadcast %73 : vector<32x1xf32> to vector<32x256xf32>
    %75 = arith.addf %72, %74 : vector<32x256xf32>
    %76 = math.tanh %75 : vector<32x256xf32>
    %cst_47 = arith.constant 1.000000e+00 : f32
    %77 = vector.broadcast %cst_47 : f32 to vector<32x256xf32>
    %78 = arith.subf %77, %42 : vector<32x256xf32>
    %79 = arith.mulf %78, %1 : vector<32x256xf32>
    %80 = arith.mulf %42, %76 : vector<32x256xf32>
    %81 = arith.addf %79, %80 : vector<32x256xf32>
    %82 = tpu.concatenate %81, %3 in 0 : vector<32x256xf32>, vector<32x256xf32> -> vector<64x256xf32>
    %c0_48 = arith.constant 0 : index
    %c0_49 = arith.constant 0 : index
    %83 = vector.load %arg9[%c0_48, %c0_49] : memref<64x320xf32, #tpu.memory_space<vmem>>, vector<64x320xf32>
    %c32_i32 = arith.constant 32 : i32
    %84 = tpu.dynamic_rotate %82 by %c32_i32 dim 1 : vector<64x256xf32>, i32 -> vector<64x256xf32>
    %c0_50 = arith.constant 0 : index
    %c0_51 = arith.constant 0 : index
    %c0_52 = arith.constant 0 : index
    %85 = vector.load %arg4[%c0_50, %c0_51, %c0_52] : memref<5x1x256xf32, #tpu.memory_space<vmem>>, vector<1x1x256xf32>
    %86 = vector.shape_cast %85 : vector<1x1x256xf32> to vector<1x256xf32>
    %87 = vector.broadcast %86 : vector<1x256xf32> to vector<64x256xf32>
    %88 = arith.mulf %84, %87 : vector<64x256xf32>
    %c16_i32 = arith.constant 16 : i32
    %89 = tpu.dynamic_rotate %82 by %c16_i32 dim 1 : vector<64x256xf32>, i32 -> vector<64x256xf32>
    %c1_53 = arith.constant 1 : index
    %c0_54 = arith.constant 0 : index
    %c0_55 = arith.constant 0 : index
    %90 = vector.load %arg4[%c1_53, %c0_54, %c0_55] : memref<5x1x256xf32, #tpu.memory_space<vmem>>, vector<1x1x256xf32>
    %91 = vector.shape_cast %90 : vector<1x1x256xf32> to vector<1x256xf32>
    %92 = vector.broadcast %91 : vector<1x256xf32> to vector<64x256xf32>
    %93 = arith.mulf %89, %92 : vector<64x256xf32>
    %c2_56 = arith.constant 2 : index
    %c0_57 = arith.constant 0 : index
    %c0_58 = arith.constant 0 : index
    %94 = vector.load %arg4[%c2_56, %c0_57, %c0_58] : memref<5x1x256xf32, #tpu.memory_space<vmem>>, vector<1x1x256xf32>
    %95 = vector.shape_cast %94 : vector<1x1x256xf32> to vector<1x256xf32>
    %96 = vector.broadcast %95 : vector<1x256xf32> to vector<64x256xf32>
    %97 = arith.mulf %82, %96 : vector<64x256xf32>
    %c240_i32 = arith.constant 240 : i32
    %98 = tpu.dynamic_rotate %82 by %c240_i32 dim 1 : vector<64x256xf32>, i32 -> vector<64x256xf32>
    %c3_59 = arith.constant 3 : index
    %c0_60 = arith.constant 0 : index
    %c0_61 = arith.constant 0 : index
    %99 = vector.load %arg4[%c3_59, %c0_60, %c0_61] : memref<5x1x256xf32, #tpu.memory_space<vmem>>, vector<1x1x256xf32>
    %100 = vector.shape_cast %99 : vector<1x1x256xf32> to vector<1x256xf32>
    %101 = vector.broadcast %100 : vector<1x256xf32> to vector<64x256xf32>
    %102 = arith.mulf %98, %101 : vector<64x256xf32>
    %c224_i32 = arith.constant 224 : i32
    %103 = tpu.dynamic_rotate %82 by %c224_i32 dim 1 : vector<64x256xf32>, i32 -> vector<64x256xf32>
    %c4_62 = arith.constant 4 : index
    %c0_63 = arith.constant 0 : index
    %c0_64 = arith.constant 0 : index
    %104 = vector.load %arg4[%c4_62, %c0_63, %c0_64] : memref<5x1x256xf32, #tpu.memory_space<vmem>>, vector<1x1x256xf32>
    %105 = vector.shape_cast %104 : vector<1x1x256xf32> to vector<1x256xf32>
    %106 = vector.broadcast %105 : vector<1x256xf32> to vector<64x256xf32>
    %107 = arith.mulf %103, %106 : vector<64x256xf32>
    %108 = tpu.concatenate %88, %93, %97, %102, %107 in 0 : vector<64x256xf32>, vector<64x256xf32>, vector<64x256xf32>, vector<64x256xf32>, vector<64x256xf32> -> vector<320x256xf32>
    %cst_65 = arith.constant dense<0.000000e+00> : vector<64x256xf32>
    %109 = tpu.matmul %83, %108, %cst_65 {dimension_numbers = #tpu.dot_dimension_numbers<[1], [0], [0], [1], [0, 0, 1, 1], [], []>} : vector<64x320xf32>, vector<320x256xf32>, vector<64x256xf32> -> vector<64x256xf32>
    %c0_66 = arith.constant 0 : index
    %c0_67 = arith.constant 0 : index
    %110 = vector.load %arg10[%c0_66, %c0_67] : memref<64x1xf32, #tpu.memory_space<vmem>>, vector<64x1xf32>
    %111 = vector.broadcast %110 : vector<64x1xf32> to vector<64x256xf32>
    %112 = arith.addf %109, %111 : vector<64x256xf32>
    %cst_68 = arith.constant 0.000000e+00 : f32
    %113 = vector.broadcast %cst_68 : f32 to vector<64x256xf32>
    %114 = arith.subf %113, %112 : vector<64x256xf32>
    %115 = math.exp %114 : vector<64x256xf32>
    %cst_69 = arith.constant 1.000000e+00 : f32
    %116 = vector.broadcast %cst_69 : f32 to vector<64x256xf32>
    %117 = arith.addf %116, %115 : vector<64x256xf32>
    %cst_70 = arith.constant 1.000000e+00 : f32
    %118 = vector.broadcast %cst_70 : f32 to vector<64x256xf32>
    %119 = arith.divf %118, %117 : vector<64x256xf32>
    %120 = vector.extract_strided_slice %119 {offsets = [0, 0], sizes = [32, 256], strides = [1, 1]} : vector<64x256xf32> to vector<32x256xf32>
    %121 = vector.extract_strided_slice %119 {offsets = [32, 0], sizes = [32, 256], strides = [1, 1]} : vector<64x256xf32> to vector<32x256xf32>
    %122 = arith.mulf %121, %81 : vector<32x256xf32>
    %123 = tpu.concatenate %122, %3 in 0 : vector<32x256xf32>, vector<32x256xf32> -> vector<64x256xf32>
    %c0_71 = arith.constant 0 : index
    %c0_72 = arith.constant 0 : index
    %124 = vector.load %arg11[%c0_71, %c0_72] : memref<32x320xf32, #tpu.memory_space<vmem>>, vector<32x320xf32>
    %c32_i32_73 = arith.constant 32 : i32
    %125 = tpu.dynamic_rotate %123 by %c32_i32_73 dim 1 : vector<64x256xf32>, i32 -> vector<64x256xf32>
    %c0_74 = arith.constant 0 : index
    %c0_75 = arith.constant 0 : index
    %c0_76 = arith.constant 0 : index
    %126 = vector.load %arg4[%c0_74, %c0_75, %c0_76] : memref<5x1x256xf32, #tpu.memory_space<vmem>>, vector<1x1x256xf32>
    %127 = vector.shape_cast %126 : vector<1x1x256xf32> to vector<1x256xf32>
    %128 = vector.broadcast %127 : vector<1x256xf32> to vector<64x256xf32>
    %129 = arith.mulf %125, %128 : vector<64x256xf32>
    %c16_i32_77 = arith.constant 16 : i32
    %130 = tpu.dynamic_rotate %123 by %c16_i32_77 dim 1 : vector<64x256xf32>, i32 -> vector<64x256xf32>
    %c1_78 = arith.constant 1 : index
    %c0_79 = arith.constant 0 : index
    %c0_80 = arith.constant 0 : index
    %131 = vector.load %arg4[%c1_78, %c0_79, %c0_80] : memref<5x1x256xf32, #tpu.memory_space<vmem>>, vector<1x1x256xf32>
    %132 = vector.shape_cast %131 : vector<1x1x256xf32> to vector<1x256xf32>
    %133 = vector.broadcast %132 : vector<1x256xf32> to vector<64x256xf32>
    %134 = arith.mulf %130, %133 : vector<64x256xf32>
    %c2_81 = arith.constant 2 : index
    %c0_82 = arith.constant 0 : index
    %c0_83 = arith.constant 0 : index
    %135 = vector.load %arg4[%c2_81, %c0_82, %c0_83] : memref<5x1x256xf32, #tpu.memory_space<vmem>>, vector<1x1x256xf32>
    %136 = vector.shape_cast %135 : vector<1x1x256xf32> to vector<1x256xf32>
    %137 = vector.broadcast %136 : vector<1x256xf32> to vector<64x256xf32>
    %138 = arith.mulf %123, %137 : vector<64x256xf32>
    %c240_i32_84 = arith.constant 240 : i32
    %139 = tpu.dynamic_rotate %123 by %c240_i32_84 dim 1 : vector<64x256xf32>, i32 -> vector<64x256xf32>
    %c3_85 = arith.constant 3 : index
    %c0_86 = arith.constant 0 : index
    %c0_87 = arith.constant 0 : index
    %140 = vector.load %arg4[%c3_85, %c0_86, %c0_87] : memref<5x1x256xf32, #tpu.memory_space<vmem>>, vector<1x1x256xf32>
    %141 = vector.shape_cast %140 : vector<1x1x256xf32> to vector<1x256xf32>
    %142 = vector.broadcast %141 : vector<1x256xf32> to vector<64x256xf32>
    %143 = arith.mulf %139, %142 : vector<64x256xf32>
    %c224_i32_88 = arith.constant 224 : i32
    %144 = tpu.dynamic_rotate %123 by %c224_i32_88 dim 1 : vector<64x256xf32>, i32 -> vector<64x256xf32>
    %c4_89 = arith.constant 4 : index
    %c0_90 = arith.constant 0 : index
    %c0_91 = arith.constant 0 : index
    %145 = vector.load %arg4[%c4_89, %c0_90, %c0_91] : memref<5x1x256xf32, #tpu.memory_space<vmem>>, vector<1x1x256xf32>
    %146 = vector.shape_cast %145 : vector<1x1x256xf32> to vector<1x256xf32>
    %147 = vector.broadcast %146 : vector<1x256xf32> to vector<64x256xf32>
    %148 = arith.mulf %144, %147 : vector<64x256xf32>
    %149 = tpu.concatenate %129, %134, %138, %143, %148 in 0 : vector<64x256xf32>, vector<64x256xf32>, vector<64x256xf32>, vector<64x256xf32>, vector<64x256xf32> -> vector<320x256xf32>
    %cst_92 = arith.constant dense<0.000000e+00> : vector<32x256xf32>
    %150 = tpu.matmul %124, %149, %cst_92 {dimension_numbers = #tpu.dot_dimension_numbers<[1], [0], [0], [1], [0, 0, 1, 1], [], []>} : vector<32x320xf32>, vector<320x256xf32>, vector<32x256xf32> -> vector<32x256xf32>
    %c0_93 = arith.constant 0 : index
    %c0_94 = arith.constant 0 : index
    %151 = vector.load %arg12[%c0_93, %c0_94] : memref<32x1xf32, #tpu.memory_space<vmem>>, vector<32x1xf32>
    %152 = vector.broadcast %151 : vector<32x1xf32> to vector<32x256xf32>
    %153 = arith.addf %150, %152 : vector<32x256xf32>
    %154 = math.tanh %153 : vector<32x256xf32>
    %cst_95 = arith.constant 1.000000e+00 : f32
    %155 = vector.broadcast %cst_95 : f32 to vector<32x256xf32>
    %156 = arith.subf %155, %120 : vector<32x256xf32>
    %157 = arith.mulf %156, %81 : vector<32x256xf32>
    %158 = arith.mulf %120, %154 : vector<32x256xf32>
    %159 = arith.addf %157, %158 : vector<32x256xf32>
    %c0_96 = arith.constant 0 : index
    %c0_97 = arith.constant 0 : index
    %c0_98 = arith.constant 0 : index
    %160 = vector.load %arg13[%c0_96, %c0_97, %c0_98] : memref<1x32x256xf32, #tpu.memory_space<vmem>>, vector<1x32x256xf32>
    %161 = vector.shape_cast %160 : vector<1x32x256xf32> to vector<32x256xf32>
    %162 = vector.shape_cast %159 : vector<32x256xf32> to vector<1x32x256xf32>
    tpu.vector_store %arg13[%c0_96, %c0_97, %c0_98], %162 {strides = array<i32>} : memref<1x32x256xf32, #tpu.memory_space<vmem>>, vector<1x32x256xf32>,
    return
  }
  func.func @transform_0(%arg0: i32) -> (i32, i32, i32) {
    %c0_i32 = arith.constant 0 : i32
    %c0_i32_0 = arith.constant 0 : i32
    %c0_i32_1 = arith.constant 0 : i32
    return %arg0, %c0_i32, %c0_i32_0 : i32, i32, i32
  }
  func.func @transform_1(%arg0: i32) -> (i32, i32, i32) {
    %c0_i32 = arith.constant 0 : i32
    %c0_i32_0 = arith.constant 0 : i32
    %c0_i32_1 = arith.constant 0 : i32
    return %arg0, %c0_i32, %c0_i32_0 : i32, i32, i32
  }
  func.func @transform_2(%arg0: i32) -> (i32, i32, i32) {
    %c0_i32 = arith.constant 0 : i32
    %c0_i32_0 = arith.constant 0 : i32
    %c0_i32_1 = arith.constant 0 : i32
    %c0_i32_2 = arith.constant 0 : i32
    return %c0_i32, %c0_i32_0, %c0_i32_1 : i32, i32, i32
  }
  func.func @transform_3(%arg0: i32) -> (i32, i32, i32) {
    %c0_i32 = arith.constant 0 : i32
    %c0_i32_0 = arith.constant 0 : i32
    %c0_i32_1 = arith.constant 0 : i32
    %c0_i32_2 = arith.constant 0 : i32
    return %c0_i32, %c0_i32_0, %c0_i32_1 : i32, i32, i32
  }
  func.func @transform_4(%arg0: i32) -> (i32, i32) {
    %c0_i32 = arith.constant 0 : i32
    %c0_i32_0 = arith.constant 0 : i32
    %c0_i32_1 = arith.constant 0 : i32
    return %c0_i32, %c0_i32_0 : i32, i32
  }
  func.func @transform_5(%arg0: i32) -> (i32, i32) {
    %c0_i32 = arith.constant 0 : i32
    %c0_i32_0 = arith.constant 0 : i32
    %c0_i32_1 = arith.constant 0 : i32
    return %c0_i32, %c0_i32_0 : i32, i32
  }
  func.func @transform_6(%arg0: i32) -> (i32, i32) {
    %c0_i32 = arith.constant 0 : i32
    %c0_i32_0 = arith.constant 0 : i32
    %c0_i32_1 = arith.constant 0 : i32
    return %c0_i32, %c0_i32_0 : i32, i32
  }
  func.func @transform_7(%arg0: i32) -> (i32, i32) {
    %c0_i32 = arith.constant 0 : i32
    %c0_i32_0 = arith.constant 0 : i32
    %c0_i32_1 = arith.constant 0 : i32
    return %c0_i32, %c0_i32_0 : i32, i32
  }
  func.func @transform_8(%arg0: i32) -> (i32, i32) {
    %c0_i32 = arith.constant 0 : i32
    %c0_i32_0 = arith.constant 0 : i32
    %c0_i32_1 = arith.constant 0 : i32
    return %c0_i32, %c0_i32_0 : i32, i32
  }
  func.func @transform_9(%arg0: i32) -> (i32, i32) {
    %c0_i32 = arith.constant 0 : i32
    %c0_i32_0 = arith.constant 0 : i32
    %c0_i32_1 = arith.constant 0 : i32
    return %c0_i32, %c0_i32_0 : i32, i32
  }
  func.func @transform_10(%arg0: i32) -> (i32, i32) {
    %c0_i32 = arith.constant 0 : i32
    %c0_i32_0 = arith.constant 0 : i32
    %c0_i32_1 = arith.constant 0 : i32
    return %c0_i32, %c0_i32_0 : i32, i32
  }
  func.func @transform_11(%arg0: i32) -> (i32, i32) {
    %c0_i32 = arith.constant 0 : i32
    %c0_i32_0 = arith.constant 0 : i32
    %c0_i32_1 = arith.constant 0 : i32
    return %c0_i32, %c0_i32_0 : i32, i32
  }
  func.func @transform_12(%arg0: i32) -> (i32, i32, i32) {
    %c0_i32 = arith.constant 0 : i32
    %c0_i32_0 = arith.constant 0 : i32
    %c0_i32_1 = arith.constant 0 : i32
    return %arg0, %c0_i32, %c0_i32_0 : i32, i32, i32
  }
}

</mosaic_0001>

<llo_original>
// kernel: tpu_custom_call.1
$region0: #{tpu_custom_call.1}
  #allocation0 [shape = 'u32[]', space=smem, size = 0x4, offset = 0x4, fixed_abs, tag = 'smem constant byte address 0x4 - core index']
  #allocation1 [shape = 'u32[72,128]{1,0:T(1,128)}', space=vmem, size = 0x9000, scoped, tag = 'internal scratch']
  %s0 = inlined_call_operand.vmem [shape: f32[2,32,256], index: 0, kind: input, shape index: {}]
  %s1 = inlined_call_operand.hbm [shape: f32[2,32,256], index: 1, kind: input, shape index: {}]
  %s2 = inlined_call_operand.vmem [shape: f32[5,1,256], index: 2, kind: input, shape index: {}]
  %s3 = inlined_call_operand.vmem [shape: f32[5,1,256], index: 3, kind: input, shape index: {}]
  %s4 = inlined_call_operand.hbm [shape: f32[64,320], index: 4, kind: input, shape index: {}]
  %s5 = inlined_call_operand.vmem [shape: f32[64,1], index: 5, kind: input, shape index: {}]
  %s6 = inlined_call_operand.hbm [shape: f32[32,320], index: 6, kind: input, shape index: {}]
  %s7 = inlined_call_operand.vmem [shape: f32[32,1], index: 7, kind: input, shape index: {}]
  %s8 = inlined_call_operand.hbm [shape: f32[64,320], index: 8, kind: input, shape index: {}]
  %s9 = inlined_call_operand.vmem [shape: f32[64,1], index: 9, kind: input, shape index: {}]
  %s10 = inlined_call_operand.hbm [shape: f32[32,320], index: 10, kind: input, shape index: {}]
  %s11 = inlined_call_operand.vmem [shape: f32[32,1], index: 11, kind: input, shape index: {}]
  %s12 = inlined_call_operand.hbm [shape: f32[2,32,256], index: 12, kind: output, shape index: {}]
  %s13 = sld [smem:[#allocation0]]
  $region101: #{tpu_custom_call.1} parent=0
    _
  %s15 = ssub.s32 1, %s13
  %s16 = scalar_select 0, %s15, %s13
  $region1: #{tpu_custom_call.1} parent=0
    #allocation2 [shape = 'u8[65536]{0}', space=vmem, size = 0x10000, scoped, tag = 'input window, operand 1']
    #allocation3 [shape = 's32[2]{0}', space=sflag, size = 0x8, scoped, tag = 'scoped memory for tpu_custom_call.1']
    #allocation4 [shape = 's32[2]{0}', space=sflag, size = 0x8, scoped, tag = 'scoped memory for tpu_custom_call.1']
    #allocation5 [shape = 'u8[98304]{0}', space=vmem, size = 0x18000, scoped, tag = 'input window, operand 4, single buffered']
    #allocation6 [shape = 's32[1]{0}', space=sflag, size = 0x4, scoped, tag = 'scoped memory for tpu_custom_call.1']
    #allocation7 [shape = 'u8[49152]{0}', space=vmem, size = 0xc000, scoped, tag = 'input window, operand 6, single buffered']
    #allocation8 [shape = 'u8[98304]{0}', space=vmem, size = 0x18000, scoped, tag = 'input window, operand 8, single buffered']
    #allocation9 [shape = 's32[1]{0}', space=sflag, size = 0x4, scoped, tag = 'scoped memory for tpu_custom_call.1']
    #allocation10 [shape = 'u8[49152]{0}', space=vmem, size = 0xc000, scoped, tag = 'input window, operand 10, single buffered']
    #allocation11 [shape = 'u8[65536]{0}', space=vmem, size = 0x10000, scoped, tag = 'output window, operand 0']
    %17 = vsyncpa [#allocation3], 0
    %s18 = scalar_lea.sflag [#allocation3], 1
    %19 = vsyncpa %s18, 0
    %20 = vsyncpa [#allocation6], 0
    %21 = vsyncpa [#allocation9], 0
    %22 = vsyncpa [#allocation4], 0
    %s23 = scalar_lea.sflag [#allocation4], 1
    %24 = vsyncpa %s23, 0
    loop: start=0, step=1, limit=4
    $region2: #{tpu_custom_call.1} parent=1 // loop_pre_header
      _
    $region3: #{tpu_custom_call.1} parent=1 // loop_header
      %s26 = sphi 0, %s30
      %p27 = scmp.ge.s32.totalorder %s26, 4
      %s36 = sphi 0, %s38
      %s39 = sphi 0, %s36
      %s40 = sphi 0, %s39
      %s56 = sphi 0, %s40
      %s62 = sphi 0, %s64
      %s65 = sphi 0, %s62
      %s66 = sphi 0, %s65
      %s82 = sphi 0, %s66
      %s86 = sphi 0, %s86
      %s88 = sphi 0, %s86
      %s89 = sphi 0, %s88
      %s103 = sphi 0, %s89
      %s107 = sphi 0, %s107
      %s109 = sphi 0, %s107
      %s110 = sphi 0, %s109
      %s124 = sphi 0, %s110
      %s128 = sphi 0, %s128
      %s130 = sphi 0, %s128
      %s131 = sphi 0, %s130
      %s145 = sphi 0, %s131
      %s149 = sphi 0, %s149
      %s151 = sphi 0, %s149
      %s152 = sphi 0, %s151
      %s166 = sphi 0, %s152
      %s170 = sphi 0, %s170
      %s172 = sphi 0, %s170
      %s173 = sphi 0, %s172
      %s187 = sphi 0, %s173
      %s191 = sphi 0, %s191
      %s193 = sphi 0, %s191
      %s194 = sphi 0, %s193
      %s208 = sphi 0, %s194
      %s212 = sphi 0, %s212
      %s214 = sphi 0, %s212
      %s215 = sphi 0, %s214
      %s229 = sphi 0, %s215
      %s233 = sphi 0, %s233
      %s235 = sphi 0, %s233
      %s236 = sphi 0, %s235
      %s250 = sphi 0, %s236
      %s254 = sphi 0, %s254
      %s256 = sphi 0, %s254
      %s257 = sphi 0, %s256
      %s271 = sphi 0, %s257
      %s275 = sphi 0, %s275
      %s277 = sphi 0, %s275
      %s278 = sphi 0, %s277
      %s292 = sphi 0, %s278
      %s298 = sphi 0, %s300
      %s301 = sphi 0, %s298
      %s302 = sphi 0, %s301
      %s318 = sphi 0, %s302
    $region4: #{tpu_custom_call.1} parent=1 // loop_header_branch
      %29 = sbr.rel (%p27) target = $region8
    $region5: #{tpu_custom_call.1} parent=1 // loop_body
      %s31 = ssub.s32 %s26, 1
      %s32 = ssub.s32 %s26, 2
      %s33 = sadd.s32 %s26, 1
      %s34 = ssub.s32 %s26, %s33
      %p35 = scmp.eq.s32.totalorder %s34, 0
      %s37 = sadd.s32 %s36, 1
      %s38 = scalar_select %p35, %s36, %s37
      %p41 = pneg %p35
      %p42 = scmp.eq.s32.totalorder %s26, 1
      %p43 = por %p41, %p42
      %p44 = scmp.ne.s32.totalorder %s36, %s39
      %p45 = scmp.eq.s32.totalorder %s26, 0
      %p46 = por %p44, %p45
      %p47 = scmp.ne.s32.totalorder %s36, %s39
      %p48 = scmp.eq.s32.totalorder %s31, 1
      %p49 = por %p47, %p48
      %p50 = scmp.ne.s32.totalorder %s39, %s40
      %p51 = scmp.eq.s32.totalorder %s31, 0
      %p52 = por %p50, %p51
      %p53 = scmp.ne.s32.totalorder %s39, %s40
      %p54 = scmp.eq.s32.totalorder %s32, 1
      %p55 = por %p53, %p54
      %p57 = scmp.ne.s32.totalorder %s40, %s56
      %p58 = scmp.eq.s32.totalorder %s32, 0
      %p59 = por %p57, %p58
      %s60 = ssub.s32 %s26, %s33
      %p61 = scmp.eq.s32.totalorder %s60, 0
      %s63 = sadd.s32 %s62, 1
      %s64 = scalar_select %p61, %s62, %s63
      %p67 = pneg %p61
      %p68 = scmp.eq.s32.totalorder %s26, 1
      %p69 = por %p67, %p68
      %p70 = scmp.ne.s32.totalorder %s62, %s65
      %p71 = scmp.eq.s32.totalorder %s26, 0
      %p72 = por %p70, %p71
      %p73 = scmp.ne.s32.totalorder %s62, %s65
      %p74 = scmp.eq.s32.totalorder %s31, 1
      %p75 = por %p73, %p74
      %p76 = scmp.ne.s32.totalorder %s65, %s66
      %p77 = scmp.eq.s32.totalorder %s31, 0
      %p78 = por %p76, %p77
      %p79 = scmp.ne.s32.totalorder %s65, %s66
      %p80 = scmp.eq.s32.totalorder %s32, 1
      %p81 = por %p79, %p80
      %p83 = scmp.ne.s32.totalorder %s66, %s82
      %p84 = scmp.eq.s32.totalorder %s32, 0
      %p85 = por %p83, %p84
      %s87 = sadd.s32 %s86, 1
      %p90 = scmp.eq.s32.totalorder %s26, 1
      %p91 = scmp.ne.s32.totalorder %s86, %s88
      %p92 = scmp.eq.s32.totalorder %s26, 0
      %p93 = por %p91, %p92
      %p94 = scmp.ne.s32.totalorder %s86, %s88
      %p95 = scmp.eq.s32.totalorder %s31, 1
      %p96 = por %p94, %p95
      %p97 = scmp.ne.s32.totalorder %s88, %s89
      %p98 = scmp.eq.s32.totalorder %s31, 0
      %p99 = por %p97, %p98
      %p100 = scmp.ne.s32.totalorder %s88, %s89
      %p101 = scmp.eq.s32.totalorder %s32, 1
      %p102 = por %p100, %p101
      %p104 = scmp.ne.s32.totalorder %s89, %s103
      %p105 = scmp.eq.s32.totalorder %s32, 0
      %p106 = por %p104, %p105
      %s108 = sadd.s32 %s107, 1
      %p111 = scmp.eq.s32.totalorder %s26, 1
      %p112 = scmp.ne.s32.totalorder %s107, %s109
      %p113 = scmp.eq.s32.totalorder %s26, 0
      %p114 = por %p112, %p113
      %p115 = scmp.ne.s32.totalorder %s107, %s109
      %p116 = scmp.eq.s32.totalorder %s31, 1
      %p117 = por %p115, %p116
      %p118 = scmp.ne.s32.totalorder %s109, %s110
      %p119 = scmp.eq.s32.totalorder %s31, 0
      %p120 = por %p118, %p119
      %p121 = scmp.ne.s32.totalorder %s109, %s110
      %p122 = scmp.eq.s32.totalorder %s32, 1
      %p123 = por %p121, %p122
      %p125 = scmp.ne.s32.totalorder %s110, %s124
      %p126 = scmp.eq.s32.totalorder %s32, 0
      %p127 = por %p125, %p126
      %s129 = sadd.s32 %s128, 1
      %p132 = scmp.eq.s32.totalorder %s26, 1
      %p133 = scmp.ne.s32.totalorder %s128, %s130
      %p134 = scmp.eq.s32.totalorder %s26, 0
      %p135 = por %p133, %p134
      %p136 = scmp.ne.s32.totalorder %s128, %s130
      %p137 = scmp.eq.s32.totalorder %s31, 1
      %p138 = por %p136, %p137
      %p139 = scmp.ne.s32.totalorder %s130, %s131
      %p140 = scmp.eq.s32.totalorder %s31, 0
      %p141 = por %p139, %p140
      %p142 = scmp.ne.s32.totalorder %s130, %s131
      %p143 = scmp.eq.s32.totalorder %s32, 1
      %p144 = por %p142, %p143
      %p146 = scmp.ne.s32.totalorder %s131, %s145
      %p147 = scmp.eq.s32.totalorder %s32, 0
      %p148 = por %p146, %p147
      %s150 = sadd.s32 %s149, 1
      %p153 = scmp.eq.s32.totalorder %s26, 1
      %p154 = scmp.ne.s32.totalorder %s149, %s151
      %p155 = scmp.eq.s32.totalorder %s26, 0
      %p156 = por %p154, %p155
      %p157 = scmp.ne.s32.totalorder %s149, %s151
      %p158 = scmp.eq.s32.totalorder %s31, 1
      %p159 = por %p157, %p158
      %p160 = scmp.ne.s32.totalorder %s151, %s152
      %p161 = scmp.eq.s32.totalorder %s31, 0
      %p162 = por %p160, %p161
      %p163 = scmp.ne.s32.totalorder %s151, %s152
      %p164 = scmp.eq.s32.totalorder %s32, 1
      %p165 = por %p163, %p164
      %p167 = scmp.ne.s32.totalorder %s152, %s166
      %p168 = scmp.eq.s32.totalorder %s32, 0
      %p169 = por %p167, %p168
      %s171 = sadd.s32 %s170, 1
      %p174 = scmp.eq.s32.totalorder %s26, 1
      %p175 = scmp.ne.s32.totalorder %s170, %s172
      %p176 = scmp.eq.s32.totalorder %s26, 0
      %p177 = por %p175, %p176
      %p178 = scmp.ne.s32.totalorder %s170, %s172
      %p179 = scmp.eq.s32.totalorder %s31, 1
      %p180 = por %p178, %p179
      %p181 = scmp.ne.s32.totalorder %s172, %s173
      %p182 = scmp.eq.s32.totalorder %s31, 0
      %p183 = por %p181, %p182
      %p184 = scmp.ne.s32.totalorder %s172, %s173
      %p185 = scmp.eq.s32.totalorder %s32, 1
      %p186 = por %p184, %p185
      %p188 = scmp.ne.s32.totalorder %s173, %s187
      %p189 = scmp.eq.s32.totalorder %s32, 0
      %p190 = por %p188, %p189
      %s192 = sadd.s32 %s191, 1
      %p195 = scmp.eq.s32.totalorder %s26, 1
      %p196 = scmp.ne.s32.totalorder %s191, %s193
      %p197 = scmp.eq.s32.totalorder %s26, 0
      %p198 = por %p196, %p197
      %p199 = scmp.ne.s32.totalorder %s191, %s193
      %p200 = scmp.eq.s32.totalorder %s31, 1
      %p201 = por %p199, %p200
      %p202 = scmp.ne.s32.totalorder %s193, %s194
      %p203 = scmp.eq.s32.totalorder %s31, 0
      %p204 = por %p202, %p203
      %p205 = scmp.ne.s32.totalorder %s193, %s194
      %p206 = scmp.eq.s32.totalorder %s32, 1
      %p207 = por %p205, %p206
      %p209 = scmp.ne.s32.totalorder %s194, %s208
      %p210 = scmp.eq.s32.totalorder %s32, 0
      %p211 = por %p209, %p210
      %s213 = sadd.s32 %s212, 1
      %p216 = scmp.eq.s32.totalorder %s26, 1
      %p217 = scmp.ne.s32.totalorder %s212, %s214
      %p218 = scmp.eq.s32.totalorder %s26, 0
      %p219 = por %p217, %p218
      %p220 = scmp.ne.s32.totalorder %s212, %s214
      %p221 = scmp.eq.s32.totalorder %s31, 1
      %p222 = por %p220, %p221
      %p223 = scmp.ne.s32.totalorder %s214, %s215
      %p224 = scmp.eq.s32.totalorder %s31, 0
      %p225 = por %p223, %p224
      %p226 = scmp.ne.s32.totalorder %s214, %s215
      %p227 = scmp.eq.s32.totalorder %s32, 1
      %p228 = por %p226, %p227
      %p230 = scmp.ne.s32.totalorder %s215, %s229
      %p231 = scmp.eq.s32.totalorder %s32, 0
      %p232 = por %p230, %p231
      %s234 = sadd.s32 %s233, 1
      %p237 = scmp.eq.s32.totalorder %s26, 1
      %p238 = scmp.ne.s32.totalorder %s233, %s235
      %p239 = scmp.eq.s32.totalorder %s26, 0
      %p240 = por %p238, %p239
      %p241 = scmp.ne.s32.totalorder %s233, %s235
      %p242 = scmp.eq.s32.totalorder %s31, 1
      %p243 = por %p241, %p242
      %p244 = scmp.ne.s32.totalorder %s235, %s236
      %p245 = scmp.eq.s32.totalorder %s31, 0
      %p246 = por %p244, %p245
      %p247 = scmp.ne.s32.totalorder %s235, %s236
      %p248 = scmp.eq.s32.totalorder %s32, 1
      %p249 = por %p247, %p248
      %p251 = scmp.ne.s32.totalorder %s236, %s250
      %p252 = scmp.eq.s32.totalorder %s32, 0
      %p253 = por %p251, %p252
      %s255 = sadd.s32 %s254, 1
      %p258 = scmp.eq.s32.totalorder %s26, 1
      %p259 = scmp.ne.s32.totalorder %s254, %s256
      %p260 = scmp.eq.s32.totalorder %s26, 0
      %p261 = por %p259, %p260
      %p262 = scmp.ne.s32.totalorder %s254, %s256
      %p263 = scmp.eq.s32.totalorder %s31, 1
      %p264 = por %p262, %p263
      %p265 = scmp.ne.s32.totalorder %s256, %s257
      %p266 = scmp.eq.s32.totalorder %s31, 0
      %p267 = por %p265, %p266
      %p268 = scmp.ne.s32.totalorder %s256, %s257
      %p269 = scmp.eq.s32.totalorder %s32, 1
      %p270 = por %p268, %p269
      %p272 = scmp.ne.s32.totalorder %s257, %s271
      %p273 = scmp.eq.s32.totalorder %s32, 0
      %p274 = por %p272, %p273
      %s276 = sadd.s32 %s275, 1
      %p279 = scmp.eq.s32.totalorder %s26, 1
      %p280 = scmp.ne.s32.totalorder %s275, %s277
      %p281 = scmp.eq.s32.totalorder %s26, 0
      %p282 = por %p280, %p281
      %p283 = scmp.ne.s32.totalorder %s275, %s277
      %p284 = scmp.eq.s32.totalorder %s31, 1
      %p285 = por %p283, %p284
      %p286 = scmp.ne.s32.totalorder %s277, %s278
      %p287 = scmp.eq.s32.totalorder %s31, 0
      %p288 = por %p286, %p287
      %p289 = scmp.ne.s32.totalorder %s277, %s278
      %p290 = scmp.eq.s32.totalorder %s32, 1
      %p291 = por %p289, %p290
      %p293 = scmp.ne.s32.totalorder %s278, %s292
      %p294 = scmp.eq.s32.totalorder %s32, 0
      %p295 = por %p293, %p294
      %s296 = ssub.s32 %s26, %s33
      %p297 = scmp.eq.s32.totalorder %s296, 0
      %s299 = sadd.s32 %s298, 1
      %s300 = scalar_select %p297, %s298, %s299
      %p303 = pneg %p297
      %p304 = scmp.eq.s32.totalorder %s26, 1
      %p305 = por %p303, %p304
      %p306 = scmp.ne.s32.totalorder %s298, %s301
      %p307 = scmp.eq.s32.totalorder %s26, 0
      %p308 = por %p306, %p307
      %p309 = scmp.ne.s32.totalorder %s298, %s301
      %p310 = scmp.eq.s32.totalorder %s31, 1
      %p311 = por %p309, %p310
      %p312 = scmp.ne.s32.totalorder %s301, %s302
      %p313 = scmp.eq.s32.totalorder %s31, 0
      %p314 = por %p312, %p313
      %p315 = scmp.ne.s32.totalorder %s301, %s302
      %p316 = scmp.eq.s32.totalorder %s32, 1
      %p317 = por %p315, %p316
      %p319 = scmp.ne.s32.totalorder %s302, %s318
      %p320 = scmp.eq.s32.totalorder %s32, 0
      %p321 = por %p319, %p320
      %p322 = scmp.le.s32.totalorder 1, %s26
      %p323 = scmp.lt.s32.totalorder %s26, 3
      %p324 = pnand %p322, %p323
      %p325 = pneg %p324
      // Predicated region
      $region9: #{tpu_custom_call.1} parent=5 // pred_check
        _
      $region10: #{tpu_custom_call.1} parent=5 // pred_check_branch
        %327 = sbr.rel (%p324) target = $region12
      $region11: #{tpu_custom_call.1} parent=5 // pred_region
        %s328 = ssub.s32 %s26, 1
        // Predicated region
        $region13: #{tpu_custom_call.1} parent=11 // pred_check
          %p329 = pneg %p99
        $region14: #{tpu_custom_call.1} parent=11 // pred_check_branch
          %331 = sbr.rel (%p329) target = $region16
        $region15: #{tpu_custom_call.1} parent=11 // pred_region
          _
        $region16: #{tpu_custom_call.1} parent=11 // pred_fallthru
          _
        // Predicated region
        $region17: #{tpu_custom_call.1} parent=11 // pred_check
          %p332 = pneg %p120
        $region18: #{tpu_custom_call.1} parent=11 // pred_check_branch
          %334 = sbr.rel (%p332) target = $region20
        $region19: #{tpu_custom_call.1} parent=11 // pred_region
          _
        $region20: #{tpu_custom_call.1} parent=11 // pred_fallthru
          _
        // Predicated region
        $region21: #{tpu_custom_call.1} parent=11 // pred_check
          %p335 = pneg %p141
        $region22: #{tpu_custom_call.1} parent=11 // pred_check_branch
          %337 = sbr.rel (%p335) target = $region24
        $region23: #{tpu_custom_call.1} parent=11 // pred_region
          %339 = vsyncadd [#allocation6], 0
          %s340 = sshll.u32 %s4, 4
          %s341 = int_to_ptr.hbm [resolvable:$true] %s340
          %s342 = sshll.u32 [#allocation5], 4
          %s343 = int_to_ptr.vmem [resolvable:$true] %s342
          %348 = dma.hbm_to_vmem [thread:$0]  %s341, 3072, %s343, [#allocation6], 384, 384, 24
        $region24: #{tpu_custom_call.1} parent=11 // pred_fallthru
          _
        // Predicated region
        $region25: #{tpu_custom_call.1} parent=11 // pred_check
          %p349 = pneg %p162
        $region26: #{tpu_custom_call.1} parent=11 // pred_check_branch
          %351 = sbr.rel (%p349) target = $region28
        $region27: #{tpu_custom_call.1} parent=11 // pred_region
          _
        $region28: #{tpu_custom_call.1} parent=11 // pred_fallthru
          _
        // Predicated region
        $region29: #{tpu_custom_call.1} parent=11 // pred_check
          %p352 = pneg %p183
        $region30: #{tpu_custom_call.1} parent=11 // pred_check_branch
          %354 = sbr.rel (%p352) target = $region32
        $region31: #{tpu_custom_call.1} parent=11 // pred_region
          %356 = vsyncadd [#allocation6], 0
          %s357 = sshll.u32 %s6, 4
          %s358 = int_to_ptr.hbm [resolvable:$true] %s357
          %s359 = sshll.u32 [#allocation7], 4
          %s360 = int_to_ptr.vmem [resolvable:$true] %s359
          %365 = dma.hbm_to_vmem [thread:$0]  %s358, 1536, %s360, [#allocation6], 384, 384, 24
        $region32: #{tpu_custom_call.1} parent=11 // pred_fallthru
          _
        // Predicated region
        $region33: #{tpu_custom_call.1} parent=11 // pred_check
          %p366 = pneg %p204
        $region34: #{tpu_custom_call.1} parent=11 // pred_check_branch
          %368 = sbr.rel (%p366) target = $region36
        $region35: #{tpu_custom_call.1} parent=11 // pred_region
          _
        $region36: #{tpu_custom_call.1} parent=11 // pred_fallthru
          _
        // Predicated region
        $region37: #{tpu_custom_call.1} parent=11 // pred_check
          %p369 = pneg %p225
        $region38: #{tpu_custom_call.1} parent=11 // pred_check_branch
          %371 = sbr.rel (%p369) target = $region40
        $region39: #{tpu_custom_call.1} parent=11 // pred_region
          %373 = vsyncadd [#allocation9], 0
          %s374 = sshll.u32 %s8, 4
          %s375 = int_to_ptr.hbm [resolvable:$true] %s374
          %s376 = sshll.u32 [#allocation8], 4
          %s377 = int_to_ptr.vmem [resolvable:$true] %s376
          %382 = dma.hbm_to_vmem [thread:$0]  %s375, 3072, %s377, [#allocation9], 384, 384, 24
        $region40: #{tpu_custom_call.1} parent=11 // pred_fallthru
          _
        // Predicated region
        $region41: #{tpu_custom_call.1} parent=11 // pred_check
          %p383 = pneg %p246
        $region42: #{tpu_custom_call.1} parent=11 // pred_check_branch
          %385 = sbr.rel (%p383) target = $region44
        $region43: #{tpu_custom_call.1} parent=11 // pred_region
          _
        $region44: #{tpu_custom_call.1} parent=11 // pred_fallthru
          _
        // Predicated region
        $region45: #{tpu_custom_call.1} parent=11 // pred_check
          %p386 = pneg %p267
        $region46: #{tpu_custom_call.1} parent=11 // pred_check_branch
          %388 = sbr.rel (%p386) target = $region48
        $region47: #{tpu_custom_call.1} parent=11 // pred_region
          %390 = vsyncadd [#allocation9], 0
          %s391 = sshll.u32 %s10, 4
          %s392 = int_to_ptr.hbm [resolvable:$true] %s391
          %s393 = sshll.u32 [#allocation10], 4
          %s394 = int_to_ptr.vmem [resolvable:$true] %s393
          %399 = dma.hbm_to_vmem [thread:$0]  %s392, 1536, %s394, [#allocation9], 384, 384, 24
        $region48: #{tpu_custom_call.1} parent=11 // pred_fallthru
          _
        // Predicated region
        $region49: #{tpu_custom_call.1} parent=11 // pred_check
          %p400 = pneg %p288
        $region50: #{tpu_custom_call.1} parent=11 // pred_check_branch
          %402 = sbr.rel (%p400) target = $region52
        $region51: #{tpu_custom_call.1} parent=11 // pred_region
          _
        $region52: #{tpu_custom_call.1} parent=11 // pred_fallthru
          _
      $region12: #{tpu_custom_call.1} parent=5 // pred_fallthru
        _
      %p403 = scmp.lt.s32.totalorder %s26, 2
      // Predicated region
      $region53: #{tpu_custom_call.1} parent=5 // pred_check
        %p404 = pneg %p403
      $region54: #{tpu_custom_call.1} parent=5 // pred_check_branch
        %406 = sbr.rel (%p404) target = $region56
      $region55: #{tpu_custom_call.1} parent=5 // pred_region
        // Predicated region
        $region57: #{tpu_custom_call.1} parent=55 // pred_check
          %p407 = pneg %p46
        $region58: #{tpu_custom_call.1} parent=55 // pred_check_branch
          %409 = sbr.rel (%p407) target = $region60
        $region59: #{tpu_custom_call.1} parent=55 // pred_region
          %p410 = scmp.lt.s32.totalorder %s26, 1
          %s411 = scalar_select %p410, %s26, 1
          %s412 = smul.addr %s411, 8
          %s413 = smul.addr %s412, 8
          %s414 = scalar_lea.vmem %s0, %s413
        $region60: #{tpu_custom_call.1} parent=55 // pred_fallthru
          _
        // Predicated region
        $region61: #{tpu_custom_call.1} parent=55 // pred_check
          %p415 = pneg %p72
        $region62: #{tpu_custom_call.1} parent=55 // pred_check_branch
          %417 = sbr.rel (%p415) target = $region64
        $region63: #{tpu_custom_call.1} parent=55 // pred_region
          %s418 = sand.u32 %s62, 1
          %s419 = scalar_lea.sflag [#allocation3], %s418
          %s420 = sand.u32 %s62, 1
          %s421 = smul.addr %s420, 64
          %s422 = scalar_lea.vmem [#allocation2], %s421
          %424 = vsyncadd %s419, 0
          %s425 = smul.addr %s26, 8
          %s426 = smul.addr %s425, 8
          %s427 = scalar_lea.hbm %s1, %s426
          %s428 = sshll.u32 %s427, 4
          %s429 = int_to_ptr.hbm [resolvable:$true] %s428
          %s430 = sshll.u32 %s422, 4
          %s431 = int_to_ptr.vmem [resolvable:$true] %s430
          %436 = dma.hbm_to_vmem [thread:$0]  %s429, 1024, %s431, %s419, 256, 256, 16
        $region64: #{tpu_custom_call.1} parent=55 // pred_fallthru
          _
      $region56: #{tpu_custom_call.1} parent=5 // pred_fallthru
        _
      %p437 = scmp.le.s32.totalorder 1, %s26
      %p438 = scmp.lt.s32.totalorder %s26, 3
      %p439 = pnand %p437, %p438
      %p440 = pneg %p439
      // Predicated region
      $region65: #{tpu_custom_call.1} parent=5 // pred_check
        _
      $region66: #{tpu_custom_call.1} parent=5 // pred_check_branch
        %442 = sbr.rel (%p439) target = $region68
      $region67: #{tpu_custom_call.1} parent=5 // pred_region
        %s443 = ssub.s32 %s26, 1
        %s444 = sand.u32 %s65, 1
        %s445 = scalar_lea.sflag [#allocation3], %s444
        %s446 = sand.u32 %s65, 1
        %s447 = smul.addr %s446, 64
        %s448 = scalar_lea.vmem [#allocation2], %s447
        // Predicated region
        $region69: #{tpu_custom_call.1} parent=67 // pred_check
          %p449 = pneg %p78
        $region70: #{tpu_custom_call.1} parent=67 // pred_check_branch
          %451 = sbr.rel (%p449) target = $region72
        $region71: #{tpu_custom_call.1} parent=67 // pred_region
          %453 = dma.done %s445, 1024
        $region72: #{tpu_custom_call.1} parent=67 // pred_fallthru
          _
        // Predicated region
        $region73: #{tpu_custom_call.1} parent=67 // pred_check
          %p454 = pneg %p141
        $region74: #{tpu_custom_call.1} parent=67 // pred_check_branch
          %456 = sbr.rel (%p454) target = $region76
        $region75: #{tpu_custom_call.1} parent=67 // pred_region
          %458 = dma.done [#allocation6], 3072
        $region76: #{tpu_custom_call.1} parent=67 // pred_fallthru
          _
        // Predicated region
        $region77: #{tpu_custom_call.1} parent=67 // pred_check
          %p459 = pneg %p183
        $region78: #{tpu_custom_call.1} parent=67 // pred_check_branch
          %461 = sbr.rel (%p459) target = $region80
        $region79: #{tpu_custom_call.1} parent=67 // pred_region
          %463 = dma.done [#allocation6], 1536
        $region80: #{tpu_custom_call.1} parent=67 // pred_fallthru
          _
        // Predicated region
        $region81: #{tpu_custom_call.1} parent=67 // pred_check
          %p464 = pneg %p225
        $region82: #{tpu_custom_call.1} parent=67 // pred_check_branch
          %466 = sbr.rel (%p464) target = $region84
        $region83: #{tpu_custom_call.1} parent=67 // pred_region
          %468 = dma.done [#allocation9], 3072
        $region84: #{tpu_custom_call.1} parent=67 // pred_fallthru
          _
        // Predicated region
        $region85: #{tpu_custom_call.1} parent=67 // pred_check
          %p469 = pneg %p267
        $region86: #{tpu_custom_call.1} parent=67 // pred_check_branch
          %471 = sbr.rel (%p469) target = $region88
        $region87: #{tpu_custom_call.1} parent=67 // pred_region
          %473 = dma.done [#allocation9], 1536
        $region88: #{tpu_custom_call.1} parent=67 // pred_fallthru
          _
        %p474 = scmp.lt.s32.totalorder %s31, 1
        %s475 = scalar_select %p474, %s31, 1
        %s476 = smul.addr %s475, 8
        %s477 = smul.addr %s476, 8
        %s478 = scalar_lea.vmem %s0, %s477
        %p479 = pneg %p52
        %p480 = pneg %p49
        %s481 = sand.u32 %s65, 1
        %s482 = scalar_lea.sflag [#allocation3], %s481
        %s483 = sand.u32 %s65, 1
        %s484 = smul.addr %s483, 64
        %s485 = scalar_lea.vmem [#allocation2], %s484
        %p486 = pneg %p78
        %p487 = pneg %p75
        %p488 = pneg %p99
        %p489 = pneg %p96
        %p490 = pneg %p120
        %p491 = pneg %p117
        %p492 = pneg %p141
        %p493 = pneg %p138
        %p494 = pneg %p162
        %p495 = pneg %p159
        %p496 = pneg %p183
        %p497 = pneg %p180
        %p498 = pneg %p204
        %p499 = pneg %p201
        %p500 = pneg %p225
        %p501 = pneg %p222
        %p502 = pneg %p246
        %p503 = pneg %p243
        %p504 = pneg %p267
        %p505 = pneg %p264
        %p506 = pneg %p288
        %p507 = pneg %p285
        %p508 = pneg %p314
        %p509 = pneg %p311
        %s510 = sand.u32 %s301, 1
        %s511 = scalar_lea.sflag [#allocation4], %s510
        %s512 = sand.u32 %s301, 1
        %s513 = smul.addr %s512, 64
        %s514 = scalar_lea.vmem [#allocation11], %s513
        %p515 = scmp.lt.s32.totalorder %s31, 1
        %s516 = scalar_select %p515, %s31, 1
        %s517 = smul.addr %s516, 8
        %s518 = smul.addr %s517, 8
        %s519 = scalar_lea.vmem %s0, %s518
        %v520 = vld [vmem:[%s519] sm:$0xff]
        %v521 = vld [vmem:[%s519 + $0x8] sm:$0xff]
        %v522 = vld [vmem:[%s519 + $0x10] sm:$0xff]
        %v523 = vld [vmem:[%s519 + $0x18] sm:$0xff]
        %v524 = vld [vmem:[%s519 + $0x20] sm:$0xff]
        %v525 = vld [vmem:[%s519 + $0x28] sm:$0xff]
        %v526 = vld [vmem:[%s519 + $0x30] sm:$0xff]
        %v527 = vld [vmem:[%s519 + $0x38] sm:$0xff]
        %v528 = vld [vmem:[%s448] sm:$0xff]
        %v529 = vld [vmem:[%s448 + $0x8] sm:$0xff]
        %v530 = vld [vmem:[%s448 + $0x10] sm:$0xff]
        %v531 = vld [vmem:[%s448 + $0x18] sm:$0xff]
        %v532 = vld [vmem:[%s448 + $0x20] sm:$0xff]
        %v533 = vld [vmem:[%s448 + $0x28] sm:$0xff]
        %v534 = vld [vmem:[%s448 + $0x30] sm:$0xff]
        %v535 = vld [vmem:[%s448 + $0x38] sm:$0xff]
        %v536 = vld [vmem:[#allocation5] sm:$0xff]
        %v537 = vld [vmem:[#allocation5 + $0x8] sm:$0xff]
        %v538 = vld [vmem:[#allocation5 + $0x10] sm:$0xff]
        %v539 = vld [vmem:[#allocation5 + $0x18] sm:$0xff]
        %v540 = vld [vmem:[#allocation5 + $0x20] sm:$0xff]
        %v541 = vld [vmem:[#allocation5 + $0x28] sm:$0xff]
        %v542 = vld [vmem:[#allocation5 + $0x30] sm:$0xff]
        %v543 = vld [vmem:[#allocation5 + $0x38] sm:$0xff]
        %v544 = vld [vmem:[#allocation5 + $0x40] sm:$0xff]
        %v545 = vld [vmem:[#allocation5 + $0x48] sm:$0xff]
        %v546 = vld [vmem:[#allocation5 + $0x50] sm:$0xff]
        %v547 = vld [vmem:[#allocation5 + $0x58] sm:$0xff]
        %v548 = vld [vmem:[#allocation5 + $0x60] sm:$0xff]
        %v549 = vld [vmem:[#allocation5 + $0x68] sm:$0xff]
        %v550 = vld [vmem:[#allocation5 + $0x70] sm:$0xff]
        %v551 = vld [vmem:[#allocation5 + $0x78] sm:$0xff]
        %v552 = vld [vmem:[#allocation5 + $0x80] sm:$0xff]
        %v553 = vld [vmem:[#allocation5 + $0x88] sm:$0xff]
        %v554 = vld [vmem:[#allocation5 + $0x90] sm:$0xff]
        %v555 = vld [vmem:[#allocation5 + $0x98] sm:$0xff]
        %v556 = vld [vmem:[#allocation5 + $0xa0] sm:$0xff]
        %v557 = vld [vmem:[#allocation5 + $0xa8] sm:$0xff]
        %v558 = vld [vmem:[#allocation5 + $0xb0] sm:$0xff]
        %v559 = vld [vmem:[#allocation5 + $0xb8] sm:$0xff]
        %560 = vrot.lane.b32.xlu0 %v520, 2
        %v561 = vpop.permute.xlu0 %560
        %562 = vrot.lane.b32.xlu0 %v522, 2
        %v563 = vpop.permute.xlu0 %562
        %564 = vrot.lane.b32.xlu0 %v524, 2
        %v565 = vpop.permute.xlu0 %564
        %566 = vrot.lane.b32.xlu0 %v526, 2
        %v567 = vpop.permute.xlu0 %566
        %568 = vrot.lane.b32.xlu0 %v528, 2
        %v569 = vpop.permute.xlu0 %568
        %570 = vrot.lane.b32.xlu0 %v530, 2
        %v571 = vpop.permute.xlu0 %570
        %572 = vrot.lane.b32.xlu0 %v532, 2
        %v573 = vpop.permute.xlu0 %572
        %574 = vrot.lane.b32.xlu0 %v534, 2
        %v575 = vpop.permute.xlu0 %574
        %576 = vrot.lane.b32.xlu0 %v521, 2
        %v577 = vpop.permute.xlu0 %576
        %578 = vrot.lane.b32.xlu0 %v523, 2
        %v579 = vpop.permute.xlu0 %578
        %580 = vrot.lane.b32.xlu0 %v525, 2
        %v581 = vpop.permute.xlu0 %580
        %582 = vrot.lane.b32.xlu0 %v527, 2
        %v583 = vpop.permute.xlu0 %582
        %584 = vrot.lane.b32.xlu0 %v529, 2
        %v585 = vpop.permute.xlu0 %584
        %586 = vrot.lane.b32.xlu0 %v531, 2
        %v587 = vpop.permute.xlu0 %586
        %588 = vrot.lane.b32.xlu0 %v533, 2
        %v589 = vpop.permute.xlu0 %588
        %590 = vrot.lane.b32.xlu0 %v535, 2
        %v591 = vpop.permute.xlu0 %590
        %v592 = vlaneseq
        %v593 = vand.u32 %v592, 127
        %vm594 = vcmp.lt.s32.totalorder %v593, 2
        %v595 = vsel %vm594, %v561, %v577
        %v596 = vsel %vm594, %v563, %v579
        %v597 = vsel %vm594, %v565, %v581
        %v598 = vsel %vm594, %v567, %v583
        %v599 = vsel %vm594, %v569, %v585
        %v600 = vsel %vm594, %v571, %v587
        %v601 = vsel %vm594, %v573, %v589
        %v602 = vsel %vm594, %v575, %v591
        %v603 = vsel %vm594, %v577, %v561
        %v604 = vsel %vm594, %v579, %v563
        %v605 = vsel %vm594, %v581, %v565
        %v606 = vsel %vm594, %v583, %v567
        %v607 = vsel %vm594, %v585, %v569
        %v608 = vsel %vm594, %v587, %v571
        %v609 = vsel %vm594, %v589, %v573
        %v610 = vsel %vm594, %v591, %v575
        %v611 = vld [vmem:[%s2] sm:$0x3]
        %v613 = vperm.slane %v611, 0
        %v614 = vperm.slane %v611, 1
        %v617 = vmul.f32 %v603, %v613
        %v618 = vmul.f32 %v595, %v614
        %v619 = vmul.f32 %v604, %v613
        %v620 = vmul.f32 %v596, %v614
        %v621 = vmul.f32 %v605, %v613
        %v622 = vmul.f32 %v597, %v614
        %v623 = vmul.f32 %v606, %v613
        %v624 = vmul.f32 %v598, %v614
        %v625 = vmul.f32 %v607, %v613
        %v626 = vmul.f32 %v599, %v614
        %v627 = vmul.f32 %v608, %v613
        %v628 = vmul.f32 %v600, %v614
        %v629 = vmul.f32 %v609, %v613
        %v630 = vmul.f32 %v601, %v614
        %v631 = vmul.f32 %v610, %v613
        %v632 = vmul.f32 %v602, %v614
        %633 = vrot.lane.b32.xlu0 %v520, 1
        %v634 = vpop.permute.xlu0 %633
        %635 = vrot.lane.b32.xlu0 %v522, 1
        %v636 = vpop.permute.xlu0 %635
        %637 = vrot.lane.b32.xlu0 %v524, 1
        %v638 = vpop.permute.xlu0 %637
        %639 = vrot.lane.b32.xlu0 %v526, 1
        %v640 = vpop.permute.xlu0 %639
        %641 = vrot.lane.b32.xlu0 %v528, 1
        %v642 = vpop.permute.xlu0 %641
        %643 = vrot.lane.b32.xlu0 %v530, 1
        %v644 = vpop.permute.xlu0 %643
        %645 = vrot.lane.b32.xlu0 %v532, 1
        %v646 = vpop.permute.xlu0 %645
        %647 = vrot.lane.b32.xlu0 %v534, 1
        %v648 = vpop.permute.xlu0 %647
        %649 = vrot.lane.b32.xlu0 %v521, 1
        %v650 = vpop.permute.xlu0 %649
        %651 = vrot.lane.b32.xlu0 %v523, 1
        %v652 = vpop.permute.xlu0 %651
        %653 = vrot.lane.b32.xlu0 %v525, 1
        %v654 = vpop.permute.xlu0 %653
        %655 = vrot.lane.b32.xlu0 %v527, 1
        %v656 = vpop.permute.xlu0 %655
        %657 = vrot.lane.b32.xlu0 %v529, 1
        %v658 = vpop.permute.xlu0 %657
        %659 = vrot.lane.b32.xlu0 %v531, 1
        %v660 = vpop.permute.xlu0 %659
        %661 = vrot.lane.b32.xlu0 %v533, 1
        %v662 = vpop.permute.xlu0 %661
        %663 = vrot.lane.b32.xlu0 %v535, 1
        %v664 = vpop.permute.xlu0 %663
        %vm665 = vcmp.lt.s32.totalorder %v593, 1
        %v666 = vsel %vm665, %v634, %v650
        %v667 = vsel %vm665, %v636, %v652
        %v668 = vsel %vm665, %v638, %v654
        %v669 = vsel %vm665, %v640, %v656
        %v670 = vsel %vm665, %v642, %v658
        %v671 = vsel %vm665, %v644, %v660
        %v672 = vsel %vm665, %v646, %v662
        %v673 = vsel %vm665, %v648, %v664
        %v674 = vsel %vm665, %v650, %v634
        %v675 = vsel %vm665, %v652, %v636
        %v676 = vsel %vm665, %v654, %v638
        %v677 = vsel %vm665, %v656, %v640
        %v678 = vsel %vm665, %v658, %v642
        %v679 = vsel %vm665, %v660, %v644
        %v680 = vsel %vm665, %v662, %v646
        %v681 = vsel %vm665, %v664, %v648
        %s682 = scalar_lea.vmem %s2, 2
        %v683 = vld [vmem:[%s682] sm:$0x3]
        %v685 = vperm.slane %v683, 0
        %v686 = vperm.slane %v683, 1
        %v689 = vmul.f32 %v674, %v685
        %v690 = vmul.f32 %v666, %v686
        %v691 = vmul.f32 %v675, %v685
        %v692 = vmul.f32 %v667, %v686
        %v693 = vmul.f32 %v676, %v685
        %v694 = vmul.f32 %v668, %v686
        %v695 = vmul.f32 %v677, %v685
        %v696 = vmul.f32 %v669, %v686
        %v697 = vmul.f32 %v678, %v685
        %v698 = vmul.f32 %v670, %v686
        %v699 = vmul.f32 %v679, %v685
        %v700 = vmul.f32 %v671, %v686
        %v701 = vmul.f32 %v680, %v685
        %v702 = vmul.f32 %v672, %v686
        %v703 = vmul.f32 %v681, %v685
        %v704 = vmul.f32 %v673, %v686
        %s705 = scalar_lea.vmem %s2, 4
        %v706 = vld [vmem:[%s705] sm:$0x3]
        %v708 = vperm.slane %v706, 0
        %v709 = vperm.slane %v706, 1
        %v712 = vmul.f32 %v520, %v708
        %v713 = vmul.f32 %v521, %v709
        %v714 = vmul.f32 %v522, %v708
        %v715 = vmul.f32 %v523, %v709
        %v716 = vmul.f32 %v524, %v708
        %v717 = vmul.f32 %v525, %v709
        %v718 = vmul.f32 %v526, %v708
        %v719 = vmul.f32 %v527, %v709
        %v720 = vmul.f32 %v528, %v708
        %v721 = vmul.f32 %v529, %v709
        %v722 = vmul.f32 %v530, %v708
        %v723 = vmul.f32 %v531, %v709
        %v724 = vmul.f32 %v532, %v708
        %v725 = vmul.f32 %v533, %v709
        %v726 = vmul.f32 %v534, %v708
        %v727 = vmul.f32 %v535, %v709
        %728 = vrot.lane.b32.xlu0 %v520, 127
        %v729 = vpop.permute.xlu0 %728
        %730 = vrot.lane.b32.xlu0 %v522, 127
        %v731 = vpop.permute.xlu0 %730
        %732 = vrot.lane.b32.xlu0 %v524, 127
        %v733 = vpop.permute.xlu0 %732
        %734 = vrot.lane.b32.xlu0 %v526, 127
        %v735 = vpop.permute.xlu0 %734
        %736 = vrot.lane.b32.xlu0 %v528, 127
        %v737 = vpop.permute.xlu0 %736
        %738 = vrot.lane.b32.xlu0 %v530, 127
        %v739 = vpop.permute.xlu0 %738
        %740 = vrot.lane.b32.xlu0 %v532, 127
        %v741 = vpop.permute.xlu0 %740
        %742 = vrot.lane.b32.xlu0 %v534, 127
        %v743 = vpop.permute.xlu0 %742
        %744 = vrot.lane.b32.xlu0 %v521, 127
        %v745 = vpop.permute.xlu0 %744
        %746 = vrot.lane.b32.xlu0 %v523, 127
        %v747 = vpop.permute.xlu0 %746
        %748 = vrot.lane.b32.xlu0 %v525, 127
        %v749 = vpop.permute.xlu0 %748
        %750 = vrot.lane.b32.xlu0 %v527, 127
        %v751 = vpop.permute.xlu0 %750
        %752 = vrot.lane.b32.xlu0 %v529, 127
        %v753 = vpop.permute.xlu0 %752
        %754 = vrot.lane.b32.xlu0 %v531, 127
        %v755 = vpop.permute.xlu0 %754
        %756 = vrot.lane.b32.xlu0 %v533, 127
        %v757 = vpop.permute.xlu0 %756
        %758 = vrot.lane.b32.xlu0 %v535, 127
        %v759 = vpop.permute.xlu0 %758
        %vm760 = vcmp.lt.s32.totalorder %v593, 127
        %v761 = vsel %vm760, %v729, %v745
        %v762 = vsel %vm760, %v731, %v747
        %v763 = vsel %vm760, %v733, %v749
        %v764 = vsel %vm760, %v735, %v751
        %v765 = vsel %vm760, %v737, %v753
        %v766 = vsel %vm760, %v739, %v755
        %v767 = vsel %vm760, %v741, %v757
        %v768 = vsel %vm760, %v743, %v759
        %v769 = vsel %vm760, %v745, %v729
        %v770 = vsel %vm760, %v747, %v731
        %v771 = vsel %vm760, %v749, %v733
        %v772 = vsel %vm760, %v751, %v735
        %v773 = vsel %vm760, %v753, %v737
        %v774 = vsel %vm760, %v755, %v739
        %v775 = vsel %vm760, %v757, %v741
        %v776 = vsel %vm760, %v759, %v743
        %s777 = scalar_lea.vmem %s2, 6
        %v778 = vld [vmem:[%s777] sm:$0x3]
        %v780 = vperm.slane %v778, 0
        %v781 = vperm.slane %v778, 1
        %v784 = vmul.f32 %v761, %v780
        %v785 = vmul.f32 %v769, %v781
        %v786 = vmul.f32 %v762, %v780
        %v787 = vmul.f32 %v770, %v781
        %v788 = vmul.f32 %v763, %v780
        %v789 = vmul.f32 %v771, %v781
        %v790 = vmul.f32 %v764, %v780
        %v791 = vmul.f32 %v772, %v781
        %v792 = vmul.f32 %v765, %v780
        %v793 = vmul.f32 %v773, %v781
        %v794 = vmul.f32 %v766, %v780
        %v795 = vmul.f32 %v774, %v781
        %v796 = vmul.f32 %v767, %v780
        %v797 = vmul.f32 %v775, %v781
        %v798 = vmul.f32 %v768, %v780
        %v799 = vmul.f32 %v776, %v781
        %800 = vrot.lane.b32.xlu0 %v520, 126
        %v801 = vpop.permute.xlu0 %800
        %802 = vrot.lane.b32.xlu0 %v522, 126
        %v803 = vpop.permute.xlu0 %802
        %804 = vrot.lane.b32.xlu0 %v524, 126
        %v805 = vpop.permute.xlu0 %804
        %806 = vrot.lane.b32.xlu0 %v526, 126
        %v807 = vpop.permute.xlu0 %806
        %808 = vrot.lane.b32.xlu0 %v528, 126
        %v809 = vpop.permute.xlu0 %808
        %810 = vrot.lane.b32.xlu0 %v530, 126
        %v811 = vpop.permute.xlu0 %810
        %812 = vrot.lane.b32.xlu0 %v532, 126
        %v813 = vpop.permute.xlu0 %812
        %814 = vrot.lane.b32.xlu0 %v534, 126
        %v815 = vpop.permute.xlu0 %814
        %816 = vrot.lane.b32.xlu0 %v521, 126
        %v817 = vpop.permute.xlu0 %816
        %818 = vrot.lane.b32.xlu0 %v523, 126
        %v819 = vpop.permute.xlu0 %818
        %820 = vrot.lane.b32.xlu0 %v525, 126
        %v821 = vpop.permute.xlu0 %820
        %822 = vrot.lane.b32.xlu0 %v527, 126
        %v823 = vpop.permute.xlu0 %822
        %824 = vrot.lane.b32.xlu0 %v529, 126
        %v825 = vpop.permute.xlu0 %824
        %826 = vrot.lane.b32.xlu0 %v531, 126
        %v827 = vpop.permute.xlu0 %826
        %828 = vrot.lane.b32.xlu0 %v533, 126
        %v829 = vpop.permute.xlu0 %828
        %830 = vrot.lane.b32.xlu0 %v535, 126
        %v831 = vpop.permute.xlu0 %830
        %vm832 = vcmp.lt.s32.totalorder %v593, 126
        %v833 = vsel %vm832, %v801, %v817
        %v834 = vsel %vm832, %v803, %v819
        %v835 = vsel %vm832, %v805, %v821
        %v836 = vsel %vm832, %v807, %v823
        %v837 = vsel %vm832, %v809, %v825
        %v838 = vsel %vm832, %v811, %v827
        %v839 = vsel %vm832, %v813, %v829
        %v840 = vsel %vm832, %v815, %v831
        %v841 = vsel %vm832, %v817, %v801
        %v842 = vsel %vm832, %v819, %v803
        %v843 = vsel %vm832, %v821, %v805
        %v844 = vsel %vm832, %v823, %v807
        %v845 = vsel %vm832, %v825, %v809
        %v846 = vsel %vm832, %v827, %v811
        %v847 = vsel %vm832, %v829, %v813
        %v848 = vsel %vm832, %v831, %v815
        %s849 = scalar_lea.vmem %s2, 8
        %v850 = vld [vmem:[%s849] sm:$0x3]
        %v852 = vperm.slane %v850, 0
        %v853 = vperm.slane %v850, 1
        %v856 = vmul.f32 %v833, %v852
        %v857 = vmul.f32 %v841, %v853
        %v858 = vmul.f32 %v834, %v852
        %v859 = vmul.f32 %v842, %v853
        %v860 = vmul.f32 %v835, %v852
        %v861 = vmul.f32 %v843, %v853
        %v862 = vmul.f32 %v836, %v852
        %v863 = vmul.f32 %v844, %v853
        %v864 = vmul.f32 %v837, %v852
        %v865 = vmul.f32 %v845, %v853
        %v866 = vmul.f32 %v838, %v852
        %v867 = vmul.f32 %v846, %v853
        %v868 = vmul.f32 %v839, %v852
        %v869 = vmul.f32 %v847, %v853
        %v870 = vmul.f32 %v840, %v852
        %v871 = vmul.f32 %v848, %v853
        %v872 = vld [vmem:[%s5] sm:$0xff]
        %v873 = vld [vmem:[%s5 + $0x8] sm:$0xff]
        %v874 = vld [vmem:[%s5 + $0x10] sm:$0xff]
        %v875 = vld [vmem:[%s5 + $0x18] sm:$0xff]
        %v876 = vld [vmem:[%s5 + $0x20] sm:$0xff]
        %v877 = vld [vmem:[%s5 + $0x28] sm:$0xff]
        %v878 = vld [vmem:[%s5 + $0x30] sm:$0xff]
        %v879 = vld [vmem:[%s5 + $0x38] sm:$0xff]
        %881 = vset.pattern.permute.xlu0 0
        %882 = vperm.xlu0 %881, %v872
        %v883 = vpop.permute.xlu0 %882
        %886 = vset.pattern.permute.xlu0 0
        %887 = vperm.xlu0 %886, %v873
        %v888 = vpop.permute.xlu0 %887
        %891 = vset.pattern.permute.xlu0 0
        %892 = vperm.xlu0 %891, %v874
        %v893 = vpop.permute.xlu0 %892
        %896 = vset.pattern.permute.xlu0 0
        %897 = vperm.xlu0 %896, %v875
        %v898 = vpop.permute.xlu0 %897
        %901 = vset.pattern.permute.xlu0 0
        %902 = vperm.xlu0 %901, %v876
        %v903 = vpop.permute.xlu0 %902
        %906 = vset.pattern.permute.xlu0 0
        %907 = vperm.xlu0 %906, %v877
        %v908 = vpop.permute.xlu0 %907
        %911 = vset.pattern.permute.xlu0 0
        %912 = vperm.xlu0 %911, %v878
        %v913 = vpop.permute.xlu0 %912
        %916 = vset.pattern.permute.xlu0 0
        %917 = vperm.xlu0 %916, %v879
        %v918 = vpop.permute.xlu0 %917
        %vm920 = vcmask 523264
        %v922 = vsel %vm920, %v538, 0
        %v925 = vsel %vm920, %v541, 0
        %v928 = vsel %vm920, %v544, 0
        %v931 = vsel %vm920, %v547, 0
        %v934 = vsel %vm920, %v550, 0
        %v937 = vsel %vm920, %v553, 0
        %v940 = vsel %vm920, %v556, 0
        %v943 = vsel %vm920, %v559, 0
        %945 = vmatpush.msra.mxu0 %v703
        %946 = vmatpush.msra.mxu0 %v701
        %947 = vmatpush.msra.mxu0 %v699
        %948 = vmatpush.msra.mxu0 %v697
        %949 = vmatpush.msra.mxu0 %v695
        %950 = vmatpush.msra.mxu0 %v693
        %951 = vmatpush.msra.mxu0 %v691
        %952 = vmatpush.msra.mxu0 %v689
        %953 = vmatpush.msra.mxu0 %v631
        %954 = vmatpush.msra.mxu0 %v629
        %955 = vmatpush.msra.mxu0 %v627
        %956 = vmatpush.msra.mxu0 %v625
        %957 = vmatpush.msra.mxu0 %v623
        %958 = vmatpush.msra.mxu0 %v621
        %959 = vmatpush.msra.mxu0 %v619
        %960 = vmatpush.msra.mxu0 %v617
        %961 = vmatmul.f32.gmra.mxu0 %v536
        %v962 = vpop.f32.mrf.mxu0
        %v963 = vadd.f32 %v883, %v962
        %964 = vmatmul.f32.gmra.mxu0 %v539
        %v965 = vpop.f32.mrf.mxu0
        %v966 = vadd.f32 %v888, %v965
        %967 = vmatmul.f32.gmra.mxu0 %v542
        %v968 = vpop.f32.mrf.mxu0
        %v969 = vadd.f32 %v893, %v968
        %970 = vmatmul.f32.gmra.mxu0 %v545
        %v971 = vpop.f32.mrf.mxu0
        %v972 = vadd.f32 %v898, %v971
        %973 = vmatmul.f32.gmra.mxu0 %v548
        %v974 = vpop.f32.mrf.mxu0
        %v975 = vadd.f32 %v903, %v974
        %976 = vmatmul.f32.gmra.mxu0 %v551
        %v977 = vpop.f32.mrf.mxu0
        %v978 = vadd.f32 %v908, %v977
        %979 = vmatmul.f32.gmra.mxu0 %v554
        %v980 = vpop.f32.mrf.mxu0
        %v981 = vadd.f32 %v913, %v980
        %982 = vmatmul.f32.gmra.mxu0 %v557
        %v983 = vpop.f32.mrf.mxu0
        %v984 = vadd.f32 %v918, %v983
        %985 = vdwg.mxu0
        %986 = vmatpush.msra.mxu0 %v798
        %987 = vmatpush.msra.mxu0 %v796
        %988 = vmatpush.msra.mxu0 %v794
        %989 = vmatpush.msra.mxu0 %v792
        %990 = vmatpush.msra.mxu0 %v790
        %991 = vmatpush.msra.mxu0 %v788
        %992 = vmatpush.msra.mxu0 %v786
        %993 = vmatpush.msra.mxu0 %v784
        %994 = vmatpush.msra.mxu0 %v726
        %995 = vmatpush.msra.mxu0 %v724
        %996 = vmatpush.msra.mxu0 %v722
        %997 = vmatpush.msra.mxu0 %v720
        %998 = vmatpush.msra.mxu0 %v718
        %999 = vmatpush.msra.mxu0 %v716
        %1000 = vmatpush.msra.mxu0 %v714
        %1001 = vmatpush.msra.mxu0 %v712
        %1002 = vmatmul.f32.gmra.mxu0 %v537
        %v1003 = vpop.f32.mrf.mxu0
        %v1004 = vadd.f32 %v963, %v1003
        %1005 = vmatmul.f32.gmra.mxu0 %v540
        %v1006 = vpop.f32.mrf.mxu0
        %v1007 = vadd.f32 %v966, %v1006
        %1008 = vmatmul.f32.gmra.mxu0 %v543
        %v1009 = vpop.f32.mrf.mxu0
        %v1010 = vadd.f32 %v969, %v1009
        %1011 = vmatmul.f32.gmra.mxu0 %v546
        %v1012 = vpop.f32.mrf.mxu0
        %v1013 = vadd.f32 %v972, %v1012
        %1014 = vmatmul.f32.gmra.mxu0 %v549
        %v1015 = vpop.f32.mrf.mxu0
        %v1016 = vadd.f32 %v975, %v1015
        %1017 = vmatmul.f32.gmra.mxu0 %v552
        %v1018 = vpop.f32.mrf.mxu0
        %v1019 = vadd.f32 %v978, %v1018
        %1020 = vmatmul.f32.gmra.mxu0 %v555
        %v1021 = vpop.f32.mrf.mxu0
        %v1022 = vadd.f32 %v981, %v1021
        %1023 = vmatmul.f32.gmra.mxu0 %v558
        %v1024 = vpop.f32.mrf.mxu0
        %v1025 = vadd.f32 %v984, %v1024
        %1026 = vdwg.mxu0
        %1027 = vmatpush.msra.mxu0 0.0
        %1028 = vmatpush.msra.mxu0 0.0
        %1029 = vmatpush.msra.mxu0 0.0
        %1030 = vmatpush.msra.mxu0 0.0
        %1031 = vmatpush.msra.mxu0 0.0
        %1032 = vmatpush.msra.mxu0 0.0
        %1033 = vmatpush.msra.mxu0 0.0
        %1034 = vmatpush.msra.mxu0 0.0
        %1035 = vmatpush.msra.mxu0 %v870
        %1036 = vmatpush.msra.mxu0 %v868
        %1037 = vmatpush.msra.mxu0 %v866
        %1038 = vmatpush.msra.mxu0 %v864
        %1039 = vmatpush.msra.mxu0 %v862
        %1040 = vmatpush.msra.mxu0 %v860
        %1041 = vmatpush.msra.mxu0 %v858
        %1042 = vmatpush.msra.mxu0 %v856
        %1043 = vmatmul.f32.gmra.mxu0 %v922
        %v1044 = vpop.f32.mrf.mxu0
        %v1045 = vadd.f32 %v1004, %v1044
        %1046 = vmatmul.f32.gmra.mxu0 %v925
        %v1047 = vpop.f32.mrf.mxu0
        %v1048 = vadd.f32 %v1007, %v1047
        %1049 = vmatmul.f32.gmra.mxu0 %v928
        %v1050 = vpop.f32.mrf.mxu0
        %v1051 = vadd.f32 %v1010, %v1050
        %1052 = vmatmul.f32.gmra.mxu0 %v931
        %v1053 = vpop.f32.mrf.mxu0
        %v1054 = vadd.f32 %v1013, %v1053
        %1055 = vmatmul.f32.gmra.mxu0 %v934
        %v1056 = vpop.f32.mrf.mxu0
        %v1057 = vadd.f32 %v1016, %v1056
        %1058 = vmatmul.f32.gmra.mxu0 %v937
        %v1059 = vpop.f32.mrf.mxu0
        %v1060 = vadd.f32 %v1019, %v1059
        %1061 = vmatmul.f32.gmra.mxu0 %v940
        %v1062 = vpop.f32.mrf.mxu0
        %v1063 = vadd.f32 %v1022, %v1062
        %1064 = vmatmul.f32.gmra.mxu0 %v943
        %v1065 = vpop.f32.mrf.mxu0
        %v1066 = vadd.f32 %v1025, %v1065
        %1067 = vdwg.mxu0
        %1068 = vmatpush.msra.mxu0 %v704
        %1069 = vmatpush.msra.mxu0 %v702
        %1070 = vmatpush.msra.mxu0 %v700
        %1071 = vmatpush.msra.mxu0 %v698
        %1072 = vmatpush.msra.mxu0 %v696
        %1073 = vmatpush.msra.mxu0 %v694
        %1074 = vmatpush.msra.mxu0 %v692
        %1075 = vmatpush.msra.mxu0 %v690
        %1076 = vmatpush.msra.mxu0 %v632
        %1077 = vmatpush.msra.mxu0 %v630
        %1078 = vmatpush.msra.mxu0 %v628
        %1079 = vmatpush.msra.mxu0 %v626
        %1080 = vmatpush.msra.mxu0 %v624
        %1081 = vmatpush.msra.mxu0 %v622
        %1082 = vmatpush.msra.mxu0 %v620
        %1083 = vmatpush.msra.mxu0 %v618
        %1084 = vmatmul.f32.gmra.mxu0 %v536
        %v1085 = vpop.f32.mrf.mxu0
        %v1086 = vadd.f32 %v883, %v1085
        %1087 = vmatmul.f32.gmra.mxu0 %v539
        %v1088 = vpop.f32.mrf.mxu0
        %v1089 = vadd.f32 %v888, %v1088
        %1090 = vmatmul.f32.gmra.mxu0 %v542
        %v1091 = vpop.f32.mrf.mxu0
        %v1092 = vadd.f32 %v893, %v1091
        %1093 = vmatmul.f32.gmra.mxu0 %v545
        %v1094 = vpop.f32.mrf.mxu0
        %v1095 = vadd.f32 %v898, %v1094
        %1096 = vmatmul.f32.gmra.mxu0 %v548
        %v1097 = vpop.f32.mrf.mxu0
        %v1098 = vadd.f32 %v903, %v1097
        %1099 = vmatmul.f32.gmra.mxu0 %v551
        %v1100 = vpop.f32.mrf.mxu0
        %v1101 = vadd.f32 %v908, %v1100
        %1102 = vmatmul.f32.gmra.mxu0 %v554
        %v1103 = vpop.f32.mrf.mxu0
        %v1104 = vadd.f32 %v913, %v1103
        %1105 = vmatmul.f32.gmra.mxu0 %v557
        %v1106 = vpop.f32.mrf.mxu0
        %v1107 = vadd.f32 %v918, %v1106
        %1108 = vdwg.mxu0
        %1109 = vmatpush.msra.mxu0 %v799
        %1110 = vmatpush.msra.mxu0 %v797
        %1111 = vmatpush.msra.mxu0 %v795
        %1112 = vmatpush.msra.mxu0 %v793
        %1113 = vmatpush.msra.mxu0 %v791
        %1114 = vmatpush.msra.mxu0 %v789
        %1115 = vmatpush.msra.mxu0 %v787
        %1116 = vmatpush.msra.mxu0 %v785
        %1117 = vmatpush.msra.mxu0 %v727
        %1118 = vmatpush.msra.mxu0 %v725
        %1119 = vmatpush.msra.mxu0 %v723
        %1120 = vmatpush.msra.mxu0 %v721
        %1121 = vmatpush.msra.mxu0 %v719
        %1122 = vmatpush.msra.mxu0 %v717
        %1123 = vmatpush.msra.mxu0 %v715
        %1124 = vmatpush.msra.mxu0 %v713
        %1125 = vmatmul.f32.gmra.mxu0 %v537
        %v1126 = vpop.f32.mrf.mxu0
        %v1127 = vadd.f32 %v1086, %v1126
        %1128 = vmatmul.f32.gmra.mxu0 %v540
        %v1129 = vpop.f32.mrf.mxu0
        %v1130 = vadd.f32 %v1089, %v1129
        %1131 = vmatmul.f32.gmra.mxu0 %v543
        %v1132 = vpop.f32.mrf.mxu0
        %v1133 = vadd.f32 %v1092, %v1132
        %1134 = vmatmul.f32.gmra.mxu0 %v546
        %v1135 = vpop.f32.mrf.mxu0
        %v1136 = vadd.f32 %v1095, %v1135
        %1137 = vmatmul.f32.gmra.mxu0 %v549
        %v1138 = vpop.f32.mrf.mxu0
        %v1139 = vadd.f32 %v1098, %v1138
        %1140 = vmatmul.f32.gmra.mxu0 %v552
        %v1141 = vpop.f32.mrf.mxu0
        %v1142 = vadd.f32 %v1101, %v1141
        %1143 = vmatmul.f32.gmra.mxu0 %v555
        %v1144 = vpop.f32.mrf.mxu0
        %v1145 = vadd.f32 %v1104, %v1144
        %1146 = vmatmul.f32.gmra.mxu0 %v558
        %v1147 = vpop.f32.mrf.mxu0
        %v1148 = vadd.f32 %v1107, %v1147
        %1149 = vdwg.mxu0
        %1150 = vmatpush.msra.mxu0 0.0
        %1151 = vmatpush.msra.mxu0 0.0
        %1152 = vmatpush.msra.mxu0 0.0
        %1153 = vmatpush.msra.mxu0 0.0
        %1154 = vmatpush.msra.mxu0 0.0
        %1155 = vmatpush.msra.mxu0 0.0
        %1156 = vmatpush.msra.mxu0 0.0
        %1157 = vmatpush.msra.mxu0 0.0
        %1158 = vmatpush.msra.mxu0 %v871
        %1159 = vmatpush.msra.mxu0 %v869
        %1160 = vmatpush.msra.mxu0 %v867
        %1161 = vmatpush.msra.mxu0 %v865
        %1162 = vmatpush.msra.mxu0 %v863
        %1163 = vmatpush.msra.mxu0 %v861
        %1164 = vmatpush.msra.mxu0 %v859
        %1165 = vmatpush.msra.mxu0 %v857
        %1166 = vmatmul.f32.gmra.mxu0 %v922
        %v1167 = vpop.f32.mrf.mxu0
        %v1168 = vadd.f32 %v1127, %v1167
        %1169 = vmatmul.f32.gmra.mxu0 %v925
        %v1170 = vpop.f32.mrf.mxu0
        %v1171 = vadd.f32 %v1130, %v1170
        %1172 = vmatmul.f32.gmra.mxu0 %v928
        %v1173 = vpop.f32.mrf.mxu0
        %v1174 = vadd.f32 %v1133, %v1173
        %1175 = vmatmul.f32.gmra.mxu0 %v931
        %v1176 = vpop.f32.mrf.mxu0
        %v1177 = vadd.f32 %v1136, %v1176
        %1178 = vmatmul.f32.gmra.mxu0 %v934
        %v1179 = vpop.f32.mrf.mxu0
        %v1180 = vadd.f32 %v1139, %v1179
        %1181 = vmatmul.f32.gmra.mxu0 %v937
        %v1182 = vpop.f32.mrf.mxu0
        %v1183 = vadd.f32 %v1142, %v1182
        %1184 = vmatmul.f32.gmra.mxu0 %v940
        %v1185 = vpop.f32.mrf.mxu0
        %v1186 = vadd.f32 %v1145, %v1185
        %1187 = vmatmul.f32.gmra.mxu0 %v943
        %v1188 = vpop.f32.mrf.mxu0
        %v1189 = vadd.f32 %v1148, %v1188
        %1190 = vdwg.mxu0
        %v1191 = vsub.f32 0.0, %v1045
        %v1192 = vsub.f32 0.0, %v1168
        %v1193 = vsub.f32 0.0, %v1048
        %v1194 = vsub.f32 0.0, %v1171
        %v1195 = vsub.f32 0.0, %v1051
        %v1196 = vsub.f32 0.0, %v1174
        %v1197 = vsub.f32 0.0, %v1054
        %v1198 = vsub.f32 0.0, %v1177
        %v1199 = vsub.f32 0.0, %v1057
        %v1200 = vsub.f32 0.0, %v1180
        %v1201 = vsub.f32 0.0, %v1060
        %v1202 = vsub.f32 0.0, %v1183
        %v1203 = vsub.f32 0.0, %v1063
        %v1204 = vsub.f32 0.0, %v1186
        %v1205 = vsub.f32 0.0, %v1066
        %v1206 = vsub.f32 0.0, %v1189
        %v1207 = vmul.f32 %v1191, 1.442695
        %v1208 = vpow.pop %v1207
        %v1209 = vmul.f32 %v1192, 1.442695
        %v1210 = vpow.pop %v1209
        %v1211 = vmul.f32 %v1193, 1.442695
        %v1212 = vpow.pop %v1211
        %v1213 = vmul.f32 %v1194, 1.442695
        %v1214 = vpow.pop %v1213
        %v1215 = vmul.f32 %v1195, 1.442695
        %v1216 = vpow.pop %v1215
        %v1217 = vmul.f32 %v1196, 1.442695
        %v1218 = vpow.pop %v1217
        %v1219 = vmul.f32 %v1197, 1.442695
        %v1220 = vpow.pop %v1219
        %v1221 = vmul.f32 %v1198, 1.442695
        %v1222 = vpow.pop %v1221
        %v1223 = vmul.f32 %v1199, 1.442695
        %v1224 = vpow.pop %v1223
        %v1225 = vmul.f32 %v1200, 1.442695
        %v1226 = vpow.pop %v1225
        %v1227 = vmul.f32 %v1201, 1.442695
        %v1228 = vpow.pop %v1227
        %v1229 = vmul.f32 %v1202, 1.442695
        %v1230 = vpow.pop %v1229
        %v1231 = vmul.f32 %v1203, 1.442695
        %v1232 = vpow.pop %v1231
        %v1233 = vmul.f32 %v1204, 1.442695
        %v1234 = vpow.pop %v1233
        %v1235 = vmul.f32 %v1205, 1.442695
        %v1236 = vpow.pop %v1235
        %v1237 = vmul.f32 %v1206, 1.442695
        %v1238 = vpow.pop %v1237
        %v1239 = vadd.f32 %v1208, 1.0
        %v1240 = vadd.f32 %v1210, 1.0
        %v1241 = vadd.f32 %v1212, 1.0
        %v1242 = vadd.f32 %v1214, 1.0
        %v1243 = vadd.f32 %v1216, 1.0
        %v1244 = vadd.f32 %v1218, 1.0
        %v1245 = vadd.f32 %v1220, 1.0
        %v1246 = vadd.f32 %v1222, 1.0
        %v1247 = vadd.f32 %v1224, 1.0
        %v1248 = vadd.f32 %v1226, 1.0
        %v1249 = vadd.f32 %v1228, 1.0
        %v1250 = vadd.f32 %v1230, 1.0
        %v1251 = vadd.f32 %v1232, 1.0
        %v1252 = vadd.f32 %v1234, 1.0
        %v1253 = vadd.f32 %v1236, 1.0
        %v1254 = vadd.f32 %v1238, 1.0
        %v1255 = vrcp.pop %v1239
        %v1256 = vmul.f32 %v1239, %v1255
        %v1257 = vsub.f32 1.0, %v1256
        %v1258 = vmul.f32 %v1255, %v1257
        %v1259 = vadd.f32 %v1255, %v1258
        %vm1260 = vweird.f32 %v1239
        %vm1261 = vweird.f32 %v1255
        %vm1262 = vmor %vm1260, %vm1261
        %v1263 = vsel %vm1262, %v1255, %v1259
        %v1264 = vand.u32 2147483647, %v1239
        %vm1265 = vcmp.eq.f32.partialorder %v1264, 8.507059e+37
        %v1266 = vand.u32 %v1239, 2147483648
        %v1267 = vor.u32 1.1754944e-38, %v1266
        %v1268 = vsel %vm1265, %v1267, %v1263
        %v1269 = vmul.f32 1.0, %v1268
        %v1270 = vrcp.pop %v1240
        %v1271 = vmul.f32 %v1240, %v1270
        %v1272 = vsub.f32 1.0, %v1271
        %v1273 = vmul.f32 %v1270, %v1272
        %v1274 = vadd.f32 %v1270, %v1273
        %vm1275 = vweird.f32 %v1240
        %vm1276 = vweird.f32 %v1270
        %vm1277 = vmor %vm1275, %vm1276
        %v1278 = vsel %vm1277, %v1270, %v1274
        %v1279 = vand.u32 2147483647, %v1240
        %vm1280 = vcmp.eq.f32.partialorder %v1279, 8.507059e+37
        %v1281 = vand.u32 %v1240, 2147483648
        %v1282 = vor.u32 1.1754944e-38, %v1281
        %v1283 = vsel %vm1280, %v1282, %v1278
        %v1284 = vmul.f32 1.0, %v1283
        %v1285 = vrcp.pop %v1241
        %v1286 = vmul.f32 %v1241, %v1285
        %v1287 = vsub.f32 1.0, %v1286
        %v1288 = vmul.f32 %v1285, %v1287
        %v1289 = vadd.f32 %v1285, %v1288
        %vm1290 = vweird.f32 %v1241
        %vm1291 = vweird.f32 %v1285
        %vm1292 = vmor %vm1290, %vm1291
        %v1293 = vsel %vm1292, %v1285, %v1289
        %v1294 = vand.u32 2147483647, %v1241
        %vm1295 = vcmp.eq.f32.partialorder %v1294, 8.507059e+37
        %v1296 = vand.u32 %v1241, 2147483648
        %v1297 = vor.u32 1.1754944e-38, %v1296
        %v1298 = vsel %vm1295, %v1297, %v1293
        %v1299 = vmul.f32 1.0, %v1298
        %v1300 = vrcp.pop %v1242
        %v1301 = vmul.f32 %v1242, %v1300
        %v1302 = vsub.f32 1.0, %v1301
        %v1303 = vmul.f32 %v1300, %v1302
        %v1304 = vadd.f32 %v1300, %v1303
        %vm1305 = vweird.f32 %v1242
        %vm1306 = vweird.f32 %v1300
        %vm1307 = vmor %vm1305, %vm1306
        %v1308 = vsel %vm1307, %v1300, %v1304
        %v1309 = vand.u32 2147483647, %v1242
        %vm1310 = vcmp.eq.f32.partialorder %v1309, 8.507059e+37
        %v1311 = vand.u32 %v1242, 2147483648
        %v1312 = vor.u32 1.1754944e-38, %v1311
        %v1313 = vsel %vm1310, %v1312, %v1308
        %v1314 = vmul.f32 1.0, %v1313
        %v1315 = vrcp.pop %v1243
        %v1316 = vmul.f32 %v1243, %v1315
        %v1317 = vsub.f32 1.0, %v1316
        %v1318 = vmul.f32 %v1315, %v1317
        %v1319 = vadd.f32 %v1315, %v1318
        %vm1320 = vweird.f32 %v1243
        %vm1321 = vweird.f32 %v1315
        %vm1322 = vmor %vm1320, %vm1321
        %v1323 = vsel %vm1322, %v1315, %v1319
        %v1324 = vand.u32 2147483647, %v1243
        %vm1325 = vcmp.eq.f32.partialorder %v1324, 8.507059e+37
        %v1326 = vand.u32 %v1243, 2147483648
        %v1327 = vor.u32 1.1754944e-38, %v1326
        %v1328 = vsel %vm1325, %v1327, %v1323
        %v1329 = vmul.f32 1.0, %v1328
        %v1330 = vrcp.pop %v1244
        %v1331 = vmul.f32 %v1244, %v1330
        %v1332 = vsub.f32 1.0, %v1331
        %v1333 = vmul.f32 %v1330, %v1332
        %v1334 = vadd.f32 %v1330, %v1333
        %vm1335 = vweird.f32 %v1244
        %vm1336 = vweird.f32 %v1330
        %vm1337 = vmor %vm1335, %vm1336
        %v1338 = vsel %vm1337, %v1330, %v1334
        %v1339 = vand.u32 2147483647, %v1244
        %vm1340 = vcmp.eq.f32.partialorder %v1339, 8.507059e+37
        %v1341 = vand.u32 %v1244, 2147483648
        %v1342 = vor.u32 1.1754944e-38, %v1341
        %v1343 = vsel %vm1340, %v1342, %v1338
        %v1344 = vmul.f32 1.0, %v1343
        %v1345 = vrcp.pop %v1245
        %v1346 = vmul.f32 %v1245, %v1345
        %v1347 = vsub.f32 1.0, %v1346
        %v1348 = vmul.f32 %v1345, %v1347
        %v1349 = vadd.f32 %v1345, %v1348
        %vm1350 = vweird.f32 %v1245
        %vm1351 = vweird.f32 %v1345
        %vm1352 = vmor %vm1350, %vm1351
        %v1353 = vsel %vm1352, %v1345, %v1349
        %v1354 = vand.u32 2147483647, %v1245
        %vm1355 = vcmp.eq.f32.partialorder %v1354, 8.507059e+37
        %v1356 = vand.u32 %v1245, 2147483648
        %v1357 = vor.u32 1.1754944e-38, %v1356
        %v1358 = vsel %vm1355, %v1357, %v1353
        %v1359 = vmul.f32 1.0, %v1358
        %v1360 = vrcp.pop %v1246
        %v1361 = vmul.f32 %v1246, %v1360
        %v1362 = vsub.f32 1.0, %v1361
        %v1363 = vmul.f32 %v1360, %v1362
        %v1364 = vadd.f32 %v1360, %v1363
        %vm1365 = vweird.f32 %v1246
        %vm1366 = vweird.f32 %v1360
        %vm1367 = vmor %vm1365, %vm1366
        %v1368 = vsel %vm1367, %v1360, %v1364
        %v1369 = vand.u32 2147483647, %v1246
        %vm1370 = vcmp.eq.f32.partialorder %v1369, 8.507059e+37
        %v1371 = vand.u32 %v1246, 2147483648
        %v1372 = vor.u32 1.1754944e-38, %v1371
        %v1373 = vsel %vm1370, %v1372, %v1368
        %v1374 = vmul.f32 1.0, %v1373
        %v1375 = vrcp.pop %v1247
        %v1376 = vmul.f32 %v1247, %v1375
        %v1377 = vsub.f32 1.0, %v1376
        %v1378 = vmul.f32 %v1375, %v1377
        %v1379 = vadd.f32 %v1375, %v1378
        %vm1380 = vweird.f32 %v1247
        %vm1381 = vweird.f32 %v1375
        %vm1382 = vmor %vm1380, %vm1381
        %v1383 = vsel %vm1382, %v1375, %v1379
        %v1384 = vand.u32 2147483647, %v1247
        %vm1385 = vcmp.eq.f32.partialorder %v1384, 8.507059e+37
        %v1386 = vand.u32 %v1247, 2147483648
        %v1387 = vor.u32 1.1754944e-38, %v1386
        %v1388 = vsel %vm1385, %v1387, %v1383
        %v1389 = vmul.f32 1.0, %v1388
        %v1390 = vrcp.pop %v1248
        %v1391 = vmul.f32 %v1248, %v1390
        %v1392 = vsub.f32 1.0, %v1391
        %v1393 = vmul.f32 %v1390, %v1392
        %v1394 = vadd.f32 %v1390, %v1393
        %vm1395 = vweird.f32 %v1248
        %vm1396 = vweird.f32 %v1390
        %vm1397 = vmor %vm1395, %vm1396
        %v1398 = vsel %vm1397, %v1390, %v1394
        %v1399 = vand.u32 2147483647, %v1248
        %vm1400 = vcmp.eq.f32.partialorder %v1399, 8.507059e+37
        %v1401 = vand.u32 %v1248, 2147483648
        %v1402 = vor.u32 1.1754944e-38, %v1401
        %v1403 = vsel %vm1400, %v1402, %v1398
        %v1404 = vmul.f32 1.0, %v1403
        %v1405 = vrcp.pop %v1249
        %v1406 = vmul.f32 %v1249, %v1405
        %v1407 = vsub.f32 1.0, %v1406
        %v1408 = vmul.f32 %v1405, %v1407
        %v1409 = vadd.f32 %v1405, %v1408
        %vm1410 = vweird.f32 %v1249
        %vm1411 = vweird.f32 %v1405
        %vm1412 = vmor %vm1410, %vm1411
        %v1413 = vsel %vm1412, %v1405, %v1409
        %v1414 = vand.u32 2147483647, %v1249
        %vm1415 = vcmp.eq.f32.partialorder %v1414, 8.507059e+37
        %v1416 = vand.u32 %v1249, 2147483648
        %v1417 = vor.u32 1.1754944e-38, %v1416
        %v1418 = vsel %vm1415, %v1417, %v1413
        %v1419 = vmul.f32 1.0, %v1418
        %v1420 = vrcp.pop %v1250
        %v1421 = vmul.f32 %v1250, %v1420
        %v1422 = vsub.f32 1.0, %v1421
        %v1423 = vmul.f32 %v1420, %v1422
        %v1424 = vadd.f32 %v1420, %v1423
        %vm1425 = vweird.f32 %v1250
        %vm1426 = vweird.f32 %v1420
        %vm1427 = vmor %vm1425, %vm1426
        %v1428 = vsel %vm1427, %v1420, %v1424
        %v1429 = vand.u32 2147483647, %v1250
        %vm1430 = vcmp.eq.f32.partialorder %v1429, 8.507059e+37
        %v1431 = vand.u32 %v1250, 2147483648
        %v1432 = vor.u32 1.1754944e-38, %v1431
        %v1433 = vsel %vm1430, %v1432, %v1428
        %v1434 = vmul.f32 1.0, %v1433
        %v1435 = vrcp.pop %v1251
        %v1436 = vmul.f32 %v1251, %v1435
        %v1437 = vsub.f32 1.0, %v1436
        %v1438 = vmul.f32 %v1435, %v1437
        %v1439 = vadd.f32 %v1435, %v1438
        %vm1440 = vweird.f32 %v1251
        %vm1441 = vweird.f32 %v1435
        %vm1442 = vmor %vm1440, %vm1441
        %v1443 = vsel %vm1442, %v1435, %v1439
        %v1444 = vand.u32 2147483647, %v1251
        %vm1445 = vcmp.eq.f32.partialorder %v1444, 8.507059e+37
        %v1446 = vand.u32 %v1251, 2147483648
        %v1447 = vor.u32 1.1754944e-38, %v1446
        %v1448 = vsel %vm1445, %v1447, %v1443
        %v1449 = vmul.f32 1.0, %v1448
        %v1450 = vrcp.pop %v1252
        %v1451 = vmul.f32 %v1252, %v1450
        %v1452 = vsub.f32 1.0, %v1451
        %v1453 = vmul.f32 %v1450, %v1452
        %v1454 = vadd.f32 %v1450, %v1453
        %vm1455 = vweird.f32 %v1252
        %vm1456 = vweird.f32 %v1450
        %vm1457 = vmor %vm1455, %vm1456
        %v1458 = vsel %vm1457, %v1450, %v1454
        %v1459 = vand.u32 2147483647, %v1252
        %vm1460 = vcmp.eq.f32.partialorder %v1459, 8.507059e+37
        %v1461 = vand.u32 %v1252, 2147483648
        %v1462 = vor.u32 1.1754944e-38, %v1461
        %v1463 = vsel %vm1460, %v1462, %v1458
        %v1464 = vmul.f32 1.0, %v1463
        %v1465 = vrcp.pop %v1253
        %v1466 = vmul.f32 %v1253, %v1465
        %v1467 = vsub.f32 1.0, %v1466
        %v1468 = vmul.f32 %v1465, %v1467
        %v1469 = vadd.f32 %v1465, %v1468
        %vm1470 = vweird.f32 %v1253
        %vm1471 = vweird.f32 %v1465
        %vm1472 = vmor %vm1470, %vm1471
        %v1473 = vsel %vm1472, %v1465, %v1469
        %v1474 = vand.u32 2147483647, %v1253
        %vm1475 = vcmp.eq.f32.partialorder %v1474, 8.507059e+37
        %v1476 = vand.u32 %v1253, 2147483648
        %v1477 = vor.u32 1.1754944e-38, %v1476
        %v1478 = vsel %vm1475, %v1477, %v1473
        %v1479 = vmul.f32 1.0, %v1478
        %v1480 = vrcp.pop %v1254
        %v1481 = vmul.f32 %v1254, %v1480
        %v1482 = vsub.f32 1.0, %v1481
        %v1483 = vmul.f32 %v1480, %v1482
        %v1484 = vadd.f32 %v1480, %v1483
        %vm1485 = vweird.f32 %v1254
        %vm1486 = vweird.f32 %v1480
        %vm1487 = vmor %vm1485, %vm1486
        %v1488 = vsel %vm1487, %v1480, %v1484
        %v1489 = vand.u32 2147483647, %v1254
        %vm1490 = vcmp.eq.f32.partialorder %v1489, 8.507059e+37
        %v1491 = vand.u32 %v1254, 2147483648
        %v1492 = vor.u32 1.1754944e-38, %v1491
        %v1493 = vsel %vm1490, %v1492, %v1488
        %v1494 = vmul.f32 1.0, %v1493
        %v1495 = vmul.f32 %v1389, %v520
        %v1496 = vmul.f32 %v1404, %v521
        %v1497 = vmul.f32 %v1419, %v522
        %v1498 = vmul.f32 %v1434, %v523
        %v1499 = vmul.f32 %v1449, %v524
        %v1500 = vmul.f32 %v1464, %v525
        %v1501 = vmul.f32 %v1479, %v526
        %v1502 = vmul.f32 %v1494, %v527
        %v1503 = vld [vmem:[#allocation7] sm:$0xff]
        %v1504 = vld [vmem:[#allocation7 + $0x8] sm:$0xff]
        %v1505 = vld [vmem:[#allocation7 + $0x10] sm:$0xff]
        %v1506 = vld [vmem:[#allocation7 + $0x18] sm:$0xff]
        %v1507 = vld [vmem:[#allocation7 + $0x20] sm:$0xff]
        %v1508 = vld [vmem:[#allocation7 + $0x28] sm:$0xff]
        %v1509 = vld [vmem:[#allocation7 + $0x30] sm:$0xff]
        %v1510 = vld [vmem:[#allocation7 + $0x38] sm:$0xff]
        %v1511 = vld [vmem:[#allocation7 + $0x40] sm:$0xff]
        %v1512 = vld [vmem:[#allocation7 + $0x48] sm:$0xff]
        %v1513 = vld [vmem:[#allocation7 + $0x50] sm:$0xff]
        %v1514 = vld [vmem:[#allocation7 + $0x58] sm:$0xff]
        %1515 = vrot.lane.b32.xlu0 %v1495, 2
        %v1516 = vpop.permute.xlu0 %1515
        %1517 = vrot.lane.b32.xlu0 %v1497, 2
        %v1518 = vpop.permute.xlu0 %1517
        %1519 = vrot.lane.b32.xlu0 %v1499, 2
        %v1520 = vpop.permute.xlu0 %1519
        %1521 = vrot.lane.b32.xlu0 %v1501, 2
        %v1522 = vpop.permute.xlu0 %1521
        %1523 = vrot.lane.b32.xlu0 %v1496, 2
        %v1524 = vpop.permute.xlu0 %1523
        %1525 = vrot.lane.b32.xlu0 %v1498, 2
        %v1526 = vpop.permute.xlu0 %1525
        %1527 = vrot.lane.b32.xlu0 %v1500, 2
        %v1528 = vpop.permute.xlu0 %1527
        %1529 = vrot.lane.b32.xlu0 %v1502, 2
        %v1530 = vpop.permute.xlu0 %1529
        %v1531 = vsel %vm594, %v1516, %v1524
        %v1532 = vsel %vm594, %v1518, %v1526
        %v1533 = vsel %vm594, %v1520, %v1528
        %v1534 = vsel %vm594, %v1522, %v1530
        %v1535 = vsel %vm594, %v1524, %v1516
        %v1536 = vsel %vm594, %v1526, %v1518
        %v1537 = vsel %vm594, %v1528, %v1520
        %v1538 = vsel %vm594, %v1530, %v1522
        %v1539 = vmul.f32 %v1535, %v613
        %v1540 = vmul.f32 %v1531, %v614
        %v1541 = vmul.f32 %v1536, %v613
        %v1542 = vmul.f32 %v1532, %v614
        %v1543 = vmul.f32 %v1537, %v613
        %v1544 = vmul.f32 %v1533, %v614
        %v1545 = vmul.f32 %v1538, %v613
        %v1546 = vmul.f32 %v1534, %v614
        %1547 = vrot.lane.b32.xlu0 %v1495, 1
        %v1548 = vpop.permute.xlu0 %1547
        %1549 = vrot.lane.b32.xlu0 %v1497, 1
        %v1550 = vpop.permute.xlu0 %1549
        %1551 = vrot.lane.b32.xlu0 %v1499, 1
        %v1552 = vpop.permute.xlu0 %1551
        %1553 = vrot.lane.b32.xlu0 %v1501, 1
        %v1554 = vpop.permute.xlu0 %1553
        %1555 = vrot.lane.b32.xlu0 %v1496, 1
        %v1556 = vpop.permute.xlu0 %1555
        %1557 = vrot.lane.b32.xlu0 %v1498, 1
        %v1558 = vpop.permute.xlu0 %1557
        %1559 = vrot.lane.b32.xlu0 %v1500, 1
        %v1560 = vpop.permute.xlu0 %1559
        %1561 = vrot.lane.b32.xlu0 %v1502, 1
        %v1562 = vpop.permute.xlu0 %1561
        %v1563 = vsel %vm665, %v1548, %v1556
        %v1564 = vsel %vm665, %v1550, %v1558
        %v1565 = vsel %vm665, %v1552, %v1560
        %v1566 = vsel %vm665, %v1554, %v1562
        %v1567 = vsel %vm665, %v1556, %v1548
        %v1568 = vsel %vm665, %v1558, %v1550
        %v1569 = vsel %vm665, %v1560, %v1552
        %v1570 = vsel %vm665, %v1562, %v1554
        %v1571 = vmul.f32 %v1567, %v685
        %v1572 = vmul.f32 %v1563, %v686
        %v1573 = vmul.f32 %v1568, %v685
        %v1574 = vmul.f32 %v1564, %v686
        %v1575 = vmul.f32 %v1569, %v685
        %v1576 = vmul.f32 %v1565, %v686
        %v1577 = vmul.f32 %v1570, %v685
        %v1578 = vmul.f32 %v1566, %v686
        %v1579 = vmul.f32 %v1495, %v708
        %v1580 = vmul.f32 %v1496, %v709
        %v1581 = vmul.f32 %v1497, %v708
        %v1582 = vmul.f32 %v1498, %v709
        %v1583 = vmul.f32 %v1499, %v708
        %v1584 = vmul.f32 %v1500, %v709
        %v1585 = vmul.f32 %v1501, %v708
        %v1586 = vmul.f32 %v1502, %v709
        %1587 = vrot.lane.b32.xlu0 %v1495, 127
        %v1588 = vpop.permute.xlu0 %1587
        %1589 = vrot.lane.b32.xlu0 %v1497, 127
        %v1590 = vpop.permute.xlu0 %1589
        %1591 = vrot.lane.b32.xlu0 %v1499, 127
        %v1592 = vpop.permute.xlu0 %1591
        %1593 = vrot.lane.b32.xlu0 %v1501, 127
        %v1594 = vpop.permute.xlu0 %1593
        %1595 = vrot.lane.b32.xlu0 %v1496, 127
        %v1596 = vpop.permute.xlu0 %1595
        %1597 = vrot.lane.b32.xlu0 %v1498, 127
        %v1598 = vpop.permute.xlu0 %1597
        %1599 = vrot.lane.b32.xlu0 %v1500, 127
        %v1600 = vpop.permute.xlu0 %1599
        %1601 = vrot.lane.b32.xlu0 %v1502, 127
        %v1602 = vpop.permute.xlu0 %1601
        %v1603 = vsel %vm760, %v1588, %v1596
        %v1604 = vsel %vm760, %v1590, %v1598
        %v1605 = vsel %vm760, %v1592, %v1600
        %v1606 = vsel %vm760, %v1594, %v1602
        %v1607 = vsel %vm760, %v1596, %v1588
        %v1608 = vsel %vm760, %v1598, %v1590
        %v1609 = vsel %vm760, %v1600, %v1592
        %v1610 = vsel %vm760, %v1602, %v1594
        %v1611 = vmul.f32 %v1603, %v780
        %v1612 = vmul.f32 %v1607, %v781
        %v1613 = vmul.f32 %v1604, %v780
        %v1614 = vmul.f32 %v1608, %v781
        %v1615 = vmul.f32 %v1605, %v780
        %v1616 = vmul.f32 %v1609, %v781
        %v1617 = vmul.f32 %v1606, %v780
        %v1618 = vmul.f32 %v1610, %v781
        %1619 = vrot.lane.b32.xlu0 %v1495, 126
        %v1620 = vpop.permute.xlu0 %1619
        %1621 = vrot.lane.b32.xlu0 %v1497, 126
        %v1622 = vpop.permute.xlu0 %1621
        %1623 = vrot.lane.b32.xlu0 %v1499, 126
        %v1624 = vpop.permute.xlu0 %1623
        %1625 = vrot.lane.b32.xlu0 %v1501, 126
        %v1626 = vpop.permute.xlu0 %1625
        %1627 = vrot.lane.b32.xlu0 %v1496, 126
        %v1628 = vpop.permute.xlu0 %1627
        %1629 = vrot.lane.b32.xlu0 %v1498, 126
        %v1630 = vpop.permute.xlu0 %1629
        %1631 = vrot.lane.b32.xlu0 %v1500, 126
        %v1632 = vpop.permute.xlu0 %1631
        %1633 = vrot.lane.b32.xlu0 %v1502, 126
        %v1634 = vpop.permute.xlu0 %1633
        %v1635 = vsel %vm832, %v1620, %v1628
        %v1636 = vsel %vm832, %v1622, %v1630
        %v1637 = vsel %vm832, %v1624, %v1632
        %v1638 = vsel %vm832, %v1626, %v1634
        %v1639 = vsel %vm832, %v1628, %v1620
        %v1640 = vsel %vm832, %v1630, %v1622
        %v1641 = vsel %vm832, %v1632, %v1624
        %v1642 = vsel %vm832, %v1634, %v1626
        %v1643 = vmul.f32 %v1635, %v852
        %v1644 = vmul.f32 %v1639, %v853
        %v1645 = vmul.f32 %v1636, %v852
        %v1646 = vmul.f32 %v1640, %v853
        %v1647 = vmul.f32 %v1637, %v852
        %v1648 = vmul.f32 %v1641, %v853
        %v1649 = vmul.f32 %v1638, %v852
        %v1650 = vmul.f32 %v1642, %v853
        %v1651 = vld [vmem:[%s7] sm:$0xff]
        %v1652 = vld [vmem:[%s7 + $0x8] sm:$0xff]
        %v1653 = vld [vmem:[%s7 + $0x10] sm:$0xff]
        %v1654 = vld [vmem:[%s7 + $0x18] sm:$0xff]
        %1656 = vset.pattern.permute.xlu0 0
        %1657 = vperm.xlu0 %1656, %v1651
        %v1658 = vpop.permute.xlu0 %1657
        %1661 = vset.pattern.permute.xlu0 0
        %1662 = vperm.xlu0 %1661, %v1652
        %v1663 = vpop.permute.xlu0 %1662
        %1666 = vset.pattern.permute.xlu0 0
        %1667 = vperm.xlu0 %1666, %v1653
        %v1668 = vpop.permute.xlu0 %1667
        %1671 = vset.pattern.permute.xlu0 0
        %1672 = vperm.xlu0 %1671, %v1654
        %v1673 = vpop.permute.xlu0 %1672
        %v1676 = vsel %vm920, %v1505, 0
        %v1679 = vsel %vm920, %v1508, 0
        %v1682 = vsel %vm920, %v1511, 0
        %v1685 = vsel %vm920, %v1514, 0
        %1687 = vmatpush.msra.mxu0 %v703
        %1688 = vmatpush.msra.mxu0 %v701
        %1689 = vmatpush.msra.mxu0 %v699
        %1690 = vmatpush.msra.mxu0 %v697
        %1691 = vmatpush.msra.mxu0 %v1577
        %1692 = vmatpush.msra.mxu0 %v1575
        %1693 = vmatpush.msra.mxu0 %v1573
        %1694 = vmatpush.msra.mxu0 %v1571
        %1695 = vmatpush.msra.mxu0 %v631
        %1696 = vmatpush.msra.mxu0 %v629
        %1697 = vmatpush.msra.mxu0 %v627
        %1698 = vmatpush.msra.mxu0 %v625
        %1699 = vmatpush.msra.mxu0 %v1545
        %1700 = vmatpush.msra.mxu0 %v1543
        %1701 = vmatpush.msra.mxu0 %v1541
        %1702 = vmatpush.msra.mxu0 %v1539
        %1703 = vmatmul.f32.gmra.mxu0 %v1503
        %v1704 = vpop.f32.mrf.mxu0
        %v1705 = vadd.f32 %v1658, %v1704
        %1706 = vmatmul.f32.gmra.mxu0 %v1506
        %v1707 = vpop.f32.mrf.mxu0
        %v1708 = vadd.f32 %v1663, %v1707
        %1709 = vmatmul.f32.gmra.mxu0 %v1509
        %v1710 = vpop.f32.mrf.mxu0
        %v1711 = vadd.f32 %v1668, %v1710
        %1712 = vmatmul.f32.gmra.mxu0 %v1512
        %v1713 = vpop.f32.mrf.mxu0
        %v1714 = vadd.f32 %v1673, %v1713
        %1715 = vdwg.mxu0
        %1716 = vmatpush.msra.mxu0 %v798
        %1717 = vmatpush.msra.mxu0 %v796
        %1718 = vmatpush.msra.mxu0 %v794
        %1719 = vmatpush.msra.mxu0 %v792
        %1720 = vmatpush.msra.mxu0 %v1617
        %1721 = vmatpush.msra.mxu0 %v1615
        %1722 = vmatpush.msra.mxu0 %v1613
        %1723 = vmatpush.msra.mxu0 %v1611
        %1724 = vmatpush.msra.mxu0 %v726
        %1725 = vmatpush.msra.mxu0 %v724
        %1726 = vmatpush.msra.mxu0 %v722
        %1727 = vmatpush.msra.mxu0 %v720
        %1728 = vmatpush.msra.mxu0 %v1585
        %1729 = vmatpush.msra.mxu0 %v1583
        %1730 = vmatpush.msra.mxu0 %v1581
        %1731 = vmatpush.msra.mxu0 %v1579
        %1732 = vmatmul.f32.gmra.mxu0 %v1504
        %v1733 = vpop.f32.mrf.mxu0
        %v1734 = vadd.f32 %v1705, %v1733
        %1735 = vmatmul.f32.gmra.mxu0 %v1507
        %v1736 = vpop.f32.mrf.mxu0
        %v1737 = vadd.f32 %v1708, %v1736
        %1738 = vmatmul.f32.gmra.mxu0 %v1510
        %v1739 = vpop.f32.mrf.mxu0
        %v1740 = vadd.f32 %v1711, %v1739
        %1741 = vmatmul.f32.gmra.mxu0 %v1513
        %v1742 = vpop.f32.mrf.mxu0
        %v1743 = vadd.f32 %v1714, %v1742
        %1744 = vdwg.mxu0
        %1745 = vmatpush.msra.mxu0 0.0
        %1746 = vmatpush.msra.mxu0 0.0
        %1747 = vmatpush.msra.mxu0 0.0
        %1748 = vmatpush.msra.mxu0 0.0
        %1749 = vmatpush.msra.mxu0 0.0
        %1750 = vmatpush.msra.mxu0 0.0
        %1751 = vmatpush.msra.mxu0 0.0
        %1752 = vmatpush.msra.mxu0 0.0
        %1753 = vmatpush.msra.mxu0 %v870
        %1754 = vmatpush.msra.mxu0 %v868
        %1755 = vmatpush.msra.mxu0 %v866
        %1756 = vmatpush.msra.mxu0 %v864
        %1757 = vmatpush.msra.mxu0 %v1649
        %1758 = vmatpush.msra.mxu0 %v1647
        %1759 = vmatpush.msra.mxu0 %v1645
        %1760 = vmatpush.msra.mxu0 %v1643
        %1761 = vmatmul.f32.gmra.mxu0 %v1676
        %v1762 = vpop.f32.mrf.mxu0
        %v1763 = vadd.f32 %v1734, %v1762
        %1764 = vmatmul.f32.gmra.mxu0 %v1679
        %v1765 = vpop.f32.mrf.mxu0
        %v1766 = vadd.f32 %v1737, %v1765
        %1767 = vmatmul.f32.gmra.mxu0 %v1682
        %v1768 = vpop.f32.mrf.mxu0
        %v1769 = vadd.f32 %v1740, %v1768
        %1770 = vmatmul.f32.gmra.mxu0 %v1685
        %v1771 = vpop.f32.mrf.mxu0
        %v1772 = vadd.f32 %v1743, %v1771
        %1773 = vdwg.mxu0
        %1774 = vmatpush.msra.mxu0 %v704
        %1775 = vmatpush.msra.mxu0 %v702
        %1776 = vmatpush.msra.mxu0 %v700
        %1777 = vmatpush.msra.mxu0 %v698
        %1778 = vmatpush.msra.mxu0 %v1578
        %1779 = vmatpush.msra.mxu0 %v1576
        %1780 = vmatpush.msra.mxu0 %v1574
        %1781 = vmatpush.msra.mxu0 %v1572
        %1782 = vmatpush.msra.mxu0 %v632
        %1783 = vmatpush.msra.mxu0 %v630
        %1784 = vmatpush.msra.mxu0 %v628
        %1785 = vmatpush.msra.mxu0 %v626
        %1786 = vmatpush.msra.mxu0 %v1546
        %1787 = vmatpush.msra.mxu0 %v1544
        %1788 = vmatpush.msra.mxu0 %v1542
        %1789 = vmatpush.msra.mxu0 %v1540
        %1790 = vmatmul.f32.gmra.mxu0 %v1503
        %v1791 = vpop.f32.mrf.mxu0
        %v1792 = vadd.f32 %v1658, %v1791
        %1793 = vmatmul.f32.gmra.mxu0 %v1506
        %v1794 = vpop.f32.mrf.mxu0
        %v1795 = vadd.f32 %v1663, %v1794
        %1796 = vmatmul.f32.gmra.mxu0 %v1509
        %v1797 = vpop.f32.mrf.mxu0
        %v1798 = vadd.f32 %v1668, %v1797
        %1799 = vmatmul.f32.gmra.mxu0 %v1512
        %v1800 = vpop.f32.mrf.mxu0
        %v1801 = vadd.f32 %v1673, %v1800
        %1802 = vdwg.mxu0
        %1803 = vmatpush.msra.mxu0 %v799
        %1804 = vmatpush.msra.mxu0 %v797
        %1805 = vmatpush.msra.mxu0 %v795
        %1806 = vmatpush.msra.mxu0 %v793
        %1807 = vmatpush.msra.mxu0 %v1618
        %1808 = vmatpush.msra.mxu0 %v1616
        %1809 = vmatpush.msra.mxu0 %v1614
        %1810 = vmatpush.msra.mxu0 %v1612
        %1811 = vmatpush.msra.mxu0 %v727
        %1812 = vmatpush.msra.mxu0 %v725
        %1813 = vmatpush.msra.mxu0 %v723
        %1814 = vmatpush.msra.mxu0 %v721
        %1815 = vmatpush.msra.mxu0 %v1586
        %1816 = vmatpush.msra.mxu0 %v1584
        %1817 = vmatpush.msra.mxu0 %v1582
        %1818 = vmatpush.msra.mxu0 %v1580
        %1819 = vmatmul.f32.gmra.mxu0 %v1504
        %v1820 = vpop.f32.mrf.mxu0
        %v1821 = vadd.f32 %v1792, %v1820
        %1822 = vmatmul.f32.gmra.mxu0 %v1507
        %v1823 = vpop.f32.mrf.mxu0
        %v1824 = vadd.f32 %v1795, %v1823
        %1825 = vmatmul.f32.gmra.mxu0 %v1510
        %v1826 = vpop.f32.mrf.mxu0
        %v1827 = vadd.f32 %v1798, %v1826
        %1828 = vmatmul.f32.gmra.mxu0 %v1513
        %v1829 = vpop.f32.mrf.mxu0
        %v1830 = vadd.f32 %v1801, %v1829
        %1831 = vdwg.mxu0
        %1832 = vmatpush.msra.mxu0 0.0
        %1833 = vmatpush.msra.mxu0 0.0
        %1834 = vmatpush.msra.mxu0 0.0
        %1835 = vmatpush.msra.mxu0 0.0
        %1836 = vmatpush.msra.mxu0 0.0
        %1837 = vmatpush.msra.mxu0 0.0
        %1838 = vmatpush.msra.mxu0 0.0
        %1839 = vmatpush.msra.mxu0 0.0
        %1840 = vmatpush.msra.mxu0 %v871
        %1841 = vmatpush.msra.mxu0 %v869
        %1842 = vmatpush.msra.mxu0 %v867
        %1843 = vmatpush.msra.mxu0 %v865
        %1844 = vmatpush.msra.mxu0 %v1650
        %1845 = vmatpush.msra.mxu0 %v1648
        %1846 = vmatpush.msra.mxu0 %v1646
        %1847 = vmatpush.msra.mxu0 %v1644
        %1848 = vmatmul.f32.gmra.mxu0 %v1676
        %v1849 = vpop.f32.mrf.mxu0
        %v1850 = vadd.f32 %v1821, %v1849
        %1851 = vmatmul.f32.gmra.mxu0 %v1679
        %v1852 = vpop.f32.mrf.mxu0
        %v1853 = vadd.f32 %v1824, %v1852
        %1854 = vmatmul.f32.gmra.mxu0 %v1682
        %v1855 = vpop.f32.mrf.mxu0
        %v1856 = vadd.f32 %v1827, %v1855
        %1857 = vmatmul.f32.gmra.mxu0 %v1685
        %v1858 = vpop.f32.mrf.mxu0
        %v1859 = vadd.f32 %v1830, %v1858
        %1860 = vdwg.mxu0
        %v1861 = vtanh.pop %v1763
        %v1862 = vtanh.pop %v1850
        %v1863 = vtanh.pop %v1766
        %v1864 = vtanh.pop %v1853
        %v1865 = vtanh.pop %v1769
        %v1866 = vtanh.pop %v1856
        %v1867 = vtanh.pop %v1772
        %v1868 = vtanh.pop %v1859
        %v1869 = vsub.f32 1.0, %v1269
        %v1870 = vsub.f32 1.0, %v1284
        %v1871 = vsub.f32 1.0, %v1299
        %v1872 = vsub.f32 1.0, %v1314
        %v1873 = vsub.f32 1.0, %v1329
        %v1874 = vsub.f32 1.0, %v1344
        %v1875 = vsub.f32 1.0, %v1359
        %v1876 = vsub.f32 1.0, %v1374
        %v1877 = vmul.f32 %v1869, %v520
        %v1878 = vmul.f32 %v1870, %v521
        %v1879 = vmul.f32 %v1871, %v522
        %v1880 = vmul.f32 %v1872, %v523
        %v1881 = vmul.f32 %v1873, %v524
        %v1882 = vmul.f32 %v1874, %v525
        %v1883 = vmul.f32 %v1875, %v526
        %v1884 = vmul.f32 %v1876, %v527
        %v1885 = vmul.f32 %v1269, %v1861
        %v1886 = vmul.f32 %v1284, %v1862
        %v1887 = vmul.f32 %v1299, %v1863
        %v1888 = vmul.f32 %v1314, %v1864
        %v1889 = vmul.f32 %v1329, %v1865
        %v1890 = vmul.f32 %v1344, %v1866
        %v1891 = vmul.f32 %v1359, %v1867
        %v1892 = vmul.f32 %v1374, %v1868
        %v1893 = vadd.f32 %v1877, %v1885
        %v1894 = vadd.f32 %v1878, %v1886
        %v1895 = vadd.f32 %v1879, %v1887
        %v1896 = vadd.f32 %v1880, %v1888
        %v1897 = vadd.f32 %v1881, %v1889
        %v1898 = vadd.f32 %v1882, %v1890
        %v1899 = vadd.f32 %v1883, %v1891
        %v1900 = vadd.f32 %v1884, %v1892
        %v1901 = vld [vmem:[#allocation8] sm:$0xff]
        %v1902 = vld [vmem:[#allocation8 + $0x8] sm:$0xff]
        %v1903 = vld [vmem:[#allocation8 + $0x10] sm:$0xff]
        %v1904 = vld [vmem:[#allocation8 + $0x18] sm:$0xff]
        %v1905 = vld [vmem:[#allocation8 + $0x20] sm:$0xff]
        %v1906 = vld [vmem:[#allocation8 + $0x28] sm:$0xff]
        %v1907 = vld [vmem:[#allocation8 + $0x30] sm:$0xff]
        %v1908 = vld [vmem:[#allocation8 + $0x38] sm:$0xff]
        %v1909 = vld [vmem:[#allocation8 + $0x40] sm:$0xff]
        %v1910 = vld [vmem:[#allocation8 + $0x48] sm:$0xff]
        %v1911 = vld [vmem:[#allocation8 + $0x50] sm:$0xff]
        %v1912 = vld [vmem:[#allocation8 + $0x58] sm:$0xff]
        %v1913 = vld [vmem:[#allocation8 + $0x60] sm:$0xff]
        %v1914 = vld [vmem:[#allocation8 + $0x68] sm:$0xff]
        %v1915 = vld [vmem:[#allocation8 + $0x70] sm:$0xff]
        %v1916 = vld [vmem:[#allocation8 + $0x78] sm:$0xff]
        %v1917 = vld [vmem:[#allocation8 + $0x80] sm:$0xff]
        %v1918 = vld [vmem:[#allocation8 + $0x88] sm:$0xff]
        %v1919 = vld [vmem:[#allocation8 + $0x90] sm:$0xff]
        %v1920 = vld [vmem:[#allocation8 + $0x98] sm:$0xff]
        %v1921 = vld [vmem:[#allocation8 + $0xa0] sm:$0xff]
        %v1922 = vld [vmem:[#allocation8 + $0xa8] sm:$0xff]
        %v1923 = vld [vmem:[#allocation8 + $0xb0] sm:$0xff]
        %v1924 = vld [vmem:[#allocation8 + $0xb8] sm:$0xff]
        %1925 = vrot.lane.b32.xlu0 %v1893, 32
        %v1926 = vpop.permute.xlu0 %1925
        %1927 = vrot.lane.b32.xlu0 %v1895, 32
        %v1928 = vpop.permute.xlu0 %1927
        %1929 = vrot.lane.b32.xlu0 %v1897, 32
        %v1930 = vpop.permute.xlu0 %1929
        %1931 = vrot.lane.b32.xlu0 %v1899, 32
        %v1932 = vpop.permute.xlu0 %1931
        %1933 = vrot.lane.b32.xlu0 %v528, 32
        %v1934 = vpop.permute.xlu0 %1933
        %1935 = vrot.lane.b32.xlu0 %v530, 32
        %v1936 = vpop.permute.xlu0 %1935
        %1937 = vrot.lane.b32.xlu0 %v532, 32
        %v1938 = vpop.permute.xlu0 %1937
        %1939 = vrot.lane.b32.xlu0 %v534, 32
        %v1940 = vpop.permute.xlu0 %1939
        %1941 = vrot.lane.b32.xlu0 %v1894, 32
        %v1942 = vpop.permute.xlu0 %1941
        %1943 = vrot.lane.b32.xlu0 %v1896, 32
        %v1944 = vpop.permute.xlu0 %1943
        %1945 = vrot.lane.b32.xlu0 %v1898, 32
        %v1946 = vpop.permute.xlu0 %1945
        %1947 = vrot.lane.b32.xlu0 %v1900, 32
        %v1948 = vpop.permute.xlu0 %1947
        %1949 = vrot.lane.b32.xlu0 %v529, 32
        %v1950 = vpop.permute.xlu0 %1949
        %1951 = vrot.lane.b32.xlu0 %v531, 32
        %v1952 = vpop.permute.xlu0 %1951
        %1953 = vrot.lane.b32.xlu0 %v533, 32
        %v1954 = vpop.permute.xlu0 %1953
        %1955 = vrot.lane.b32.xlu0 %v535, 32
        %v1956 = vpop.permute.xlu0 %1955
        %vm1957 = vcmp.lt.s32.totalorder %v593, 32
        %v1958 = vsel %vm1957, %v1926, %v1942
        %v1959 = vsel %vm1957, %v1928, %v1944
        %v1960 = vsel %vm1957, %v1930, %v1946
        %v1961 = vsel %vm1957, %v1932, %v1948
        %v1962 = vsel %vm1957, %v1934, %v1950
        %v1963 = vsel %vm1957, %v1936, %v1952
        %v1964 = vsel %vm1957, %v1938, %v1954
        %v1965 = vsel %vm1957, %v1940, %v1956
        %v1966 = vsel %vm1957, %v1942, %v1926
        %v1967 = vsel %vm1957, %v1944, %v1928
        %v1968 = vsel %vm1957, %v1946, %v1930
        %v1969 = vsel %vm1957, %v1948, %v1932
        %v1970 = vsel %vm1957, %v1950, %v1934
        %v1971 = vsel %vm1957, %v1952, %v1936
        %v1972 = vsel %vm1957, %v1954, %v1938
        %v1973 = vsel %vm1957, %v1956, %v1940
        %v1974 = vld [vmem:[%s3] sm:$0x3]
        %v1976 = vperm.slane %v1974, 0
        %v1977 = vperm.slane %v1974, 1
        %v1980 = vmul.f32 %v1966, %v1976
        %v1981 = vmul.f32 %v1958, %v1977
        %v1982 = vmul.f32 %v1967, %v1976
        %v1983 = vmul.f32 %v1959, %v1977
        %v1984 = vmul.f32 %v1968, %v1976
        %v1985 = vmul.f32 %v1960, %v1977
        %v1986 = vmul.f32 %v1969, %v1976
        %v1987 = vmul.f32 %v1961, %v1977
        %v1988 = vmul.f32 %v1970, %v1976
        %v1989 = vmul.f32 %v1962, %v1977
        %v1990 = vmul.f32 %v1971, %v1976
        %v1991 = vmul.f32 %v1963, %v1977
        %v1992 = vmul.f32 %v1972, %v1976
        %v1993 = vmul.f32 %v1964, %v1977
        %v1994 = vmul.f32 %v1973, %v1976
        %v1995 = vmul.f32 %v1965, %v1977
        %1996 = vrot.lane.b32.xlu0 %v1893, 16
        %v1997 = vpop.permute.xlu0 %1996
        %1998 = vrot.lane.b32.xlu0 %v1895, 16
        %v1999 = vpop.permute.xlu0 %1998
        %2000 = vrot.lane.b32.xlu0 %v1897, 16
        %v2001 = vpop.permute.xlu0 %2000
        %2002 = vrot.lane.b32.xlu0 %v1899, 16
        %v2003 = vpop.permute.xlu0 %2002
        %2004 = vrot.lane.b32.xlu0 %v528, 16
        %v2005 = vpop.permute.xlu0 %2004
        %2006 = vrot.lane.b32.xlu0 %v530, 16
        %v2007 = vpop.permute.xlu0 %2006
        %2008 = vrot.lane.b32.xlu0 %v532, 16
        %v2009 = vpop.permute.xlu0 %2008
        %2010 = vrot.lane.b32.xlu0 %v534, 16
        %v2011 = vpop.permute.xlu0 %2010
        %2012 = vrot.lane.b32.xlu0 %v1894, 16
        %v2013 = vpop.permute.xlu0 %2012
        %2014 = vrot.lane.b32.xlu0 %v1896, 16
        %v2015 = vpop.permute.xlu0 %2014
        %2016 = vrot.lane.b32.xlu0 %v1898, 16
        %v2017 = vpop.permute.xlu0 %2016
        %2018 = vrot.lane.b32.xlu0 %v1900, 16
        %v2019 = vpop.permute.xlu0 %2018
        %2020 = vrot.lane.b32.xlu0 %v529, 16
        %v2021 = vpop.permute.xlu0 %2020
        %2022 = vrot.lane.b32.xlu0 %v531, 16
        %v2023 = vpop.permute.xlu0 %2022
        %2024 = vrot.lane.b32.xlu0 %v533, 16
        %v2025 = vpop.permute.xlu0 %2024
        %2026 = vrot.lane.b32.xlu0 %v535, 16
        %v2027 = vpop.permute.xlu0 %2026
        %vm2028 = vcmp.lt.s32.totalorder %v593, 16
        %v2029 = vsel %vm2028, %v1997, %v2013
        %v2030 = vsel %vm2028, %v1999, %v2015
        %v2031 = vsel %vm2028, %v2001, %v2017
        %v2032 = vsel %vm2028, %v2003, %v2019
        %v2033 = vsel %vm2028, %v2005, %v2021
        %v2034 = vsel %vm2028, %v2007, %v2023
        %v2035 = vsel %vm2028, %v2009, %v2025
        %v2036 = vsel %vm2028, %v2011, %v2027
        %v2037 = vsel %vm2028, %v2013, %v1997
        %v2038 = vsel %vm2028, %v2015, %v1999
        %v2039 = vsel %vm2028, %v2017, %v2001
        %v2040 = vsel %vm2028, %v2019, %v2003
        %v2041 = vsel %vm2028, %v2021, %v2005
        %v2042 = vsel %vm2028, %v2023, %v2007
        %v2043 = vsel %vm2028, %v2025, %v2009
        %v2044 = vsel %vm2028, %v2027, %v2011
        %s2045 = scalar_lea.vmem %s3, 2
        %v2046 = vld [vmem:[%s2045] sm:$0x3]
        %v2048 = vperm.slane %v2046, 0
        %v2049 = vperm.slane %v2046, 1
        %v2052 = vmul.f32 %v2037, %v2048
        %v2053 = vmul.f32 %v2029, %v2049
        %v2054 = vmul.f32 %v2038, %v2048
        %v2055 = vmul.f32 %v2030, %v2049
        %v2056 = vmul.f32 %v2039, %v2048
        %v2057 = vmul.f32 %v2031, %v2049
        %v2058 = vmul.f32 %v2040, %v2048
        %v2059 = vmul.f32 %v2032, %v2049
        %v2060 = vmul.f32 %v2041, %v2048
        %v2061 = vmul.f32 %v2033, %v2049
        %v2062 = vmul.f32 %v2042, %v2048
        %v2063 = vmul.f32 %v2034, %v2049
        %v2064 = vmul.f32 %v2043, %v2048
        %v2065 = vmul.f32 %v2035, %v2049
        %v2066 = vmul.f32 %v2044, %v2048
        %v2067 = vmul.f32 %v2036, %v2049
        %s2068 = scalar_lea.vmem %s3, 4
        %v2069 = vld [vmem:[%s2068] sm:$0x3]
        %v2071 = vperm.slane %v2069, 0
        %v2072 = vperm.slane %v2069, 1
        %v2075 = vmul.f32 %v1893, %v2071
        %v2076 = vmul.f32 %v1894, %v2072
        %v2077 = vmul.f32 %v1895, %v2071
        %v2078 = vmul.f32 %v1896, %v2072
        %v2079 = vmul.f32 %v1897, %v2071
        %v2080 = vmul.f32 %v1898, %v2072
        %v2081 = vmul.f32 %v1899, %v2071
        %v2082 = vmul.f32 %v1900, %v2072
        %v2083 = vmul.f32 %v528, %v2071
        %v2084 = vmul.f32 %v529, %v2072
        %v2085 = vmul.f32 %v530, %v2071
        %v2086 = vmul.f32 %v531, %v2072
        %v2087 = vmul.f32 %v532, %v2071
        %v2088 = vmul.f32 %v533, %v2072
        %v2089 = vmul.f32 %v534, %v2071
        %v2090 = vmul.f32 %v535, %v2072
        %2091 = vrot.lane.b32.xlu0 %v1893, 112
        %v2092 = vpop.permute.xlu0 %2091
        %2093 = vrot.lane.b32.xlu0 %v1895, 112
        %v2094 = vpop.permute.xlu0 %2093
        %2095 = vrot.lane.b32.xlu0 %v1897, 112
        %v2096 = vpop.permute.xlu0 %2095
        %2097 = vrot.lane.b32.xlu0 %v1899, 112
        %v2098 = vpop.permute.xlu0 %2097
        %2099 = vrot.lane.b32.xlu0 %v528, 112
        %v2100 = vpop.permute.xlu0 %2099
        %2101 = vrot.lane.b32.xlu0 %v530, 112
        %v2102 = vpop.permute.xlu0 %2101
        %2103 = vrot.lane.b32.xlu0 %v532, 112
        %v2104 = vpop.permute.xlu0 %2103
        %2105 = vrot.lane.b32.xlu0 %v534, 112
        %v2106 = vpop.permute.xlu0 %2105
        %2107 = vrot.lane.b32.xlu0 %v1894, 112
        %v2108 = vpop.permute.xlu0 %2107
        %2109 = vrot.lane.b32.xlu0 %v1896, 112
        %v2110 = vpop.permute.xlu0 %2109
        %2111 = vrot.lane.b32.xlu0 %v1898, 112
        %v2112 = vpop.permute.xlu0 %2111
        %2113 = vrot.lane.b32.xlu0 %v1900, 112
        %v2114 = vpop.permute.xlu0 %2113
        %2115 = vrot.lane.b32.xlu0 %v529, 112
        %v2116 = vpop.permute.xlu0 %2115
        %2117 = vrot.lane.b32.xlu0 %v531, 112
        %v2118 = vpop.permute.xlu0 %2117
        %2119 = vrot.lane.b32.xlu0 %v533, 112
        %v2120 = vpop.permute.xlu0 %2119
        %2121 = vrot.lane.b32.xlu0 %v535, 112
        %v2122 = vpop.permute.xlu0 %2121
        %vm2123 = vcmp.lt.s32.totalorder %v593, 112
        %v2124 = vsel %vm2123, %v2092, %v2108
        %v2125 = vsel %vm2123, %v2094, %v2110
        %v2126 = vsel %vm2123, %v2096, %v2112
        %v2127 = vsel %vm2123, %v2098, %v2114
        %v2128 = vsel %vm2123, %v2100, %v2116
        %v2129 = vsel %vm2123, %v2102, %v2118
        %v2130 = vsel %vm2123, %v2104, %v2120
        %v2131 = vsel %vm2123, %v2106, %v2122
        %v2132 = vsel %vm2123, %v2108, %v2092
        %v2133 = vsel %vm2123, %v2110, %v2094
        %v2134 = vsel %vm2123, %v2112, %v2096
        %v2135 = vsel %vm2123, %v2114, %v2098
        %v2136 = vsel %vm2123, %v2116, %v2100
        %v2137 = vsel %vm2123, %v2118, %v2102
        %v2138 = vsel %vm2123, %v2120, %v2104
        %v2139 = vsel %vm2123, %v2122, %v2106
        %s2140 = scalar_lea.vmem %s3, 6
        %v2141 = vld [vmem:[%s2140] sm:$0x3]
        %v2143 = vperm.slane %v2141, 0
        %v2144 = vperm.slane %v2141, 1
        %v2147 = vmul.f32 %v2124, %v2143
        %v2148 = vmul.f32 %v2132, %v2144
        %v2149 = vmul.f32 %v2125, %v2143
        %v2150 = vmul.f32 %v2133, %v2144
        %v2151 = vmul.f32 %v2126, %v2143
        %v2152 = vmul.f32 %v2134, %v2144
        %v2153 = vmul.f32 %v2127, %v2143
        %v2154 = vmul.f32 %v2135, %v2144
        %v2155 = vmul.f32 %v2128, %v2143
        %v2156 = vmul.f32 %v2136, %v2144
        %v2157 = vmul.f32 %v2129, %v2143
        %v2158 = vmul.f32 %v2137, %v2144
        %v2159 = vmul.f32 %v2130, %v2143
        %v2160 = vmul.f32 %v2138, %v2144
        %v2161 = vmul.f32 %v2131, %v2143
        %v2162 = vmul.f32 %v2139, %v2144
        %2163 = vrot.lane.b32.xlu0 %v1893, 96
        %v2164 = vpop.permute.xlu0 %2163
        %2165 = vrot.lane.b32.xlu0 %v1895, 96
        %v2166 = vpop.permute.xlu0 %2165
        %2167 = vrot.lane.b32.xlu0 %v1897, 96
        %v2168 = vpop.permute.xlu0 %2167
        %2169 = vrot.lane.b32.xlu0 %v1899, 96
        %v2170 = vpop.permute.xlu0 %2169
        %2171 = vrot.lane.b32.xlu0 %v528, 96
        %v2172 = vpop.permute.xlu0 %2171
        %2173 = vrot.lane.b32.xlu0 %v530, 96
        %v2174 = vpop.permute.xlu0 %2173
        %2175 = vrot.lane.b32.xlu0 %v532, 96
        %v2176 = vpop.permute.xlu0 %2175
        %2177 = vrot.lane.b32.xlu0 %v534, 96
        %v2178 = vpop.permute.xlu0 %2177
        %2179 = vrot.lane.b32.xlu0 %v1894, 96
        %v2180 = vpop.permute.xlu0 %2179
        %2181 = vrot.lane.b32.xlu0 %v1896, 96
        %v2182 = vpop.permute.xlu0 %2181
        %2183 = vrot.lane.b32.xlu0 %v1898, 96
        %v2184 = vpop.permute.xlu0 %2183
        %2185 = vrot.lane.b32.xlu0 %v1900, 96
        %v2186 = vpop.permute.xlu0 %2185
        %2187 = vrot.lane.b32.xlu0 %v529, 96
        %v2188 = vpop.permute.xlu0 %2187
        %2189 = vrot.lane.b32.xlu0 %v531, 96
        %v2190 = vpop.permute.xlu0 %2189
        %2191 = vrot.lane.b32.xlu0 %v533, 96
        %v2192 = vpop.permute.xlu0 %2191
        %2193 = vrot.lane.b32.xlu0 %v535, 96
        %v2194 = vpop.permute.xlu0 %2193
        %vm2195 = vcmp.lt.s32.totalorder %v593, 96
        %v2196 = vsel %vm2195, %v2164, %v2180
        %v2197 = vsel %vm2195, %v2166, %v2182
        %v2198 = vsel %vm2195, %v2168, %v2184
        %v2199 = vsel %vm2195, %v2170, %v2186
        %v2200 = vsel %vm2195, %v2172, %v2188
        %v2201 = vsel %vm2195, %v2174, %v2190
        %v2202 = vsel %vm2195, %v2176, %v2192
        %v2203 = vsel %vm2195, %v2178, %v2194
        %v2204 = vsel %vm2195, %v2180, %v2164
        %v2205 = vsel %vm2195, %v2182, %v2166
        %v2206 = vsel %vm2195, %v2184, %v2168
        %v2207 = vsel %vm2195, %v2186, %v2170
        %v2208 = vsel %vm2195, %v2188, %v2172
        %v2209 = vsel %vm2195, %v2190, %v2174
        %v2210 = vsel %vm2195, %v2192, %v2176
        %v2211 = vsel %vm2195, %v2194, %v2178
        %s2212 = scalar_lea.vmem %s3, 8
        %v2213 = vld [vmem:[%s2212] sm:$0x3]
        %v2215 = vperm.slane %v2213, 0
        %v2216 = vperm.slane %v2213, 1
        %v2219 = vmul.f32 %v2196, %v2215
        %v2220 = vmul.f32 %v2204, %v2216
        %v2221 = vmul.f32 %v2197, %v2215
        %v2222 = vmul.f32 %v2205, %v2216
        %v2223 = vmul.f32 %v2198, %v2215
        %v2224 = vmul.f32 %v2206, %v2216
        %v2225 = vmul.f32 %v2199, %v2215
        %v2226 = vmul.f32 %v2207, %v2216
        %v2227 = vmul.f32 %v2200, %v2215
        %v2228 = vmul.f32 %v2208, %v2216
        %v2229 = vmul.f32 %v2201, %v2215
        %v2230 = vmul.f32 %v2209, %v2216
        %v2231 = vmul.f32 %v2202, %v2215
        %v2232 = vmul.f32 %v2210, %v2216
        %v2233 = vmul.f32 %v2203, %v2215
        %v2234 = vmul.f32 %v2211, %v2216
        %v2235 = vld [vmem:[%s9] sm:$0xff]
        %v2236 = vld [vmem:[%s9 + $0x8] sm:$0xff]
        %v2237 = vld [vmem:[%s9 + $0x10] sm:$0xff]
        %v2238 = vld [vmem:[%s9 + $0x18] sm:$0xff]
        %v2239 = vld [vmem:[%s9 + $0x20] sm:$0xff]
        %v2240 = vld [vmem:[%s9 + $0x28] sm:$0xff]
        %v2241 = vld [vmem:[%s9 + $0x30] sm:$0xff]
        %v2242 = vld [vmem:[%s9 + $0x38] sm:$0xff]
        %2244 = vset.pattern.permute.xlu0 0
        %2245 = vperm.xlu0 %2244, %v2235
        %v2246 = vpop.permute.xlu0 %2245
        %2249 = vset.pattern.permute.xlu0 0
        %2250 = vperm.xlu0 %2249, %v2236
        %v2251 = vpop.permute.xlu0 %2250
        %2254 = vset.pattern.permute.xlu0 0
        %2255 = vperm.xlu0 %2254, %v2237
        %v2256 = vpop.permute.xlu0 %2255
        %2259 = vset.pattern.permute.xlu0 0
        %2260 = vperm.xlu0 %2259, %v2238
        %v2261 = vpop.permute.xlu0 %2260
        %2264 = vset.pattern.permute.xlu0 0
        %2265 = vperm.xlu0 %2264, %v2239
        %v2266 = vpop.permute.xlu0 %2265
        %2269 = vset.pattern.permute.xlu0 0
        %2270 = vperm.xlu0 %2269, %v2240
        %v2271 = vpop.permute.xlu0 %2270
        %2274 = vset.pattern.permute.xlu0 0
        %2275 = vperm.xlu0 %2274, %v2241
        %v2276 = vpop.permute.xlu0 %2275
        %2279 = vset.pattern.permute.xlu0 0
        %2280 = vperm.xlu0 %2279, %v2242
        %v2281 = vpop.permute.xlu0 %2280
        %v2284 = vsel %vm920, %v1903, 0
        %v2287 = vsel %vm920, %v1906, 0
        %v2290 = vsel %vm920, %v1909, 0
        %v2293 = vsel %vm920, %v1912, 0
        %v2296 = vsel %vm920, %v1915, 0
        %v2299 = vsel %vm920, %v1918, 0
        %v2302 = vsel %vm920, %v1921, 0
        %v2305 = vsel %vm920, %v1924, 0
        %2307 = vmatpush.msra.mxu0 %v2066
        %2308 = vmatpush.msra.mxu0 %v2064
        %2309 = vmatpush.msra.mxu0 %v2062
        %2310 = vmatpush.msra.mxu0 %v2060
        %2311 = vmatpush.msra.mxu0 %v2058
        %2312 = vmatpush.msra.mxu0 %v2056
        %2313 = vmatpush.msra.mxu0 %v2054
        %2314 = vmatpush.msra.mxu0 %v2052
        %2315 = vmatpush.msra.mxu0 %v1994
        %2316 = vmatpush.msra.mxu0 %v1992
        %2317 = vmatpush.msra.mxu0 %v1990
        %2318 = vmatpush.msra.mxu0 %v1988
        %2319 = vmatpush.msra.mxu0 %v1986
        %2320 = vmatpush.msra.mxu0 %v1984
        %2321 = vmatpush.msra.mxu0 %v1982
        %2322 = vmatpush.msra.mxu0 %v1980
        %2323 = vmatmul.f32.gmra.mxu0 %v1901
        %v2324 = vpop.f32.mrf.mxu0
        %v2325 = vadd.f32 %v2246, %v2324
        %2326 = vmatmul.f32.gmra.mxu0 %v1904
        %v2327 = vpop.f32.mrf.mxu0
        %v2328 = vadd.f32 %v2251, %v2327
        %2329 = vmatmul.f32.gmra.mxu0 %v1907
        %v2330 = vpop.f32.mrf.mxu0
        %v2331 = vadd.f32 %v2256, %v2330
        %2332 = vmatmul.f32.gmra.mxu0 %v1910
        %v2333 = vpop.f32.mrf.mxu0
        %v2334 = vadd.f32 %v2261, %v2333
        %2335 = vmatmul.f32.gmra.mxu0 %v1913
        %v2336 = vpop.f32.mrf.mxu0
        %v2337 = vadd.f32 %v2266, %v2336
        %2338 = vmatmul.f32.gmra.mxu0 %v1916
        %v2339 = vpop.f32.mrf.mxu0
        %v2340 = vadd.f32 %v2271, %v2339
        %2341 = vmatmul.f32.gmra.mxu0 %v1919
        %v2342 = vpop.f32.mrf.mxu0
        %v2343 = vadd.f32 %v2276, %v2342
        %2344 = vmatmul.f32.gmra.mxu0 %v1922
        %v2345 = vpop.f32.mrf.mxu0
        %v2346 = vadd.f32 %v2281, %v2345
        %2347 = vdwg.mxu0
        %2348 = vmatpush.msra.mxu0 %v2161
        %2349 = vmatpush.msra.mxu0 %v2159
        %2350 = vmatpush.msra.mxu0 %v2157
        %2351 = vmatpush.msra.mxu0 %v2155
        %2352 = vmatpush.msra.mxu0 %v2153
        %2353 = vmatpush.msra.mxu0 %v2151
        %2354 = vmatpush.msra.mxu0 %v2149
        %2355 = vmatpush.msra.mxu0 %v2147
        %2356 = vmatpush.msra.mxu0 %v2089
        %2357 = vmatpush.msra.mxu0 %v2087
        %2358 = vmatpush.msra.mxu0 %v2085
        %2359 = vmatpush.msra.mxu0 %v2083
        %2360 = vmatpush.msra.mxu0 %v2081
        %2361 = vmatpush.msra.mxu0 %v2079
        %2362 = vmatpush.msra.mxu0 %v2077
        %2363 = vmatpush.msra.mxu0 %v2075
        %2364 = vmatmul.f32.gmra.mxu0 %v1902
        %v2365 = vpop.f32.mrf.mxu0
        %v2366 = vadd.f32 %v2325, %v2365
        %2367 = vmatmul.f32.gmra.mxu0 %v1905
        %v2368 = vpop.f32.mrf.mxu0
        %v2369 = vadd.f32 %v2328, %v2368
        %2370 = vmatmul.f32.gmra.mxu0 %v1908
        %v2371 = vpop.f32.mrf.mxu0
        %v2372 = vadd.f32 %v2331, %v2371
        %2373 = vmatmul.f32.gmra.mxu0 %v1911
        %v2374 = vpop.f32.mrf.mxu0
        %v2375 = vadd.f32 %v2334, %v2374
        %2376 = vmatmul.f32.gmra.mxu0 %v1914
        %v2377 = vpop.f32.mrf.mxu0
        %v2378 = vadd.f32 %v2337, %v2377
        %2379 = vmatmul.f32.gmra.mxu0 %v1917
        %v2380 = vpop.f32.mrf.mxu0
        %v2381 = vadd.f32 %v2340, %v2380
        %2382 = vmatmul.f32.gmra.mxu0 %v1920
        %v2383 = vpop.f32.mrf.mxu0
        %v2384 = vadd.f32 %v2343, %v2383
        %2385 = vmatmul.f32.gmra.mxu0 %v1923
        %v2386 = vpop.f32.mrf.mxu0
        %v2387 = vadd.f32 %v2346, %v2386
        %2388 = vdwg.mxu0
        %2389 = vmatpush.msra.mxu0 0.0
        %2390 = vmatpush.msra.mxu0 0.0
        %2391 = vmatpush.msra.mxu0 0.0
        %2392 = vmatpush.msra.mxu0 0.0
        %2393 = vmatpush.msra.mxu0 0.0
        %2394 = vmatpush.msra.mxu0 0.0
        %2395 = vmatpush.msra.mxu0 0.0
        %2396 = vmatpush.msra.mxu0 0.0
        %2397 = vmatpush.msra.mxu0 %v2233
        %2398 = vmatpush.msra.mxu0 %v2231
        %2399 = vmatpush.msra.mxu0 %v2229
        %2400 = vmatpush.msra.mxu0 %v2227
        %2401 = vmatpush.msra.mxu0 %v2225
        %2402 = vmatpush.msra.mxu0 %v2223
        %2403 = vmatpush.msra.mxu0 %v2221
        %2404 = vmatpush.msra.mxu0 %v2219
        %2405 = vmatmul.f32.gmra.mxu0 %v2284
        %v2406 = vpop.f32.mrf.mxu0
        %v2407 = vadd.f32 %v2366, %v2406
        %2408 = vmatmul.f32.gmra.mxu0 %v2287
        %v2409 = vpop.f32.mrf.mxu0
        %v2410 = vadd.f32 %v2369, %v2409
        %2411 = vmatmul.f32.gmra.mxu0 %v2290
        %v2412 = vpop.f32.mrf.mxu0
        %v2413 = vadd.f32 %v2372, %v2412
        %2414 = vmatmul.f32.gmra.mxu0 %v2293
        %v2415 = vpop.f32.mrf.mxu0
        %v2416 = vadd.f32 %v2375, %v2415
        %2417 = vmatmul.f32.gmra.mxu0 %v2296
        %v2418 = vpop.f32.mrf.mxu0
        %v2419 = vadd.f32 %v2378, %v2418
        %2420 = vmatmul.f32.gmra.mxu0 %v2299
        %v2421 = vpop.f32.mrf.mxu0
        %v2422 = vadd.f32 %v2381, %v2421
        %2423 = vmatmul.f32.gmra.mxu0 %v2302
        %v2424 = vpop.f32.mrf.mxu0
        %v2425 = vadd.f32 %v2384, %v2424
        %2426 = vmatmul.f32.gmra.mxu0 %v2305
        %v2427 = vpop.f32.mrf.mxu0
        %v2428 = vadd.f32 %v2387, %v2427
        %2429 = vdwg.mxu0
        %2430 = vmatpush.msra.mxu0 %v2067
        %2431 = vmatpush.msra.mxu0 %v2065
        %2432 = vmatpush.msra.mxu0 %v2063
        %2433 = vmatpush.msra.mxu0 %v2061
        %2434 = vmatpush.msra.mxu0 %v2059
        %2435 = vmatpush.msra.mxu0 %v2057
        %2436 = vmatpush.msra.mxu0 %v2055
        %2437 = vmatpush.msra.mxu0 %v2053
        %2438 = vmatpush.msra.mxu0 %v1995
        %2439 = vmatpush.msra.mxu0 %v1993
        %2440 = vmatpush.msra.mxu0 %v1991
        %2441 = vmatpush.msra.mxu0 %v1989
        %2442 = vmatpush.msra.mxu0 %v1987
        %2443 = vmatpush.msra.mxu0 %v1985
        %2444 = vmatpush.msra.mxu0 %v1983
        %2445 = vmatpush.msra.mxu0 %v1981
        %2446 = vmatmul.f32.gmra.mxu0 %v1901
        %v2447 = vpop.f32.mrf.mxu0
        %v2448 = vadd.f32 %v2246, %v2447
        %2449 = vmatmul.f32.gmra.mxu0 %v1904
        %v2450 = vpop.f32.mrf.mxu0
        %v2451 = vadd.f32 %v2251, %v2450
        %2452 = vmatmul.f32.gmra.mxu0 %v1907
        %v2453 = vpop.f32.mrf.mxu0
        %v2454 = vadd.f32 %v2256, %v2453
        %2455 = vmatmul.f32.gmra.mxu0 %v1910
        %v2456 = vpop.f32.mrf.mxu0
        %v2457 = vadd.f32 %v2261, %v2456
        %2458 = vmatmul.f32.gmra.mxu0 %v1913
        %v2459 = vpop.f32.mrf.mxu0
        %v2460 = vadd.f32 %v2266, %v2459
        %2461 = vmatmul.f32.gmra.mxu0 %v1916
        %v2462 = vpop.f32.mrf.mxu0
        %v2463 = vadd.f32 %v2271, %v2462
        %2464 = vmatmul.f32.gmra.mxu0 %v1919
        %v2465 = vpop.f32.mrf.mxu0
        %v2466 = vadd.f32 %v2276, %v2465
        %2467 = vmatmul.f32.gmra.mxu0 %v1922
        %v2468 = vpop.f32.mrf.mxu0
        %v2469 = vadd.f32 %v2281, %v2468
        %2470 = vdwg.mxu0
        %2471 = vmatpush.msra.mxu0 %v2162
        %2472 = vmatpush.msra.mxu0 %v2160
        %2473 = vmatpush.msra.mxu0 %v2158
        %2474 = vmatpush.msra.mxu0 %v2156
        %2475 = vmatpush.msra.mxu0 %v2154
        %2476 = vmatpush.msra.mxu0 %v2152
        %2477 = vmatpush.msra.mxu0 %v2150
        %2478 = vmatpush.msra.mxu0 %v2148
        %2479 = vmatpush.msra.mxu0 %v2090
        %2480 = vmatpush.msra.mxu0 %v2088
        %2481 = vmatpush.msra.mxu0 %v2086
        %2482 = vmatpush.msra.mxu0 %v2084
        %2483 = vmatpush.msra.mxu0 %v2082
        %2484 = vmatpush.msra.mxu0 %v2080
        %2485 = vmatpush.msra.mxu0 %v2078
        %2486 = vmatpush.msra.mxu0 %v2076
        %2487 = vmatmul.f32.gmra.mxu0 %v1902
        %v2488 = vpop.f32.mrf.mxu0
        %v2489 = vadd.f32 %v2448, %v2488
        %2490 = vmatmul.f32.gmra.mxu0 %v1905
        %v2491 = vpop.f32.mrf.mxu0
        %v2492 = vadd.f32 %v2451, %v2491
        %2493 = vmatmul.f32.gmra.mxu0 %v1908
        %v2494 = vpop.f32.mrf.mxu0
        %v2495 = vadd.f32 %v2454, %v2494
        %2496 = vmatmul.f32.gmra.mxu0 %v1911
        %v2497 = vpop.f32.mrf.mxu0
        %v2498 = vadd.f32 %v2457, %v2497
        %2499 = vmatmul.f32.gmra.mxu0 %v1914
        %v2500 = vpop.f32.mrf.mxu0
        %v2501 = vadd.f32 %v2460, %v2500
        %2502 = vmatmul.f32.gmra.mxu0 %v1917
        %v2503 = vpop.f32.mrf.mxu0
        %v2504 = vadd.f32 %v2463, %v2503
        %2505 = vmatmul.f32.gmra.mxu0 %v1920
        %v2506 = vpop.f32.mrf.mxu0
        %v2507 = vadd.f32 %v2466, %v2506
        %2508 = vmatmul.f32.gmra.mxu0 %v1923
        %v2509 = vpop.f32.mrf.mxu0
        %v2510 = vadd.f32 %v2469, %v2509
        %2511 = vdwg.mxu0
        %2512 = vmatpush.msra.mxu0 0.0
        %2513 = vmatpush.msra.mxu0 0.0
        %2514 = vmatpush.msra.mxu0 0.0
        %2515 = vmatpush.msra.mxu0 0.0
        %2516 = vmatpush.msra.mxu0 0.0
        %2517 = vmatpush.msra.mxu0 0.0
        %2518 = vmatpush.msra.mxu0 0.0
        %2519 = vmatpush.msra.mxu0 0.0
        %2520 = vmatpush.msra.mxu0 %v2234
        %2521 = vmatpush.msra.mxu0 %v2232
        %2522 = vmatpush.msra.mxu0 %v2230
        %2523 = vmatpush.msra.mxu0 %v2228
        %2524 = vmatpush.msra.mxu0 %v2226
        %2525 = vmatpush.msra.mxu0 %v2224
        %2526 = vmatpush.msra.mxu0 %v2222
        %2527 = vmatpush.msra.mxu0 %v2220
        %2528 = vmatmul.f32.gmra.mxu0 %v2284
        %v2529 = vpop.f32.mrf.mxu0
        %v2530 = vadd.f32 %v2489, %v2529
        %2531 = vmatmul.f32.gmra.mxu0 %v2287
        %v2532 = vpop.f32.mrf.mxu0
        %v2533 = vadd.f32 %v2492, %v2532
        %2534 = vmatmul.f32.gmra.mxu0 %v2290
        %v2535 = vpop.f32.mrf.mxu0
        %v2536 = vadd.f32 %v2495, %v2535
        %2537 = vmatmul.f32.gmra.mxu0 %v2293
        %v2538 = vpop.f32.mrf.mxu0
        %v2539 = vadd.f32 %v2498, %v2538
        %2540 = vmatmul.f32.gmra.mxu0 %v2296
        %v2541 = vpop.f32.mrf.mxu0
        %v2542 = vadd.f32 %v2501, %v2541
        %2543 = vmatmul.f32.gmra.mxu0 %v2299
        %v2544 = vpop.f32.mrf.mxu0
        %v2545 = vadd.f32 %v2504, %v2544
        %2546 = vmatmul.f32.gmra.mxu0 %v2302
        %v2547 = vpop.f32.mrf.mxu0
        %v2548 = vadd.f32 %v2507, %v2547
        %2549 = vmatmul.f32.gmra.mxu0 %v2305
        %v2550 = vpop.f32.mrf.mxu0
        %v2551 = vadd.f32 %v2510, %v2550
        %2552 = vdwg.mxu0
        %v2553 = vsub.f32 0.0, %v2407
        %v2554 = vsub.f32 0.0, %v2530
        %v2555 = vsub.f32 0.0, %v2410
        %v2556 = vsub.f32 0.0, %v2533
        %v2557 = vsub.f32 0.0, %v2413
        %v2558 = vsub.f32 0.0, %v2536
        %v2559 = vsub.f32 0.0, %v2416
        %v2560 = vsub.f32 0.0, %v2539
        %v2561 = vsub.f32 0.0, %v2419
        %v2562 = vsub.f32 0.0, %v2542
        %v2563 = vsub.f32 0.0, %v2422
        %v2564 = vsub.f32 0.0, %v2545
        %v2565 = vsub.f32 0.0, %v2425
        %v2566 = vsub.f32 0.0, %v2548
        %v2567 = vsub.f32 0.0, %v2428
        %v2568 = vsub.f32 0.0, %v2551
        %v2569 = vmul.f32 %v2553, 1.442695
        %v2570 = vpow.pop %v2569
        %v2571 = vmul.f32 %v2554, 1.442695
        %v2572 = vpow.pop %v2571
        %v2573 = vmul.f32 %v2555, 1.442695
        %v2574 = vpow.pop %v2573
        %v2575 = vmul.f32 %v2556, 1.442695
        %v2576 = vpow.pop %v2575
        %v2577 = vmul.f32 %v2557, 1.442695
        %v2578 = vpow.pop %v2577
        %v2579 = vmul.f32 %v2558, 1.442695
        %v2580 = vpow.pop %v2579
        %v2581 = vmul.f32 %v2559, 1.442695
        %v2582 = vpow.pop %v2581
        %v2583 = vmul.f32 %v2560, 1.442695
        %v2584 = vpow.pop %v2583
        %v2585 = vmul.f32 %v2561, 1.442695
        %v2586 = vpow.pop %v2585
        %v2587 = vmul.f32 %v2562, 1.442695
        %v2588 = vpow.pop %v2587
        %v2589 = vmul.f32 %v2563, 1.442695
        %v2590 = vpow.pop %v2589
        %v2591 = vmul.f32 %v2564, 1.442695
        %v2592 = vpow.pop %v2591
        %v2593 = vmul.f32 %v2565, 1.442695
        %v2594 = vpow.pop %v2593
        %v2595 = vmul.f32 %v2566, 1.442695
        %v2596 = vpow.pop %v2595
        %v2597 = vmul.f32 %v2567, 1.442695
        %v2598 = vpow.pop %v2597
        %v2599 = vmul.f32 %v2568, 1.442695
        %v2600 = vpow.pop %v2599
        %v2601 = vadd.f32 %v2570, 1.0
        %v2602 = vadd.f32 %v2572, 1.0
        %v2603 = vadd.f32 %v2574, 1.0
        %v2604 = vadd.f32 %v2576, 1.0
        %v2605 = vadd.f32 %v2578, 1.0
        %v2606 = vadd.f32 %v2580, 1.0
        %v2607 = vadd.f32 %v2582, 1.0
        %v2608 = vadd.f32 %v2584, 1.0
        %v2609 = vadd.f32 %v2586, 1.0
        %v2610 = vadd.f32 %v2588, 1.0
        %v2611 = vadd.f32 %v2590, 1.0
        %v2612 = vadd.f32 %v2592, 1.0
        %v2613 = vadd.f32 %v2594, 1.0
        %v2614 = vadd.f32 %v2596, 1.0
        %v2615 = vadd.f32 %v2598, 1.0
        %v2616 = vadd.f32 %v2600, 1.0
        %v2617 = vrcp.pop %v2601
        %v2618 = vmul.f32 %v2601, %v2617
        %v2619 = vsub.f32 1.0, %v2618
        %v2620 = vmul.f32 %v2617, %v2619
        %v2621 = vadd.f32 %v2617, %v2620
        %vm2622 = vweird.f32 %v2601
        %vm2623 = vweird.f32 %v2617
        %vm2624 = vmor %vm2622, %vm2623
        %v2625 = vsel %vm2624, %v2617, %v2621
        %v2626 = vand.u32 2147483647, %v2601
        %vm2627 = vcmp.eq.f32.partialorder %v2626, 8.507059e+37
        %v2628 = vand.u32 %v2601, 2147483648
        %v2629 = vor.u32 1.1754944e-38, %v2628
        %v2630 = vsel %vm2627, %v2629, %v2625
        %v2631 = vmul.f32 1.0, %v2630
        %v2632 = vrcp.pop %v2602
        %v2633 = vmul.f32 %v2602, %v2632
        %v2634 = vsub.f32 1.0, %v2633
        %v2635 = vmul.f32 %v2632, %v2634
        %v2636 = vadd.f32 %v2632, %v2635
        %vm2637 = vweird.f32 %v2602
        %vm2638 = vweird.f32 %v2632
        %vm2639 = vmor %vm2637, %vm2638
        %v2640 = vsel %vm2639, %v2632, %v2636
        %v2641 = vand.u32 2147483647, %v2602
        %vm2642 = vcmp.eq.f32.partialorder %v2641, 8.507059e+37
        %v2643 = vand.u32 %v2602, 2147483648
        %v2644 = vor.u32 1.1754944e-38, %v2643
        %v2645 = vsel %vm2642, %v2644, %v2640
        %v2646 = vmul.f32 1.0, %v2645
        %v2647 = vrcp.pop %v2603
        %v2648 = vmul.f32 %v2603, %v2647
        %v2649 = vsub.f32 1.0, %v2648
        %v2650 = vmul.f32 %v2647, %v2649
        %v2651 = vadd.f32 %v2647, %v2650
        %vm2652 = vweird.f32 %v2603
        %vm2653 = vweird.f32 %v2647
        %vm2654 = vmor %vm2652, %vm2653
        %v2655 = vsel %vm2654, %v2647, %v2651
        %v2656 = vand.u32 2147483647, %v2603
        %vm2657 = vcmp.eq.f32.partialorder %v2656, 8.507059e+37
        %v2658 = vand.u32 %v2603, 2147483648
        %v2659 = vor.u32 1.1754944e-38, %v2658
        %v2660 = vsel %vm2657, %v2659, %v2655
        %v2661 = vmul.f32 1.0, %v2660
        %v2662 = vrcp.pop %v2604
        %v2663 = vmul.f32 %v2604, %v2662
        %v2664 = vsub.f32 1.0, %v2663
        %v2665 = vmul.f32 %v2662, %v2664
        %v2666 = vadd.f32 %v2662, %v2665
        %vm2667 = vweird.f32 %v2604
        %vm2668 = vweird.f32 %v2662
        %vm2669 = vmor %vm2667, %vm2668
        %v2670 = vsel %vm2669, %v2662, %v2666
        %v2671 = vand.u32 2147483647, %v2604
        %vm2672 = vcmp.eq.f32.partialorder %v2671, 8.507059e+37
        %v2673 = vand.u32 %v2604, 2147483648
        %v2674 = vor.u32 1.1754944e-38, %v2673
        %v2675 = vsel %vm2672, %v2674, %v2670
        %v2676 = vmul.f32 1.0, %v2675
        %v2677 = vrcp.pop %v2605
        %v2678 = vmul.f32 %v2605, %v2677
        %v2679 = vsub.f32 1.0, %v2678
        %v2680 = vmul.f32 %v2677, %v2679
        %v2681 = vadd.f32 %v2677, %v2680
        %vm2682 = vweird.f32 %v2605
        %vm2683 = vweird.f32 %v2677
        %vm2684 = vmor %vm2682, %vm2683
        %v2685 = vsel %vm2684, %v2677, %v2681
        %v2686 = vand.u32 2147483647, %v2605
        %vm2687 = vcmp.eq.f32.partialorder %v2686, 8.507059e+37
        %v2688 = vand.u32 %v2605, 2147483648
        %v2689 = vor.u32 1.1754944e-38, %v2688
        %v2690 = vsel %vm2687, %v2689, %v2685
        %v2691 = vmul.f32 1.0, %v2690
        %v2692 = vrcp.pop %v2606
        %v2693 = vmul.f32 %v2606, %v2692
        %v2694 = vsub.f32 1.0, %v2693
        %v2695 = vmul.f32 %v2692, %v2694
        %v2696 = vadd.f32 %v2692, %v2695
        %vm2697 = vweird.f32 %v2606
        %vm2698 = vweird.f32 %v2692
        %vm2699 = vmor %vm2697, %vm2698
        %v2700 = vsel %vm2699, %v2692, %v2696
        %v2701 = vand.u32 2147483647, %v2606
        %vm2702 = vcmp.eq.f32.partialorder %v2701, 8.507059e+37
        %v2703 = vand.u32 %v2606, 2147483648
        %v2704 = vor.u32 1.1754944e-38, %v2703
        %v2705 = vsel %vm2702, %v2704, %v2700
        %v2706 = vmul.f32 1.0, %v2705
        %v2707 = vrcp.pop %v2607
        %v2708 = vmul.f32 %v2607, %v2707
        %v2709 = vsub.f32 1.0, %v2708
        %v2710 = vmul.f32 %v2707, %v2709
        %v2711 = vadd.f32 %v2707, %v2710
        %vm2712 = vweird.f32 %v2607
        %vm2713 = vweird.f32 %v2707
        %vm2714 = vmor %vm2712, %vm2713
        %v2715 = vsel %vm2714, %v2707, %v2711
        %v2716 = vand.u32 2147483647, %v2607
        %vm2717 = vcmp.eq.f32.partialorder %v2716, 8.507059e+37
        %v2718 = vand.u32 %v2607, 2147483648
        %v2719 = vor.u32 1.1754944e-38, %v2718
        %v2720 = vsel %vm2717, %v2719, %v2715
        %v2721 = vmul.f32 1.0, %v2720
        %v2722 = vrcp.pop %v2608
        %v2723 = vmul.f32 %v2608, %v2722
        %v2724 = vsub.f32 1.0, %v2723
        %v2725 = vmul.f32 %v2722, %v2724
        %v2726 = vadd.f32 %v2722, %v2725
        %vm2727 = vweird.f32 %v2608
        %vm2728 = vweird.f32 %v2722
        %vm2729 = vmor %vm2727, %vm2728
        %v2730 = vsel %vm2729, %v2722, %v2726
        %v2731 = vand.u32 2147483647, %v2608
        %vm2732 = vcmp.eq.f32.partialorder %v2731, 8.507059e+37
        %v2733 = vand.u32 %v2608, 2147483648
        %v2734 = vor.u32 1.1754944e-38, %v2733
        %v2735 = vsel %vm2732, %v2734, %v2730
        %v2736 = vmul.f32 1.0, %v2735
        %v2737 = vrcp.pop %v2609
        %v2738 = vmul.f32 %v2609, %v2737
        %v2739 = vsub.f32 1.0, %v2738
        %v2740 = vmul.f32 %v2737, %v2739
        %v2741 = vadd.f32 %v2737, %v2740
        %vm2742 = vweird.f32 %v2609
        %vm2743 = vweird.f32 %v2737
        %vm2744 = vmor %vm2742, %vm2743
        %v2745 = vsel %vm2744, %v2737, %v2741
        %v2746 = vand.u32 2147483647, %v2609
        %vm2747 = vcmp.eq.f32.partialorder %v2746, 8.507059e+37
        %v2748 = vand.u32 %v2609, 2147483648
        %v2749 = vor.u32 1.1754944e-38, %v2748
        %v2750 = vsel %vm2747, %v2749, %v2745
        %v2751 = vmul.f32 1.0, %v2750
        %v2752 = vrcp.pop %v2610
        %v2753 = vmul.f32 %v2610, %v2752
        %v2754 = vsub.f32 1.0, %v2753
        %v2755 = vmul.f32 %v2752, %v2754
        %v2756 = vadd.f32 %v2752, %v2755
        %vm2757 = vweird.f32 %v2610
        %vm2758 = vweird.f32 %v2752
        %vm2759 = vmor %vm2757, %vm2758
        %v2760 = vsel %vm2759, %v2752, %v2756
        %v2761 = vand.u32 2147483647, %v2610
        %vm2762 = vcmp.eq.f32.partialorder %v2761, 8.507059e+37
        %v2763 = vand.u32 %v2610, 2147483648
        %v2764 = vor.u32 1.1754944e-38, %v2763
        %v2765 = vsel %vm2762, %v2764, %v2760
        %v2766 = vmul.f32 1.0, %v2765
        %v2767 = vrcp.pop %v2611
        %v2768 = vmul.f32 %v2611, %v2767
        %v2769 = vsub.f32 1.0, %v2768
        %v2770 = vmul.f32 %v2767, %v2769
        %v2771 = vadd.f32 %v2767, %v2770
        %vm2772 = vweird.f32 %v2611
        %vm2773 = vweird.f32 %v2767
        %vm2774 = vmor %vm2772, %vm2773
        %v2775 = vsel %vm2774, %v2767, %v2771
        %v2776 = vand.u32 2147483647, %v2611
        %vm2777 = vcmp.eq.f32.partialorder %v2776, 8.507059e+37
        %v2778 = vand.u32 %v2611, 2147483648
        %v2779 = vor.u32 1.1754944e-38, %v2778
        %v2780 = vsel %vm2777, %v2779, %v2775
        %v2781 = vmul.f32 1.0, %v2780
        %v2782 = vrcp.pop %v2612
        %v2783 = vmul.f32 %v2612, %v2782
        %v2784 = vsub.f32 1.0, %v2783
        %v2785 = vmul.f32 %v2782, %v2784
        %v2786 = vadd.f32 %v2782, %v2785
        %vm2787 = vweird.f32 %v2612
        %vm2788 = vweird.f32 %v2782
        %vm2789 = vmor %vm2787, %vm2788
        %v2790 = vsel %vm2789, %v2782, %v2786
        %v2791 = vand.u32 2147483647, %v2612
        %vm2792 = vcmp.eq.f32.partialorder %v2791, 8.507059e+37
        %v2793 = vand.u32 %v2612, 2147483648
        %v2794 = vor.u32 1.1754944e-38, %v2793
        %v2795 = vsel %vm2792, %v2794, %v2790
        %v2796 = vmul.f32 1.0, %v2795
        %v2797 = vrcp.pop %v2613
        %v2798 = vmul.f32 %v2613, %v2797
        %v2799 = vsub.f32 1.0, %v2798
        %v2800 = vmul.f32 %v2797, %v2799
        %v2801 = vadd.f32 %v2797, %v2800
        %vm2802 = vweird.f32 %v2613
        %vm2803 = vweird.f32 %v2797
        %vm2804 = vmor %vm2802, %vm2803
        %v2805 = vsel %vm2804, %v2797, %v2801
        %v2806 = vand.u32 2147483647, %v2613
        %vm2807 = vcmp.eq.f32.partialorder %v2806, 8.507059e+37
        %v2808 = vand.u32 %v2613, 2147483648
        %v2809 = vor.u32 1.1754944e-38, %v2808
        %v2810 = vsel %vm2807, %v2809, %v2805
        %v2811 = vmul.f32 1.0, %v2810
        %v2812 = vrcp.pop %v2614
        %v2813 = vmul.f32 %v2614, %v2812
        %v2814 = vsub.f32 1.0, %v2813
        %v2815 = vmul.f32 %v2812, %v2814
        %v2816 = vadd.f32 %v2812, %v2815
        %vm2817 = vweird.f32 %v2614
        %vm2818 = vweird.f32 %v2812
        %vm2819 = vmor %vm2817, %vm2818
        %v2820 = vsel %vm2819, %v2812, %v2816
        %v2821 = vand.u32 2147483647, %v2614
        %vm2822 = vcmp.eq.f32.partialorder %v2821, 8.507059e+37
        %v2823 = vand.u32 %v2614, 2147483648
        %v2824 = vor.u32 1.1754944e-38, %v2823
        %v2825 = vsel %vm2822, %v2824, %v2820
        %v2826 = vmul.f32 1.0, %v2825
        %v2827 = vrcp.pop %v2615
        %v2828 = vmul.f32 %v2615, %v2827
        %v2829 = vsub.f32 1.0, %v2828
        %v2830 = vmul.f32 %v2827, %v2829
        %v2831 = vadd.f32 %v2827, %v2830
        %vm2832 = vweird.f32 %v2615
        %vm2833 = vweird.f32 %v2827
        %vm2834 = vmor %vm2832, %vm2833
        %v2835 = vsel %vm2834, %v2827, %v2831
        %v2836 = vand.u32 2147483647, %v2615
        %vm2837 = vcmp.eq.f32.partialorder %v2836, 8.507059e+37
        %v2838 = vand.u32 %v2615, 2147483648
        %v2839 = vor.u32 1.1754944e-38, %v2838
        %v2840 = vsel %vm2837, %v2839, %v2835
        %v2841 = vmul.f32 1.0, %v2840
        %v2842 = vrcp.pop %v2616
        %v2843 = vmul.f32 %v2616, %v2842
        %v2844 = vsub.f32 1.0, %v2843
        %v2845 = vmul.f32 %v2842, %v2844
        %v2846 = vadd.f32 %v2842, %v2845
        %vm2847 = vweird.f32 %v2616
        %vm2848 = vweird.f32 %v2842
        %vm2849 = vmor %vm2847, %vm2848
        %v2850 = vsel %vm2849, %v2842, %v2846
        %v2851 = vand.u32 2147483647, %v2616
        %vm2852 = vcmp.eq.f32.partialorder %v2851, 8.507059e+37
        %v2853 = vand.u32 %v2616, 2147483648
        %v2854 = vor.u32 1.1754944e-38, %v2853
        %v2855 = vsel %vm2852, %v2854, %v2850
        %v2856 = vmul.f32 1.0, %v2855
        %v2857 = vmul.f32 %v2751, %v1893
        %v2858 = vmul.f32 %v2766, %v1894
        %v2859 = vmul.f32 %v2781, %v1895
        %v2860 = vmul.f32 %v2796, %v1896
        %v2861 = vmul.f32 %v2811, %v1897
        %v2862 = vmul.f32 %v2826, %v1898
        %v2863 = vmul.f32 %v2841, %v1899
        %v2864 = vmul.f32 %v2856, %v1900
        %v2865 = vld [vmem:[#allocation10] sm:$0xff]
        %v2866 = vld [vmem:[#allocation10 + $0x8] sm:$0xff]
        %v2867 = vld [vmem:[#allocation10 + $0x10] sm:$0xff]
        %v2868 = vld [vmem:[#allocation10 + $0x18] sm:$0xff]
        %v2869 = vld [vmem:[#allocation10 + $0x20] sm:$0xff]
        %v2870 = vld [vmem:[#allocation10 + $0x28] sm:$0xff]
        %v2871 = vld [vmem:[#allocation10 + $0x30] sm:$0xff]
        %v2872 = vld [vmem:[#allocation10 + $0x38] sm:$0xff]
        %v2873 = vld [vmem:[#allocation10 + $0x40] sm:$0xff]
        %v2874 = vld [vmem:[#allocation10 + $0x48] sm:$0xff]
        %v2875 = vld [vmem:[#allocation10 + $0x50] sm:$0xff]
        %v2876 = vld [vmem:[#allocation10 + $0x58] sm:$0xff]
        %2877 = vrot.lane.b32.xlu0 %v2857, 32
        %v2878 = vpop.permute.xlu0 %2877
        %2879 = vrot.lane.b32.xlu0 %v2859, 32
        %v2880 = vpop.permute.xlu0 %2879
        %2881 = vrot.lane.b32.xlu0 %v2861, 32
        %v2882 = vpop.permute.xlu0 %2881
        %2883 = vrot.lane.b32.xlu0 %v2863, 32
        %v2884 = vpop.permute.xlu0 %2883
        %2885 = vrot.lane.b32.xlu0 %v2858, 32
        %v2886 = vpop.permute.xlu0 %2885
        %2887 = vrot.lane.b32.xlu0 %v2860, 32
        %v2888 = vpop.permute.xlu0 %2887
        %2889 = vrot.lane.b32.xlu0 %v2862, 32
        %v2890 = vpop.permute.xlu0 %2889
        %2891 = vrot.lane.b32.xlu0 %v2864, 32
        %v2892 = vpop.permute.xlu0 %2891
        %v2893 = vsel %vm1957, %v2878, %v2886
        %v2894 = vsel %vm1957, %v2880, %v2888
        %v2895 = vsel %vm1957, %v2882, %v2890
        %v2896 = vsel %vm1957, %v2884, %v2892
        %v2897 = vsel %vm1957, %v2886, %v2878
        %v2898 = vsel %vm1957, %v2888, %v2880
        %v2899 = vsel %vm1957, %v2890, %v2882
        %v2900 = vsel %vm1957, %v2892, %v2884
        %v2901 = vmul.f32 %v2897, %v1976
        %v2902 = vmul.f32 %v2893, %v1977
        %v2903 = vmul.f32 %v2898, %v1976
        %v2904 = vmul.f32 %v2894, %v1977
        %v2905 = vmul.f32 %v2899, %v1976
        %v2906 = vmul.f32 %v2895, %v1977
        %v2907 = vmul.f32 %v2900, %v1976
        %v2908 = vmul.f32 %v2896, %v1977
        %2909 = vrot.lane.b32.xlu0 %v2857, 16
        %v2910 = vpop.permute.xlu0 %2909
        %2911 = vrot.lane.b32.xlu0 %v2859, 16
        %v2912 = vpop.permute.xlu0 %2911
        %2913 = vrot.lane.b32.xlu0 %v2861, 16
        %v2914 = vpop.permute.xlu0 %2913
        %2915 = vrot.lane.b32.xlu0 %v2863, 16
        %v2916 = vpop.permute.xlu0 %2915
        %2917 = vrot.lane.b32.xlu0 %v2858, 16
        %v2918 = vpop.permute.xlu0 %2917
        %2919 = vrot.lane.b32.xlu0 %v2860, 16
        %v2920 = vpop.permute.xlu0 %2919
        %2921 = vrot.lane.b32.xlu0 %v2862, 16
        %v2922 = vpop.permute.xlu0 %2921
        %2923 = vrot.lane.b32.xlu0 %v2864, 16
        %v2924 = vpop.permute.xlu0 %2923
        %v2925 = vsel %vm2028, %v2910, %v2918
        %v2926 = vsel %vm2028, %v2912, %v2920
        %v2927 = vsel %vm2028, %v2914, %v2922
        %v2928 = vsel %vm2028, %v2916, %v2924
        %v2929 = vsel %vm2028, %v2918, %v2910
        %v2930 = vsel %vm2028, %v2920, %v2912
        %v2931 = vsel %vm2028, %v2922, %v2914
        %v2932 = vsel %vm2028, %v2924, %v2916
        %v2933 = vmul.f32 %v2929, %v2048
        %v2934 = vmul.f32 %v2925, %v2049
        %v2935 = vmul.f32 %v2930, %v2048
        %v2936 = vmul.f32 %v2926, %v2049
        %v2937 = vmul.f32 %v2931, %v2048
        %v2938 = vmul.f32 %v2927, %v2049
        %v2939 = vmul.f32 %v2932, %v2048
        %v2940 = vmul.f32 %v2928, %v2049
        %v2941 = vmul.f32 %v2857, %v2071
        %v2942 = vmul.f32 %v2858, %v2072
        %v2943 = vmul.f32 %v2859, %v2071
        %v2944 = vmul.f32 %v2860, %v2072
        %v2945 = vmul.f32 %v2861, %v2071
        %v2946 = vmul.f32 %v2862, %v2072
        %v2947 = vmul.f32 %v2863, %v2071
        %v2948 = vmul.f32 %v2864, %v2072
        %2949 = vrot.lane.b32.xlu0 %v2857, 112
        %v2950 = vpop.permute.xlu0 %2949
        %2951 = vrot.lane.b32.xlu0 %v2859, 112
        %v2952 = vpop.permute.xlu0 %2951
        %2953 = vrot.lane.b32.xlu0 %v2861, 112
        %v2954 = vpop.permute.xlu0 %2953
        %2955 = vrot.lane.b32.xlu0 %v2863, 112
        %v2956 = vpop.permute.xlu0 %2955
        %2957 = vrot.lane.b32.xlu0 %v2858, 112
        %v2958 = vpop.permute.xlu0 %2957
        %2959 = vrot.lane.b32.xlu0 %v2860, 112
        %v2960 = vpop.permute.xlu0 %2959
        %2961 = vrot.lane.b32.xlu0 %v2862, 112
        %v2962 = vpop.permute.xlu0 %2961
        %2963 = vrot.lane.b32.xlu0 %v2864, 112
        %v2964 = vpop.permute.xlu0 %2963
        %v2965 = vsel %vm2123, %v2950, %v2958
        %v2966 = vsel %vm2123, %v2952, %v2960
        %v2967 = vsel %vm2123, %v2954, %v2962
        %v2968 = vsel %vm2123, %v2956, %v2964
        %v2969 = vsel %vm2123, %v2958, %v2950
        %v2970 = vsel %vm2123, %v2960, %v2952
        %v2971 = vsel %vm2123, %v2962, %v2954
        %v2972 = vsel %vm2123, %v2964, %v2956
        %v2973 = vmul.f32 %v2965, %v2143
        %v2974 = vmul.f32 %v2969, %v2144
        %v2975 = vmul.f32 %v2966, %v2143
        %v2976 = vmul.f32 %v2970, %v2144
        %v2977 = vmul.f32 %v2967, %v2143
        %v2978 = vmul.f32 %v2971, %v2144
        %v2979 = vmul.f32 %v2968, %v2143
        %v2980 = vmul.f32 %v2972, %v2144
        %2981 = vrot.lane.b32.xlu0 %v2857, 96
        %v2982 = vpop.permute.xlu0 %2981
        %2983 = vrot.lane.b32.xlu0 %v2859, 96
        %v2984 = vpop.permute.xlu0 %2983
        %2985 = vrot.lane.b32.xlu0 %v2861, 96
        %v2986 = vpop.permute.xlu0 %2985
        %2987 = vrot.lane.b32.xlu0 %v2863, 96
        %v2988 = vpop.permute.xlu0 %2987
        %2989 = vrot.lane.b32.xlu0 %v2858, 96
        %v2990 = vpop.permute.xlu0 %2989
        %2991 = vrot.lane.b32.xlu0 %v2860, 96
        %v2992 = vpop.permute.xlu0 %2991
        %2993 = vrot.lane.b32.xlu0 %v2862, 96
        %v2994 = vpop.permute.xlu0 %2993
        %2995 = vrot.lane.b32.xlu0 %v2864, 96
        %v2996 = vpop.permute.xlu0 %2995
        %v2997 = vsel %vm2195, %v2982, %v2990
        %v2998 = vsel %vm2195, %v2984, %v2992
        %v2999 = vsel %vm2195, %v2986, %v2994
        %v3000 = vsel %vm2195, %v2988, %v2996
        %v3001 = vsel %vm2195, %v2990, %v2982
        %v3002 = vsel %vm2195, %v2992, %v2984
        %v3003 = vsel %vm2195, %v2994, %v2986
        %v3004 = vsel %vm2195, %v2996, %v2988
        %v3005 = vmul.f32 %v2997, %v2215
        %v3006 = vmul.f32 %v3001, %v2216
        %v3007 = vmul.f32 %v2998, %v2215
        %v3008 = vmul.f32 %v3002, %v2216
        %v3009 = vmul.f32 %v2999, %v2215
        %v3010 = vmul.f32 %v3003, %v2216
        %v3011 = vmul.f32 %v3000, %v2215
        %v3012 = vmul.f32 %v3004, %v2216
        %v3013 = vld [vmem:[%s11] sm:$0xff]
        %v3014 = vld [vmem:[%s11 + $0x8] sm:$0xff]
        %v3015 = vld [vmem:[%s11 + $0x10] sm:$0xff]
        %v3016 = vld [vmem:[%s11 + $0x18] sm:$0xff]
        %3018 = vset.pattern.permute.xlu0 0
        %3019 = vperm.xlu0 %3018, %v3013
        %v3020 = vpop.permute.xlu0 %3019
        %3023 = vset.pattern.permute.xlu0 0
        %3024 = vperm.xlu0 %3023, %v3014
        %v3025 = vpop.permute.xlu0 %3024
        %3028 = vset.pattern.permute.xlu0 0
        %3029 = vperm.xlu0 %3028, %v3015
        %v3030 = vpop.permute.xlu0 %3029
        %3033 = vset.pattern.permute.xlu0 0
        %3034 = vperm.xlu0 %3033, %v3016
        %v3035 = vpop.permute.xlu0 %3034
        %v3038 = vsel %vm920, %v2867, 0
        %v3041 = vsel %vm920, %v2870, 0
        %v3044 = vsel %vm920, %v2873, 0
        %v3047 = vsel %vm920, %v2876, 0
        %3049 = vmatpush.msra.mxu0 %v2066
        %3050 = vmatpush.msra.mxu0 %v2064
        %3051 = vmatpush.msra.mxu0 %v2062
        %3052 = vmatpush.msra.mxu0 %v2060
        %3053 = vmatpush.msra.mxu0 %v2939
        %3054 = vmatpush.msra.mxu0 %v2937
        %3055 = vmatpush.msra.mxu0 %v2935
        %3056 = vmatpush.msra.mxu0 %v2933
        %3057 = vmatpush.msra.mxu0 %v1994
        %3058 = vmatpush.msra.mxu0 %v1992
        %3059 = vmatpush.msra.mxu0 %v1990
        %3060 = vmatpush.msra.mxu0 %v1988
        %3061 = vmatpush.msra.mxu0 %v2907
        %3062 = vmatpush.msra.mxu0 %v2905
        %3063 = vmatpush.msra.mxu0 %v2903
        %3064 = vmatpush.msra.mxu0 %v2901
        %3065 = vmatmul.f32.gmra.mxu0 %v2865
        %v3066 = vpop.f32.mrf.mxu0
        %v3067 = vadd.f32 %v3020, %v3066
        %3068 = vmatmul.f32.gmra.mxu0 %v2868
        %v3069 = vpop.f32.mrf.mxu0
        %v3070 = vadd.f32 %v3025, %v3069
        %3071 = vmatmul.f32.gmra.mxu0 %v2871
        %v3072 = vpop.f32.mrf.mxu0
        %v3073 = vadd.f32 %v3030, %v3072
        %3074 = vmatmul.f32.gmra.mxu0 %v2874
        %v3075 = vpop.f32.mrf.mxu0
        %v3076 = vadd.f32 %v3035, %v3075
        %3077 = vdwg.mxu0
        %3078 = vmatpush.msra.mxu0 %v2161
        %3079 = vmatpush.msra.mxu0 %v2159
        %3080 = vmatpush.msra.mxu0 %v2157
        %3081 = vmatpush.msra.mxu0 %v2155
        %3082 = vmatpush.msra.mxu0 %v2979
        %3083 = vmatpush.msra.mxu0 %v2977
        %3084 = vmatpush.msra.mxu0 %v2975
        %3085 = vmatpush.msra.mxu0 %v2973
        %3086 = vmatpush.msra.mxu0 %v2089
        %3087 = vmatpush.msra.mxu0 %v2087
        %3088 = vmatpush.msra.mxu0 %v2085
        %3089 = vmatpush.msra.mxu0 %v2083
        %3090 = vmatpush.msra.mxu0 %v2947
        %3091 = vmatpush.msra.mxu0 %v2945
        %3092 = vmatpush.msra.mxu0 %v2943
        %3093 = vmatpush.msra.mxu0 %v2941
        %3094 = vmatmul.f32.gmra.mxu0 %v2866
        %v3095 = vpop.f32.mrf.mxu0
        %v3096 = vadd.f32 %v3067, %v3095
        %3097 = vmatmul.f32.gmra.mxu0 %v2869
        %v3098 = vpop.f32.mrf.mxu0
        %v3099 = vadd.f32 %v3070, %v3098
        %3100 = vmatmul.f32.gmra.mxu0 %v2872
        %v3101 = vpop.f32.mrf.mxu0
        %v3102 = vadd.f32 %v3073, %v3101
        %3103 = vmatmul.f32.gmra.mxu0 %v2875
        %v3104 = vpop.f32.mrf.mxu0
        %v3105 = vadd.f32 %v3076, %v3104
        %3106 = vdwg.mxu0
        %3107 = vmatpush.msra.mxu0 0.0
        %3108 = vmatpush.msra.mxu0 0.0
        %3109 = vmatpush.msra.mxu0 0.0
        %3110 = vmatpush.msra.mxu0 0.0
        %3111 = vmatpush.msra.mxu0 0.0
        %3112 = vmatpush.msra.mxu0 0.0
        %3113 = vmatpush.msra.mxu0 0.0
        %3114 = vmatpush.msra.mxu0 0.0
        %3115 = vmatpush.msra.mxu0 %v2233
        %3116 = vmatpush.msra.mxu0 %v2231
        %3117 = vmatpush.msra.mxu0 %v2229
        %3118 = vmatpush.msra.mxu0 %v2227
        %3119 = vmatpush.msra.mxu0 %v3011
        %3120 = vmatpush.msra.mxu0 %v3009
        %3121 = vmatpush.msra.mxu0 %v3007
        %3122 = vmatpush.msra.mxu0 %v3005
        %3123 = vmatmul.f32.gmra.mxu0 %v3038
        %v3124 = vpop.f32.mrf.mxu0
        %v3125 = vadd.f32 %v3096, %v3124
        %3126 = vmatmul.f32.gmra.mxu0 %v3041
        %v3127 = vpop.f32.mrf.mxu0
        %v3128 = vadd.f32 %v3099, %v3127
        %3129 = vmatmul.f32.gmra.mxu0 %v3044
        %v3130 = vpop.f32.mrf.mxu0
        %v3131 = vadd.f32 %v3102, %v3130
        %3132 = vmatmul.f32.gmra.mxu0 %v3047
        %v3133 = vpop.f32.mrf.mxu0
        %v3134 = vadd.f32 %v3105, %v3133
        %3135 = vdwg.mxu0
        %3136 = vmatpush.msra.mxu0 %v2067
        %3137 = vmatpush.msra.mxu0 %v2065
        %3138 = vmatpush.msra.mxu0 %v2063
        %3139 = vmatpush.msra.mxu0 %v2061
        %3140 = vmatpush.msra.mxu0 %v2940
        %3141 = vmatpush.msra.mxu0 %v2938
        %3142 = vmatpush.msra.mxu0 %v2936
        %3143 = vmatpush.msra.mxu0 %v2934
        %3144 = vmatpush.msra.mxu0 %v1995
        %3145 = vmatpush.msra.mxu0 %v1993
        %3146 = vmatpush.msra.mxu0 %v1991
        %3147 = vmatpush.msra.mxu0 %v1989
        %3148 = vmatpush.msra.mxu0 %v2908
        %3149 = vmatpush.msra.mxu0 %v2906
        %3150 = vmatpush.msra.mxu0 %v2904
        %3151 = vmatpush.msra.mxu0 %v2902
        %3152 = vmatmul.f32.gmra.mxu0 %v2865
        %v3153 = vpop.f32.mrf.mxu0
        %v3154 = vadd.f32 %v3020, %v3153
        %3155 = vmatmul.f32.gmra.mxu0 %v2868
        %v3156 = vpop.f32.mrf.mxu0
        %v3157 = vadd.f32 %v3025, %v3156
        %3158 = vmatmul.f32.gmra.mxu0 %v2871
        %v3159 = vpop.f32.mrf.mxu0
        %v3160 = vadd.f32 %v3030, %v3159
        %3161 = vmatmul.f32.gmra.mxu0 %v2874
        %v3162 = vpop.f32.mrf.mxu0
        %v3163 = vadd.f32 %v3035, %v3162
        %3164 = vdwg.mxu0
        %3165 = vmatpush.msra.mxu0 %v2162
        %3166 = vmatpush.msra.mxu0 %v2160
        %3167 = vmatpush.msra.mxu0 %v2158
        %3168 = vmatpush.msra.mxu0 %v2156
        %3169 = vmatpush.msra.mxu0 %v2980
        %3170 = vmatpush.msra.mxu0 %v2978
        %3171 = vmatpush.msra.mxu0 %v2976
        %3172 = vmatpush.msra.mxu0 %v2974
        %3173 = vmatpush.msra.mxu0 %v2090
        %3174 = vmatpush.msra.mxu0 %v2088
        %3175 = vmatpush.msra.mxu0 %v2086
        %3176 = vmatpush.msra.mxu0 %v2084
        %3177 = vmatpush.msra.mxu0 %v2948
        %3178 = vmatpush.msra.mxu0 %v2946
        %3179 = vmatpush.msra.mxu0 %v2944
        %3180 = vmatpush.msra.mxu0 %v2942
        %3181 = vmatmul.f32.gmra.mxu0 %v2866
        %v3182 = vpop.f32.mrf.mxu0
        %v3183 = vadd.f32 %v3154, %v3182
        %3184 = vmatmul.f32.gmra.mxu0 %v2869
        %v3185 = vpop.f32.mrf.mxu0
        %v3186 = vadd.f32 %v3157, %v3185
        %3187 = vmatmul.f32.gmra.mxu0 %v2872
        %v3188 = vpop.f32.mrf.mxu0
        %v3189 = vadd.f32 %v3160, %v3188
        %3190 = vmatmul.f32.gmra.mxu0 %v2875
        %v3191 = vpop.f32.mrf.mxu0
        %v3192 = vadd.f32 %v3163, %v3191
        %3193 = vdwg.mxu0
        %3194 = vmatpush.msra.mxu0 0.0
        %3195 = vmatpush.msra.mxu0 0.0
        %3196 = vmatpush.msra.mxu0 0.0
        %3197 = vmatpush.msra.mxu0 0.0
        %3198 = vmatpush.msra.mxu0 0.0
        %3199 = vmatpush.msra.mxu0 0.0
        %3200 = vmatpush.msra.mxu0 0.0
        %3201 = vmatpush.msra.mxu0 0.0
        %3202 = vmatpush.msra.mxu0 %v2234
        %3203 = vmatpush.msra.mxu0 %v2232
        %3204 = vmatpush.msra.mxu0 %v2230
        %3205 = vmatpush.msra.mxu0 %v2228
        %3206 = vmatpush.msra.mxu0 %v3012
        %3207 = vmatpush.msra.mxu0 %v3010
        %3208 = vmatpush.msra.mxu0 %v3008
        %3209 = vmatpush.msra.mxu0 %v3006
        %3210 = vmatmul.f32.gmra.mxu0 %v3038
        %v3211 = vpop.f32.mrf.mxu0
        %v3212 = vadd.f32 %v3183, %v3211
        %3213 = vmatmul.f32.gmra.mxu0 %v3041
        %v3214 = vpop.f32.mrf.mxu0
        %v3215 = vadd.f32 %v3186, %v3214
        %3216 = vmatmul.f32.gmra.mxu0 %v3044
        %v3217 = vpop.f32.mrf.mxu0
        %v3218 = vadd.f32 %v3189, %v3217
        %3219 = vmatmul.f32.gmra.mxu0 %v3047
        %v3220 = vpop.f32.mrf.mxu0
        %v3221 = vadd.f32 %v3192, %v3220
        %3222 = vdwg.mxu0
        %v3223 = vtanh.pop %v3125
        %v3224 = vtanh.pop %v3212
        %v3225 = vtanh.pop %v3128
        %v3226 = vtanh.pop %v3215
        %v3227 = vtanh.pop %v3131
        %v3228 = vtanh.pop %v3218
        %v3229 = vtanh.pop %v3134
        %v3230 = vtanh.pop %v3221
        %v3231 = vsub.f32 1.0, %v2631
        %v3232 = vsub.f32 1.0, %v2646
        %v3233 = vsub.f32 1.0, %v2661
        %v3234 = vsub.f32 1.0, %v2676
        %v3235 = vsub.f32 1.0, %v2691
        %v3236 = vsub.f32 1.0, %v2706
        %v3237 = vsub.f32 1.0, %v2721
        %v3238 = vsub.f32 1.0, %v2736
        %v3239 = vmul.f32 %v3231, %v1893
        %v3240 = vmul.f32 %v3232, %v1894
        %v3241 = vmul.f32 %v3233, %v1895
        %v3242 = vmul.f32 %v3234, %v1896
        %v3243 = vmul.f32 %v3235, %v1897
        %v3244 = vmul.f32 %v3236, %v1898
        %v3245 = vmul.f32 %v3237, %v1899
        %v3246 = vmul.f32 %v3238, %v1900
        %v3247 = vmul.f32 %v2631, %v3223
        %v3248 = vmul.f32 %v2646, %v3224
        %v3249 = vmul.f32 %v2661, %v3225
        %v3250 = vmul.f32 %v2676, %v3226
        %v3251 = vmul.f32 %v2691, %v3227
        %v3252 = vmul.f32 %v2706, %v3228
        %v3253 = vmul.f32 %v2721, %v3229
        %v3254 = vmul.f32 %v2736, %v3230
        %v3255 = vadd.f32 %v3239, %v3247
        %v3256 = vadd.f32 %v3240, %v3248
        %v3257 = vadd.f32 %v3241, %v3249
        %v3258 = vadd.f32 %v3242, %v3250
        %v3259 = vadd.f32 %v3243, %v3251
        %v3260 = vadd.f32 %v3244, %v3252
        %v3261 = vadd.f32 %v3245, %v3253
        %v3262 = vadd.f32 %v3246, %v3254
        %3263 = vst [vmem:[%s514] sm:$0xff] %v3255
        %3264 = vst [vmem:[%s514 + $0x8] sm:$0xff] %v3256
        %3265 = vst [vmem:[%s514 + $0x10] sm:$0xff] %v3257
        %3266 = vst [vmem:[%s514 + $0x18] sm:$0xff] %v3258
        %3267 = vst [vmem:[%s514 + $0x20] sm:$0xff] %v3259
        %3268 = vst [vmem:[%s514 + $0x28] sm:$0xff] %v3260
        %3269 = vst [vmem:[%s514 + $0x30] sm:$0xff] %v3261
        %3270 = vst [vmem:[%s514 + $0x38] sm:$0xff] %v3262
        %s3271 = sand.u32 %s301, 1
        %s3272 = scalar_lea.sflag [#allocation4], %s3271
        %s3273 = sand.u32 %s301, 1
        %s3274 = smul.addr %s3273, 64
        %s3275 = scalar_lea.vmem [#allocation11], %s3274
        // Predicated region
        $region89: #{tpu_custom_call.1} parent=67 // pred_check
          %p3276 = pneg %p311
        $region90: #{tpu_custom_call.1} parent=67 // pred_check_branch
          %3278 = sbr.rel (%p3276) target = $region92
        $region91: #{tpu_custom_call.1} parent=67 // pred_region
          %3280 = vsyncadd %s3272, 0
          %s3281 = smul.addr %s31, 8
          %s3282 = smul.addr %s3281, 8
          %s3283 = scalar_lea.hbm %s12, %s3282
          %s3284 = sshll.u32 %s3275, 4
          %s3285 = int_to_ptr.vmem [resolvable:$true] %s3284
          %s3286 = sshll.u32 %s3283, 4
          %s3287 = int_to_ptr.hbm [resolvable:$true] %s3286
          %3292 = dma.vmem_to_hbm [thread:$0]  %s3285, 1024, %s3287, %s3272, 256, 256, 16
        $region92: #{tpu_custom_call.1} parent=67 // pred_fallthru
          _
      $region68: #{tpu_custom_call.1} parent=5 // pred_fallthru
        _
      %p3293 = scmp.le.s32.totalorder 2, %s26
      // Predicated region
      $region93: #{tpu_custom_call.1} parent=5 // pred_check
        %p3294 = pneg %p3293
      $region94: #{tpu_custom_call.1} parent=5 // pred_check_branch
        %3296 = sbr.rel (%p3294) target = $region96
      $region95: #{tpu_custom_call.1} parent=5 // pred_region
        %s3297 = ssub.s32 %s26, 2
        // Predicated region
        $region97: #{tpu_custom_call.1} parent=95 // pred_check
          %p3298 = pneg %p317
        $region98: #{tpu_custom_call.1} parent=95 // pred_check_branch
          %3300 = sbr.rel (%p3298) target = $region100
        $region99: #{tpu_custom_call.1} parent=95 // pred_region
          %s3301 = sand.u32 %s302, 1
          %s3302 = scalar_lea.sflag [#allocation4], %s3301
          %s3303 = sand.u32 %s302, 1
          %s3304 = smul.addr %s3303, 64
          %s3305 = scalar_lea.vmem [#allocation11], %s3304
          %3307 = dma.done %s3302, 1024
        $region100: #{tpu_custom_call.1} parent=95 // pred_fallthru
          _
      $region96: #{tpu_custom_call.1} parent=5 // pred_fallthru
        _
    $region6: #{tpu_custom_call.1} parent=1 // loop_footer
      %s30 = sadd.s32 1, %s26
    $region7: #{tpu_custom_call.1} parent=1 // loop_footer_branch
      %25 = sbr.rel target = $region3
    $region8: #{tpu_custom_call.1} parent=1 // loop_exit
      _
    %3308 = vsyncpa [#allocation3], 1
    %s3309 = scalar_lea.sflag [#allocation3], 1
    %3310 = vsyncpa %s3309, 1
    %3311 = vsyncpa [#allocation6], 1
    %3312 = vsyncpa [#allocation9], 1
    %3313 = vsyncpa [#allocation4], 1
    %s3314 = scalar_lea.sflag [#allocation4], 1
    %3315 = vsyncpa %s3314, 1

</llo_original>
